<compile_context>
chip_gen: v7x
topology: tpu7x:2x2x1
jax: 0.10.0
libtpu: 0.0.40
codegen_flags: <defaults>
</compile_context>

<pallas_src>
import jax
import jax.numpy as jnp
from jax.experimental import pallas as pl
from jax.experimental.pallas import tpu as pltpu


# ----------------------------------------------------------------------------
# Fused forward kernel
# ----------------------------------------------------------------------------
def _make_kernel(H, W, C, mid, rates):
    R = max(max(rates), 1)
    HP = H + 2 * R              # halo scratch rows
    WPC = (W + 2 * R) * C       # halo scratch lanes

    def kernel(*refs):
        x_ref = refs[0]
        o_ref = refs[-2]
        pad_ref = refs[-1]
        w = refs[1:-2]

        def relu(v):
            return jnp.maximum(v, 0.0)

        def dense(act, bd_ref, bt_ref):
            # one lane-dense MXU matmul + pre-tiled bias row
            return jnp.dot(act, bd_ref[...],
                           preferred_element_type=jnp.float32) + bt_ref[...]

        def conv_pad(act, cin, pr, pc, taps, bd_ref, bt_ref):
            # 'same' conv as a single im2col matmul: zero the VMEM halo
            # buffer, drop the activation into its interior, lane-concat the
            # shifted tap windows, then one MXU matmul with the prepacked
            # block-diagonal weight.
            pad_ref[...] = jnp.zeros((HP, WPC), jnp.float32)
            pad_ref[pr:pr + H, pc * cin:(pc + W) * cin] = act
            cols = [pad_ref[ro:ro + H, wo * cin:(wo + W) * cin]
                    for ro, wo in taps]
            xcat = cols[0] if len(cols) == 1 else jnp.concatenate(cols, axis=1)
            return dense(xcat, bd_ref, bt_ref)

        def lane_allreduce(v, op):
            # butterfly all-reduce over the W spatial positions (stride C
            # along lanes) — runs on the XLU roll slot, keeps 128-lane width.
            shift = (W // 2) * C
            while shift >= C:
                v = op(v, pltpu.roll(v, shift, axis=1))
                shift //= 2
            return v

        xv = x_ref[0]                                            # (H, W*C)

        def taps3(r):
            return [(ky * r, kx * r) for ky in range(3) for kx in range(3)]

        # --- 4x Conv2dBNv2 bottleneck blocks (chained) ---------------------
        d = []
        act = xv
        for i in range(4):
            bd1, b1t, bd2, b2t = w[4 * i:4 * i + 4]
            r = rates[i]
            h1 = relu(dense(act, bd1, b1t))                      # 1x1 -> (H, W*mid)
            act = relu(conv_pad(h1, mid, r, r, taps3(r), bd2, b2t))
            d.append(act)                                        # (H, W*C)

        o1 = d[0] + d[1] + d[2] + d[3]

        # --- CrackAM gate ---------------------------------------------------
        bdfc, bfct, bd11, b11t, bde1, be1t, bde2, be2t = w[16:]
        max_w = lane_allreduce(o1, jnp.maximum)                  # max over W (tiled)
        sum_h = jnp.sum(max_w, axis=0, keepdims=True)            # sum_h max_w, (1, W*C)
        max_h = jnp.max(o1, axis=0, keepdims=True)               # max over H, (1, W*C)
        sum_w = lane_allreduce(max_h, jnp.add)                   # sum_w max_h, (1, W*C)
        s = (sum_h + sum_w) * (1.0 / float(H + W))               # per-channel mean (tiled)
        s8 = jnp.broadcast_to(s, (8, W * C))                     # pad M for the MXU
        y = dense(s8, bdfc, bfct)                                # per-channel 1x1 fc
        gate = 1.0 / (1.0 + jnp.exp(-y[0:1, :]))                 # sigmoid, (1, W*C)
        o1 = o1 * gate

        # --- conv11 (3x3 + BN + ReLU) then residual add ---------------------
        o2 = xv + relu(conv_pad(o1, C, 1, 1, taps3(1), bd11, b11t))

        # --- conv_out = EConv2dBN: (1,3)+ReLU, then (3,1)+BN+ReLU -----------
        a = relu(conv_pad(o2, C, 0, 1, [(0, 0), (0, 1), (0, 2)], bde1, be1t))
        o3 = relu(conv_pad(a, C, 1, 0, [(0, 0), (1, 0), (2, 0)], bde2, be2t))

        o_ref[0] = o3.astype(o_ref.dtype)

    return kernel


def make_hybird_aspa_forward(H, W, C, rates):
    """Returns a jitted forward(x_nhwc, packed_weights) -> y_nhwc."""
    rates = tuple(int(r) for r in rates)          # static: baked into the kernel
    assert C % 2 == 0
    assert W & (W - 1) == 0, "lane butterfly reduction assumes W is a power of 2"
    mid = C // 2
    R = max(max(rates), 1)
    kernel = _make_kernel(H, W, C, mid, rates)

    # TODO(synk): for realistic (large H/W/C) sizes add H-tiling with a
    #             dilation-sized row halo; at this size everything fits VMEM.
    def forward(x_nhwc, packed):
        N = x_nhwc.shape[0]
        x2 = x_nhwc.reshape(N, H, W * C)          # lane-dense HBM layout
        in_specs = [pl.BlockSpec((1, H, W * C), lambda n: (n, 0, 0))]
        in_specs += [pl.BlockSpec(p.shape, lambda n: (0, 0)) for p in packed]
        out = pl.pallas_call(
            kernel,
            out_shape=jax.ShapeDtypeStruct((N, H, W * C), x_nhwc.dtype),
            grid=(N,),
            in_specs=in_specs,
            out_specs=pl.BlockSpec((1, H, W * C), lambda n: (n, 0, 0)),
            scratch_shapes=[pltpu.VMEM((H + 2 * R, (W + 2 * R) * C),
                                       jnp.float32)],
            compiler_params=pltpu.CompilerParams(
                dimension_semantics=("parallel",),     # batch across TCs (v7x)
                vmem_limit_bytes=32 * 1024 * 1024),
        )(x2, *packed)
        return out.reshape(N, H, W, C)

    return jax.jit(forward)


# ----------------------------------------------------------------------------
# Host-side weight packing: block-diagonal "im2col" matrices + tiled biases
# ----------------------------------------------------------------------------
def _kron_w(wmat, W):
    # (Cin, Cout) -> (W*Cin, W*Cout): same channel mixing applied to every
    # spatial column w, so a lane-dense (H, W*Cin) @ (W*Cin, W*Cout) matmul
    # implements the pointwise part of the conv.
    return jnp.kron(jnp.eye(W, dtype=wmat.dtype), wmat)


def _pack_conv(w_hwio, b, W):
    KH, KW, _, Cout = w_hwio.shape
    blocks = [_kron_w(w_hwio[ky, kx], W)
              for ky in range(KH) for kx in range(KW)]       # tap order ky*KW+kx
    bd = blocks[0] if len(blocks) == 1 else jnp.concatenate(blocks, axis=0)
    bt = jnp.tile(b, (W,)).reshape(1, W * Cout)
    return bd, bt


def pack_params(raw, W):
    packed = []
    for i in range(4):
        p = raw[f"blk{i}"]
        packed += list(_pack_conv(p["w1"], p["b1"], W))
        packed += list(_pack_conv(p["w2"], p["b2"], W))
    packed += [_kron_w(raw["att_w"].T, W),
               jnp.tile(raw["att_b"], (W,)).reshape(1, -1)]
    packed += list(_pack_conv(raw["w11"], raw["b11"], W))
    packed += list(_pack_conv(raw["we1"], raw["be1"], W))
    packed += list(_pack_conv(raw["we2"], raw["be2"], W))
    return packed


# ----------------------------------------------------------------------------
# Deterministic synthetic parameters + inference-mode BN folding
# ----------------------------------------------------------------------------
def _init_conv(key, kh, kw, cin, cout):
    k1, k2 = jax.random.split(key)
    scale = 1.0 / jnp.sqrt(float(kh * kw * cin))
    w = jax.random.normal(k1, (kh, kw, cin, cout), jnp.float32) * scale
    b = 0.1 * jax.random.normal(k2, (cout,), jnp.float32)
    return w, b


def _init_bn(key, c):
    k1, k2, k3, k4 = jax.random.split(key, 4)
    gamma = 1.0 + 0.1 * jax.random.normal(k1, (c,), jnp.float32)
    beta = 0.1 * jax.random.normal(k2, (c,), jnp.float32)
    mean = 0.1 * jax.random.normal(k3, (c,), jnp.float32)
    var = 1.0 + 0.1 * jnp.abs(jax.random.normal(k4, (c,), jnp.float32))
    return gamma, beta, mean, var


def _fold_bn(w, b, gamma, beta, mean, var, eps=1e-5):
    scale = gamma / jnp.sqrt(var + eps)
    return w * scale, (b - mean) * scale + beta


def init_raw_params(key, c):
    mid = c // 2
    keys = iter(jax.random.split(key, 24))
    raw = {}
    for i in range(4):
        w1, b1 = _init_conv(next(keys), 1, 1, c, mid)
        w2, b2 = _init_conv(next(keys), 3, 3, mid, c)
        w2, b2 = _fold_bn(w2, b2, *_init_bn(next(keys), c))
        raw[f"blk{i}"] = dict(w1=w1, b1=b1, w2=w2, b2=b2)
    ka, kb = jax.random.split(next(keys))
    raw["att_w"] = jax.random.normal(ka, (c, c), jnp.float32) / jnp.sqrt(float(c))
    raw["att_b"] = 0.1 * jax.random.normal(kb, (c,), jnp.float32)
    w11, b11 = _init_conv(next(keys), 3, 3, c, c)
    w11, b11 = _fold_bn(w11, b11, *_init_bn(next(keys), c))
    raw["w11"], raw["b11"] = w11, b11
    we1, be1 = _init_conv(next(keys), 1, 3, c, c)
    we2, be2 = _init_conv(next(keys), 3, 1, c, c)
    we2, be2 = _fold_bn(we2, be2, *_init_bn(next(keys), c))
    raw["we1"], raw["be1"] = we1, be1
    raw["we2"], raw["be2"] = we2, be2
    return raw


# ----------------------------------------------------------------------------
# Pure-JAX reference (same folded parameters) for a numerical cross-check
# ----------------------------------------------------------------------------
def ref_forward(x, raw, rates):
    N, H, W, C = x.shape

    def conv(v, w, b, rate=1, act=True):
        y = jax.lax.conv_general_dilated(
            v, w, window_strides=(1, 1), padding="SAME",
            rhs_dilation=(rate, rate),
            dimension_numbers=("NHWC", "HWIO", "NHWC"),
            precision=jax.lax.Precision.HIGHEST) + b
        return jnp.maximum(y, 0.0) if act else y

    def blk(v, p, r):
        h = conv(v, p["w1"], p["b1"])
        return conv(h, p["w2"], p["b2"], rate=r)

    d1 = blk(x, raw["blk0"], rates[0])
    d2 = blk(d1, raw["blk1"], rates[1])
    d3 = blk(d2, raw["blk2"], rates[2])
    d4 = blk(d3, raw["blk3"], rates[3])
    o1 = d1 + d2 + d3 + d4
    mw = jnp.max(o1, axis=2)                       # max over W -> (N, H, C)
    mh = jnp.max(o1, axis=1)                       # max over H -> (N, W, C)
    s = (jnp.sum(mw, axis=1) + jnp.sum(mh, axis=1)) / float(H + W)   # (N, C)
    y = s @ raw["att_w"].T + raw["att_b"]
    o1 = o1 * jax.nn.sigmoid(y)[:, None, None, :]
    o2 = x + conv(o1, raw["w11"], raw["b11"])
    a = conv(o2, raw["we1"], raw["be1"])
    return conv(a, raw["we2"], raw["be2"])


# ----------------------------------------------------------------------------
if __name__ == "__main__":
    # Module requires in_channels == out_channels; W*C = 128 keeps HBM blocks
    # exactly one vreg-row wide.
    N, C, H, W = 2, 8, 16, 16
    rates = (1, 1, 1, 1)

    key = jax.random.PRNGKey(0)
    kx, kp = jax.random.split(key)

    x_nchw = jax.random.normal(kx, (N, C, H, W), jnp.float32)   # PyTorch layout
    x_nhwc = jnp.transpose(x_nchw, (0, 2, 3, 1))

    raw = init_raw_params(kp, C)
    packed = pack_params(raw, W)

    fwd = make_hybird_aspa_forward(H, W, C, rates)
    out_nhwc = fwd(x_nhwc, packed)
    jax.block_until_ready(out_nhwc)
    out_nchw = jnp.transpose(out_nhwc, (0, 3, 1, 2))            # back to NCHW

    # numerical cross-check against the pure-JAX reference
    ref_nhwc = ref_forward(x_nhwc, raw, rates)
    err = jnp.abs(out_nhwc - ref_nhwc)
    tol = 3e-2 + 3e-2 * jnp.abs(ref_nhwc)

    assert out_nchw.shape == (N, C, H, W)
    assert bool(jnp.all(jnp.isfinite(out_nchw)))
    assert bool(jnp.all(err <= tol)), f"max abs err {float(jnp.max(err)):.3e}"
    print("KERNEL_OK")
</pallas_src>

<mosaic_0001>
module attributes {stable_mosaic.version = 11 : i64} {
  func.func @kernel(%arg0: i32, %arg1: memref<1x16x128xf32, #tpu.memory_space<vmem>>, %arg2: memref<128x64xf32, #tpu.memory_space<vmem>>, %arg3: memref<1x64xf32, #tpu.memory_space<vmem>>, %arg4: memref<576x128xf32, #tpu.memory_space<vmem>>, %arg5: memref<1x128xf32, #tpu.memory_space<vmem>>, %arg6: memref<128x64xf32, #tpu.memory_space<vmem>>, %arg7: memref<1x64xf32, #tpu.memory_space<vmem>>, %arg8: memref<576x128xf32, #tpu.memory_space<vmem>>, %arg9: memref<1x128xf32, #tpu.memory_space<vmem>>, %arg10: memref<128x64xf32, #tpu.memory_space<vmem>>, %arg11: memref<1x64xf32, #tpu.memory_space<vmem>>, %arg12: memref<576x128xf32, #tpu.memory_space<vmem>>, %arg13: memref<1x128xf32, #tpu.memory_space<vmem>>, %arg14: memref<128x64xf32, #tpu.memory_space<vmem>>, %arg15: memref<1x64xf32, #tpu.memory_space<vmem>>, %arg16: memref<576x128xf32, #tpu.memory_space<vmem>>, %arg17: memref<1x128xf32, #tpu.memory_space<vmem>>, %arg18: memref<128x128xf32, #tpu.memory_space<vmem>>, %arg19: memref<1x128xf32, #tpu.memory_space<vmem>>, %arg20: memref<1152x128xf32, #tpu.memory_space<vmem>>, %arg21: memref<1x128xf32, #tpu.memory_space<vmem>>, %arg22: memref<384x128xf32, #tpu.memory_space<vmem>>, %arg23: memref<1x128xf32, #tpu.memory_space<vmem>>, %arg24: memref<384x128xf32, #tpu.memory_space<vmem>>, %arg25: memref<1x128xf32, #tpu.memory_space<vmem>>, %arg26: memref<1x16x128xf32, #tpu.memory_space<vmem>>, %arg27: memref<18x144xf32, #tpu.memory_space<vmem>>) attributes {dimension_semantics = [#tpu.dimension_semantics<parallel>], iteration_bounds = array<i64: 2>, scalar_prefetch = 0 : i64, scratch_operands = 1 : i64, tpu.core_type = #tpu.core_type<tc>, window_params = [{transform_indices = @transform_0, window_bounds = array<i64: 1, 16, 128>}, {pipeline_mode = #tpu.pipeline_mode<synchronous>, transform_indices = @transform_1, window_bounds = array<i64: 128, 64>}, {pipeline_mode = #tpu.pipeline_mode<synchronous>, transform_indices = @transform_2, window_bounds = array<i64: 1, 64>}, {pipeline_mode = #tpu.pipeline_mode<synchronous>, transform_indices = @transform_3, window_bounds = array<i64: 576, 128>}, {pipeline_mode = #tpu.pipeline_mode<synchronous>, transform_indices = @transform_4, window_bounds = array<i64: 1, 128>}, {pipeline_mode = #tpu.pipeline_mode<synchronous>, transform_indices = @transform_5, window_bounds = array<i64: 128, 64>}, {pipeline_mode = #tpu.pipeline_mode<synchronous>, transform_indices = @transform_6, window_bounds = array<i64: 1, 64>}, {pipeline_mode = #tpu.pipeline_mode<synchronous>, transform_indices = @transform_7, window_bounds = array<i64: 576, 128>}, {pipeline_mode = #tpu.pipeline_mode<synchronous>, transform_indices = @transform_8, window_bounds = array<i64: 1, 128>}, {pipeline_mode = #tpu.pipeline_mode<synchronous>, transform_indices = @transform_9, window_bounds = array<i64: 128, 64>}, {pipeline_mode = #tpu.pipeline_mode<synchronous>, transform_indices = @transform_10, window_bounds = array<i64: 1, 64>}, {pipeline_mode = #tpu.pipeline_mode<synchronous>, transform_indices = @transform_11, window_bounds = array<i64: 576, 128>}, {pipeline_mode = #tpu.pipeline_mode<synchronous>, transform_indices = @transform_12, window_bounds = array<i64: 1, 128>}, {pipeline_mode = #tpu.pipeline_mode<synchronous>, transform_indices = @transform_13, window_bounds = array<i64: 128, 64>}, {pipeline_mode = #tpu.pipeline_mode<synchronous>, transform_indices = @transform_14, window_bounds = array<i64: 1, 64>}, {pipeline_mode = #tpu.pipeline_mode<synchronous>, transform_indices = @transform_15, window_bounds = array<i64: 576, 128>}, {pipeline_mode = #tpu.pipeline_mode<synchronous>, transform_indices = @transform_16, window_bounds = array<i64: 1, 128>}, {pipeline_mode = #tpu.pipeline_mode<synchronous>, transform_indices = @transform_17, window_bounds = array<i64: 128, 128>}, {pipeline_mode = #tpu.pipeline_mode<synchronous>, transform_indices = @transform_18, window_bounds = array<i64: 1, 128>}, {pipeline_mode = #tpu.pipeline_mode<synchronous>, transform_indices = @transform_19, window_bounds = array<i64: 1152, 128>}, {pipeline_mode = #tpu.pipeline_mode<synchronous>, transform_indices = @transform_20, window_bounds = array<i64: 1, 128>}, {pipeline_mode = #tpu.pipeline_mode<synchronous>, transform_indices = @transform_21, window_bounds = array<i64: 384, 128>}, {pipeline_mode = #tpu.pipeline_mode<synchronous>, transform_indices = @transform_22, window_bounds = array<i64: 1, 128>}, {pipeline_mode = #tpu.pipeline_mode<synchronous>, transform_indices = @transform_23, window_bounds = array<i64: 384, 128>}, {pipeline_mode = #tpu.pipeline_mode<synchronous>, transform_indices = @transform_24, window_bounds = array<i64: 1, 128>}, {transform_indices = @transform_25, window_bounds = array<i64: 1, 16, 128>}]} {
    %c0 = arith.constant 0 : index
    %c0_0 = arith.constant 0 : index
    %c0_1 = arith.constant 0 : index
    %0 = vector.load %arg1[%c0, %c0_0, %c0_1] : memref<1x16x128xf32, #tpu.memory_space<vmem>>, vector<1x16x128xf32>
    %1 = vector.shape_cast %0 : vector<1x16x128xf32> to vector<16x128xf32>
    %c0_2 = arith.constant 0 : index
    %c0_3 = arith.constant 0 : index
    %2 = vector.load %arg2[%c0_2, %c0_3] : memref<128x64xf32, #tpu.memory_space<vmem>>, vector<128x64xf32>
    %cst = arith.constant dense<0.000000e+00> : vector<16x64xf32>
    %3 = tpu.matmul %1, %2, %cst {dimension_numbers = #tpu.dot_dimension_numbers<[1], [0], [0], [1], [0, 0, 1, 1], [], []>} : vector<16x128xf32>, vector<128x64xf32>, vector<16x64xf32> -> vector<16x64xf32>
    %c0_4 = arith.constant 0 : index
    %c0_5 = arith.constant 0 : index
    %4 = vector.load %arg3[%c0_4, %c0_5] : memref<1x64xf32, #tpu.memory_space<vmem>>, vector<1x64xf32>
    %5 = vector.broadcast %4 : vector<1x64xf32> to vector<16x64xf32>
    %6 = arith.addf %3, %5 : vector<16x64xf32>
    %cst_6 = arith.constant 0.000000e+00 : f32
    %7 = vector.broadcast %cst_6 : f32 to vector<16x64xf32>
    %8 = arith.maximumf %6, %7 : vector<16x64xf32>
    %cst_7 = arith.constant 0.000000e+00 : f32
    %9 = vector.broadcast %cst_7 : f32 to vector<18x144xf32>
    %c0_8 = arith.constant 0 : index
    %c0_9 = arith.constant 0 : index
    %10 = vector.load %arg27[%c0_8, %c0_9] : memref<18x144xf32, #tpu.memory_space<vmem>>, vector<18x144xf32>
    tpu.vector_store %arg27[%c0_8, %c0_9], %9 {strides = array<i32>} : memref<18x144xf32, #tpu.memory_space<vmem>>, vector<18x144xf32>,
    %c1 = arith.constant 1 : index
    %c4 = arith.constant 4 : index
    %11 = vector.load %arg27[%c1, %c4] : memref<18x144xf32, #tpu.memory_space<vmem>>, vector<16x64xf32>
    tpu.vector_store %arg27[%c1, %c4], %8 {strides = array<i32>} : memref<18x144xf32, #tpu.memory_space<vmem>>, vector<16x64xf32>,
    %c0_10 = arith.constant 0 : index
    %c0_11 = arith.constant 0 : index
    %12 = vector.load %arg27[%c0_10, %c0_11] : memref<18x144xf32, #tpu.memory_space<vmem>>, vector<16x64xf32>
    %c0_12 = arith.constant 0 : index
    %c4_13 = arith.constant 4 : index
    %13 = vector.load %arg27[%c0_12, %c4_13] : memref<18x144xf32, #tpu.memory_space<vmem>>, vector<16x64xf32>
    %c0_14 = arith.constant 0 : index
    %c8 = arith.constant 8 : index
    %14 = vector.load %arg27[%c0_14, %c8] : memref<18x144xf32, #tpu.memory_space<vmem>>, vector<16x64xf32>
    %c1_15 = arith.constant 1 : index
    %c0_16 = arith.constant 0 : index
    %15 = vector.load %arg27[%c1_15, %c0_16] : memref<18x144xf32, #tpu.memory_space<vmem>>, vector<16x64xf32>
    %c1_17 = arith.constant 1 : index
    %c4_18 = arith.constant 4 : index
    %16 = vector.load %arg27[%c1_17, %c4_18] : memref<18x144xf32, #tpu.memory_space<vmem>>, vector<16x64xf32>
    %c1_19 = arith.constant 1 : index
    %c8_20 = arith.constant 8 : index
    %17 = vector.load %arg27[%c1_19, %c8_20] : memref<18x144xf32, #tpu.memory_space<vmem>>, vector<16x64xf32>
    %c2 = arith.constant 2 : index
    %c0_21 = arith.constant 0 : index
    %18 = vector.load %arg27[%c2, %c0_21] : memref<18x144xf32, #tpu.memory_space<vmem>>, vector<16x64xf32>
    %c2_22 = arith.constant 2 : index
    %c4_23 = arith.constant 4 : index
    %19 = vector.load %arg27[%c2_22, %c4_23] : memref<18x144xf32, #tpu.memory_space<vmem>>, vector<16x64xf32>
    %c2_24 = arith.constant 2 : index
    %c8_25 = arith.constant 8 : index
    %20 = vector.load %arg27[%c2_24, %c8_25] : memref<18x144xf32, #tpu.memory_space<vmem>>, vector<16x64xf32>
    %21 = tpu.concatenate %12, %13, %14, %15, %16, %17, %18, %19, %20 in 1 : vector<16x64xf32>, vector<16x64xf32>, vector<16x64xf32>, vector<16x64xf32>, vector<16x64xf32>, vector<16x64xf32>, vector<16x64xf32>, vector<16x64xf32>, vector<16x64xf32> -> vector<16x576xf32>
    %c0_26 = arith.constant 0 : index
    %c0_27 = arith.constant 0 : index
    %22 = vector.load %arg4[%c0_26, %c0_27] : memref<576x128xf32, #tpu.memory_space<vmem>>, vector<576x128xf32>
    %cst_28 = arith.constant dense<0.000000e+00> : vector<16x128xf32>
    %23 = tpu.matmul %21, %22, %cst_28 {dimension_numbers = #tpu.dot_dimension_numbers<[1], [0], [0], [1], [0, 0, 1, 1], [], []>} : vector<16x576xf32>, vector<576x128xf32>, vector<16x128xf32> -> vector<16x128xf32>
    %c0_29 = arith.constant 0 : index
    %c0_30 = arith.constant 0 : index
    %24 = vector.load %arg5[%c0_29, %c0_30] : memref<1x128xf32, #tpu.memory_space<vmem>>, vector<1x128xf32>
    %25 = vector.broadcast %24 : vector<1x128xf32> to vector<16x128xf32>
    %26 = arith.addf %23, %25 : vector<16x128xf32>
    %cst_31 = arith.constant 0.000000e+00 : f32
    %27 = vector.broadcast %cst_31 : f32 to vector<16x128xf32>
    %28 = arith.maximumf %26, %27 : vector<16x128xf32>
    %c0_32 = arith.constant 0 : index
    %c0_33 = arith.constant 0 : index
    %29 = vector.load %arg6[%c0_32, %c0_33] : memref<128x64xf32, #tpu.memory_space<vmem>>, vector<128x64xf32>
    %cst_34 = arith.constant dense<0.000000e+00> : vector<16x64xf32>
    %30 = tpu.matmul %28, %29, %cst_34 {dimension_numbers = #tpu.dot_dimension_numbers<[1], [0], [0], [1], [0, 0, 1, 1], [], []>} : vector<16x128xf32>, vector<128x64xf32>, vector<16x64xf32> -> vector<16x64xf32>
    %c0_35 = arith.constant 0 : index
    %c0_36 = arith.constant 0 : index
    %31 = vector.load %arg7[%c0_35, %c0_36] : memref<1x64xf32, #tpu.memory_space<vmem>>, vector<1x64xf32>
    %32 = vector.broadcast %31 : vector<1x64xf32> to vector<16x64xf32>
    %33 = arith.addf %30, %32 : vector<16x64xf32>
    %cst_37 = arith.constant 0.000000e+00 : f32
    %34 = vector.broadcast %cst_37 : f32 to vector<16x64xf32>
    %35 = arith.maximumf %33, %34 : vector<16x64xf32>
    %cst_38 = arith.constant 0.000000e+00 : f32
    %36 = vector.broadcast %cst_38 : f32 to vector<18x144xf32>
    %c0_39 = arith.constant 0 : index
    %c0_40 = arith.constant 0 : index
    %37 = vector.load %arg27[%c0_39, %c0_40] : memref<18x144xf32, #tpu.memory_space<vmem>>, vector<18x144xf32>
    tpu.vector_store %arg27[%c0_39, %c0_40], %36 {strides = array<i32>} : memref<18x144xf32, #tpu.memory_space<vmem>>, vector<18x144xf32>,
    %c1_41 = arith.constant 1 : index
    %c4_42 = arith.constant 4 : index
    %38 = vector.load %arg27[%c1_41, %c4_42] : memref<18x144xf32, #tpu.memory_space<vmem>>, vector<16x64xf32>
    tpu.vector_store %arg27[%c1_41, %c4_42], %35 {strides = array<i32>} : memref<18x144xf32, #tpu.memory_space<vmem>>, vector<16x64xf32>,
    %c0_43 = arith.constant 0 : index
    %c0_44 = arith.constant 0 : index
    %39 = vector.load %arg27[%c0_43, %c0_44] : memref<18x144xf32, #tpu.memory_space<vmem>>, vector<16x64xf32>
    %c0_45 = arith.constant 0 : index
    %c4_46 = arith.constant 4 : index
    %40 = vector.load %arg27[%c0_45, %c4_46] : memref<18x144xf32, #tpu.memory_space<vmem>>, vector<16x64xf32>
    %c0_47 = arith.constant 0 : index
    %c8_48 = arith.constant 8 : index
    %41 = vector.load %arg27[%c0_47, %c8_48] : memref<18x144xf32, #tpu.memory_space<vmem>>, vector<16x64xf32>
    %c1_49 = arith.constant 1 : index
    %c0_50 = arith.constant 0 : index
    %42 = vector.load %arg27[%c1_49, %c0_50] : memref<18x144xf32, #tpu.memory_space<vmem>>, vector<16x64xf32>
    %c1_51 = arith.constant 1 : index
    %c4_52 = arith.constant 4 : index
    %43 = vector.load %arg27[%c1_51, %c4_52] : memref<18x144xf32, #tpu.memory_space<vmem>>, vector<16x64xf32>
    %c1_53 = arith.constant 1 : index
    %c8_54 = arith.constant 8 : index
    %44 = vector.load %arg27[%c1_53, %c8_54] : memref<18x144xf32, #tpu.memory_space<vmem>>, vector<16x64xf32>
    %c2_55 = arith.constant 2 : index
    %c0_56 = arith.constant 0 : index
    %45 = vector.load %arg27[%c2_55, %c0_56] : memref<18x144xf32, #tpu.memory_space<vmem>>, vector<16x64xf32>
    %c2_57 = arith.constant 2 : index
    %c4_58 = arith.constant 4 : index
    %46 = vector.load %arg27[%c2_57, %c4_58] : memref<18x144xf32, #tpu.memory_space<vmem>>, vector<16x64xf32>
    %c2_59 = arith.constant 2 : index
    %c8_60 = arith.constant 8 : index
    %47 = vector.load %arg27[%c2_59, %c8_60] : memref<18x144xf32, #tpu.memory_space<vmem>>, vector<16x64xf32>
    %48 = tpu.concatenate %39, %40, %41, %42, %43, %44, %45, %46, %47 in 1 : vector<16x64xf32>, vector<16x64xf32>, vector<16x64xf32>, vector<16x64xf32>, vector<16x64xf32>, vector<16x64xf32>, vector<16x64xf32>, vector<16x64xf32>, vector<16x64xf32> -> vector<16x576xf32>
    %c0_61 = arith.constant 0 : index
    %c0_62 = arith.constant 0 : index
    %49 = vector.load %arg8[%c0_61, %c0_62] : memref<576x128xf32, #tpu.memory_space<vmem>>, vector<576x128xf32>
    %cst_63 = arith.constant dense<0.000000e+00> : vector<16x128xf32>
    %50 = tpu.matmul %48, %49, %cst_63 {dimension_numbers = #tpu.dot_dimension_numbers<[1], [0], [0], [1], [0, 0, 1, 1], [], []>} : vector<16x576xf32>, vector<576x128xf32>, vector<16x128xf32> -> vector<16x128xf32>
    %c0_64 = arith.constant 0 : index
    %c0_65 = arith.constant 0 : index
    %51 = vector.load %arg9[%c0_64, %c0_65] : memref<1x128xf32, #tpu.memory_space<vmem>>, vector<1x128xf32>
    %52 = vector.broadcast %51 : vector<1x128xf32> to vector<16x128xf32>
    %53 = arith.addf %50, %52 : vector<16x128xf32>
    %cst_66 = arith.constant 0.000000e+00 : f32
    %54 = vector.broadcast %cst_66 : f32 to vector<16x128xf32>
    %55 = arith.maximumf %53, %54 : vector<16x128xf32>
    %c0_67 = arith.constant 0 : index
    %c0_68 = arith.constant 0 : index
    %56 = vector.load %arg10[%c0_67, %c0_68] : memref<128x64xf32, #tpu.memory_space<vmem>>, vector<128x64xf32>
    %cst_69 = arith.constant dense<0.000000e+00> : vector<16x64xf32>
    %57 = tpu.matmul %55, %56, %cst_69 {dimension_numbers = #tpu.dot_dimension_numbers<[1], [0], [0], [1], [0, 0, 1, 1], [], []>} : vector<16x128xf32>, vector<128x64xf32>, vector<16x64xf32> -> vector<16x64xf32>
    %c0_70 = arith.constant 0 : index
    %c0_71 = arith.constant 0 : index
    %58 = vector.load %arg11[%c0_70, %c0_71] : memref<1x64xf32, #tpu.memory_space<vmem>>, vector<1x64xf32>
    %59 = vector.broadcast %58 : vector<1x64xf32> to vector<16x64xf32>
    %60 = arith.addf %57, %59 : vector<16x64xf32>
    %cst_72 = arith.constant 0.000000e+00 : f32
    %61 = vector.broadcast %cst_72 : f32 to vector<16x64xf32>
    %62 = arith.maximumf %60, %61 : vector<16x64xf32>
    %cst_73 = arith.constant 0.000000e+00 : f32
    %63 = vector.broadcast %cst_73 : f32 to vector<18x144xf32>
    %c0_74 = arith.constant 0 : index
    %c0_75 = arith.constant 0 : index
    %64 = vector.load %arg27[%c0_74, %c0_75] : memref<18x144xf32, #tpu.memory_space<vmem>>, vector<18x144xf32>
    tpu.vector_store %arg27[%c0_74, %c0_75], %63 {strides = array<i32>} : memref<18x144xf32, #tpu.memory_space<vmem>>, vector<18x144xf32>,
    %c1_76 = arith.constant 1 : index
    %c4_77 = arith.constant 4 : index
    %65 = vector.load %arg27[%c1_76, %c4_77] : memref<18x144xf32, #tpu.memory_space<vmem>>, vector<16x64xf32>
    tpu.vector_store %arg27[%c1_76, %c4_77], %62 {strides = array<i32>} : memref<18x144xf32, #tpu.memory_space<vmem>>, vector<16x64xf32>,
    %c0_78 = arith.constant 0 : index
    %c0_79 = arith.constant 0 : index
    %66 = vector.load %arg27[%c0_78, %c0_79] : memref<18x144xf32, #tpu.memory_space<vmem>>, vector<16x64xf32>
    %c0_80 = arith.constant 0 : index
    %c4_81 = arith.constant 4 : index
    %67 = vector.load %arg27[%c0_80, %c4_81] : memref<18x144xf32, #tpu.memory_space<vmem>>, vector<16x64xf32>
    %c0_82 = arith.constant 0 : index
    %c8_83 = arith.constant 8 : index
    %68 = vector.load %arg27[%c0_82, %c8_83] : memref<18x144xf32, #tpu.memory_space<vmem>>, vector<16x64xf32>
    %c1_84 = arith.constant 1 : index
    %c0_85 = arith.constant 0 : index
    %69 = vector.load %arg27[%c1_84, %c0_85] : memref<18x144xf32, #tpu.memory_space<vmem>>, vector<16x64xf32>
    %c1_86 = arith.constant 1 : index
    %c4_87 = arith.constant 4 : index
    %70 = vector.load %arg27[%c1_86, %c4_87] : memref<18x144xf32, #tpu.memory_space<vmem>>, vector<16x64xf32>
    %c1_88 = arith.constant 1 : index
    %c8_89 = arith.constant 8 : index
    %71 = vector.load %arg27[%c1_88, %c8_89] : memref<18x144xf32, #tpu.memory_space<vmem>>, vector<16x64xf32>
    %c2_90 = arith.constant 2 : index
    %c0_91 = arith.constant 0 : index
    %72 = vector.load %arg27[%c2_90, %c0_91] : memref<18x144xf32, #tpu.memory_space<vmem>>, vector<16x64xf32>
    %c2_92 = arith.constant 2 : index
    %c4_93 = arith.constant 4 : index
    %73 = vector.load %arg27[%c2_92, %c4_93] : memref<18x144xf32, #tpu.memory_space<vmem>>, vector<16x64xf32>
    %c2_94 = arith.constant 2 : index
    %c8_95 = arith.constant 8 : index
    %74 = vector.load %arg27[%c2_94, %c8_95] : memref<18x144xf32, #tpu.memory_space<vmem>>, vector<16x64xf32>
    %75 = tpu.concatenate %66, %67, %68, %69, %70, %71, %72, %73, %74 in 1 : vector<16x64xf32>, vector<16x64xf32>, vector<16x64xf32>, vector<16x64xf32>, vector<16x64xf32>, vector<16x64xf32>, vector<16x64xf32>, vector<16x64xf32>, vector<16x64xf32> -> vector<16x576xf32>
    %c0_96 = arith.constant 0 : index
    %c0_97 = arith.constant 0 : index
    %76 = vector.load %arg12[%c0_96, %c0_97] : memref<576x128xf32, #tpu.memory_space<vmem>>, vector<576x128xf32>
    %cst_98 = arith.constant dense<0.000000e+00> : vector<16x128xf32>
    %77 = tpu.matmul %75, %76, %cst_98 {dimension_numbers = #tpu.dot_dimension_numbers<[1], [0], [0], [1], [0, 0, 1, 1], [], []>} : vector<16x576xf32>, vector<576x128xf32>, vector<16x128xf32> -> vector<16x128xf32>
    %c0_99 = arith.constant 0 : index
    %c0_100 = arith.constant 0 : index
    %78 = vector.load %arg13[%c0_99, %c0_100] : memref<1x128xf32, #tpu.memory_space<vmem>>, vector<1x128xf32>
    %79 = vector.broadcast %78 : vector<1x128xf32> to vector<16x128xf32>
    %80 = arith.addf %77, %79 : vector<16x128xf32>
    %cst_101 = arith.constant 0.000000e+00 : f32
    %81 = vector.broadcast %cst_101 : f32 to vector<16x128xf32>
    %82 = arith.maximumf %80, %81 : vector<16x128xf32>
    %c0_102 = arith.constant 0 : index
    %c0_103 = arith.constant 0 : index
    %83 = vector.load %arg14[%c0_102, %c0_103] : memref<128x64xf32, #tpu.memory_space<vmem>>, vector<128x64xf32>
    %cst_104 = arith.constant dense<0.000000e+00> : vector<16x64xf32>
    %84 = tpu.matmul %82, %83, %cst_104 {dimension_numbers = #tpu.dot_dimension_numbers<[1], [0], [0], [1], [0, 0, 1, 1], [], []>} : vector<16x128xf32>, vector<128x64xf32>, vector<16x64xf32> -> vector<16x64xf32>
    %c0_105 = arith.constant 0 : index
    %c0_106 = arith.constant 0 : index
    %85 = vector.load %arg15[%c0_105, %c0_106] : memref<1x64xf32, #tpu.memory_space<vmem>>, vector<1x64xf32>
    %86 = vector.broadcast %85 : vector<1x64xf32> to vector<16x64xf32>
    %87 = arith.addf %84, %86 : vector<16x64xf32>
    %cst_107 = arith.constant 0.000000e+00 : f32
    %88 = vector.broadcast %cst_107 : f32 to vector<16x64xf32>
    %89 = arith.maximumf %87, %88 : vector<16x64xf32>
    %cst_108 = arith.constant 0.000000e+00 : f32
    %90 = vector.broadcast %cst_108 : f32 to vector<18x144xf32>
    %c0_109 = arith.constant 0 : index
    %c0_110 = arith.constant 0 : index
    %91 = vector.load %arg27[%c0_109, %c0_110] : memref<18x144xf32, #tpu.memory_space<vmem>>, vector<18x144xf32>
    tpu.vector_store %arg27[%c0_109, %c0_110], %90 {strides = array<i32>} : memref<18x144xf32, #tpu.memory_space<vmem>>, vector<18x144xf32>,
    %c1_111 = arith.constant 1 : index
    %c4_112 = arith.constant 4 : index
    %92 = vector.load %arg27[%c1_111, %c4_112] : memref<18x144xf32, #tpu.memory_space<vmem>>, vector<16x64xf32>
    tpu.vector_store %arg27[%c1_111, %c4_112], %89 {strides = array<i32>} : memref<18x144xf32, #tpu.memory_space<vmem>>, vector<16x64xf32>,
    %c0_113 = arith.constant 0 : index
    %c0_114 = arith.constant 0 : index
    %93 = vector.load %arg27[%c0_113, %c0_114] : memref<18x144xf32, #tpu.memory_space<vmem>>, vector<16x64xf32>
    %c0_115 = arith.constant 0 : index
    %c4_116 = arith.constant 4 : index
    %94 = vector.load %arg27[%c0_115, %c4_116] : memref<18x144xf32, #tpu.memory_space<vmem>>, vector<16x64xf32>
    %c0_117 = arith.constant 0 : index
    %c8_118 = arith.constant 8 : index
    %95 = vector.load %arg27[%c0_117, %c8_118] : memref<18x144xf32, #tpu.memory_space<vmem>>, vector<16x64xf32>
    %c1_119 = arith.constant 1 : index
    %c0_120 = arith.constant 0 : index
    %96 = vector.load %arg27[%c1_119, %c0_120] : memref<18x144xf32, #tpu.memory_space<vmem>>, vector<16x64xf32>
    %c1_121 = arith.constant 1 : index
    %c4_122 = arith.constant 4 : index
    %97 = vector.load %arg27[%c1_121, %c4_122] : memref<18x144xf32, #tpu.memory_space<vmem>>, vector<16x64xf32>
    %c1_123 = arith.constant 1 : index
    %c8_124 = arith.constant 8 : index
    %98 = vector.load %arg27[%c1_123, %c8_124] : memref<18x144xf32, #tpu.memory_space<vmem>>, vector<16x64xf32>
    %c2_125 = arith.constant 2 : index
    %c0_126 = arith.constant 0 : index
    %99 = vector.load %arg27[%c2_125, %c0_126] : memref<18x144xf32, #tpu.memory_space<vmem>>, vector<16x64xf32>
    %c2_127 = arith.constant 2 : index
    %c4_128 = arith.constant 4 : index
    %100 = vector.load %arg27[%c2_127, %c4_128] : memref<18x144xf32, #tpu.memory_space<vmem>>, vector<16x64xf32>
    %c2_129 = arith.constant 2 : index
    %c8_130 = arith.constant 8 : index
    %101 = vector.load %arg27[%c2_129, %c8_130] : memref<18x144xf32, #tpu.memory_space<vmem>>, vector<16x64xf32>
    %102 = tpu.concatenate %93, %94, %95, %96, %97, %98, %99, %100, %101 in 1 : vector<16x64xf32>, vector<16x64xf32>, vector<16x64xf32>, vector<16x64xf32>, vector<16x64xf32>, vector<16x64xf32>, vector<16x64xf32>, vector<16x64xf32>, vector<16x64xf32> -> vector<16x576xf32>
    %c0_131 = arith.constant 0 : index
    %c0_132 = arith.constant 0 : index
    %103 = vector.load %arg16[%c0_131, %c0_132] : memref<576x128xf32, #tpu.memory_space<vmem>>, vector<576x128xf32>
    %cst_133 = arith.constant dense<0.000000e+00> : vector<16x128xf32>
    %104 = tpu.matmul %102, %103, %cst_133 {dimension_numbers = #tpu.dot_dimension_numbers<[1], [0], [0], [1], [0, 0, 1, 1], [], []>} : vector<16x576xf32>, vector<576x128xf32>, vector<16x128xf32> -> vector<16x128xf32>
    %c0_134 = arith.constant 0 : index
    %c0_135 = arith.constant 0 : index
    %105 = vector.load %arg17[%c0_134, %c0_135] : memref<1x128xf32, #tpu.memory_space<vmem>>, vector<1x128xf32>
    %106 = vector.broadcast %105 : vector<1x128xf32> to vector<16x128xf32>
    %107 = arith.addf %104, %106 : vector<16x128xf32>
    %cst_136 = arith.constant 0.000000e+00 : f32
    %108 = vector.broadcast %cst_136 : f32 to vector<16x128xf32>
    %109 = arith.maximumf %107, %108 : vector<16x128xf32>
    %110 = arith.addf %28, %55 : vector<16x128xf32>
    %111 = arith.addf %110, %82 : vector<16x128xf32>
    %112 = arith.addf %111, %109 : vector<16x128xf32>
    %c64_i32 = arith.constant 64 : i32
    %113 = tpu.dynamic_rotate %112 by %c64_i32 dim 1 : vector<16x128xf32>, i32 -> vector<16x128xf32>
    %114 = arith.maximumf %112, %113 : vector<16x128xf32>
    %c32_i32 = arith.constant 32 : i32
    %115 = tpu.dynamic_rotate %114 by %c32_i32 dim 1 : vector<16x128xf32>, i32 -> vector<16x128xf32>
    %116 = arith.maximumf %114, %115 : vector<16x128xf32>
    %c16_i32 = arith.constant 16 : i32
    %117 = tpu.dynamic_rotate %116 by %c16_i32 dim 1 : vector<16x128xf32>, i32 -> vector<16x128xf32>
    %118 = arith.maximumf %116, %117 : vector<16x128xf32>
    %c8_i32 = arith.constant 8 : i32
    %119 = tpu.dynamic_rotate %118 by %c8_i32 dim 1 : vector<16x128xf32>, i32 -> vector<16x128xf32>
    %120 = arith.maximumf %118, %119 : vector<16x128xf32>
    %cst_137 = arith.constant dense<0.000000e+00> : vector<128xf32>
    %121 = vector.multi_reduction <add>, %120, %cst_137 [0] : vector<16x128xf32> to vector<128xf32>
    %122 = vector.shape_cast %121 : vector<128xf32> to vector<1x128xf32>
    %cst_138 = arith.constant dense<0xFF800000> : vector<128xf32>
    %123 = vector.multi_reduction <maximumf>, %112, %cst_138 [0] : vector<16x128xf32> to vector<128xf32>
    %124 = vector.shape_cast %123 : vector<128xf32> to vector<1x128xf32>
    %c64_i32_139 = arith.constant 64 : i32
    %125 = tpu.dynamic_rotate %124 by %c64_i32_139 dim 1 : vector<1x128xf32>, i32 -> vector<1x128xf32>
    %126 = arith.addf %124, %125 : vector<1x128xf32>
    %c32_i32_140 = arith.constant 32 : i32
    %127 = tpu.dynamic_rotate %126 by %c32_i32_140 dim 1 : vector<1x128xf32>, i32 -> vector<1x128xf32>
    %128 = arith.addf %126, %127 : vector<1x128xf32>
    %c16_i32_141 = arith.constant 16 : i32
    %129 = tpu.dynamic_rotate %128 by %c16_i32_141 dim 1 : vector<1x128xf32>, i32 -> vector<1x128xf32>
    %130 = arith.addf %128, %129 : vector<1x128xf32>
    %c8_i32_142 = arith.constant 8 : i32
    %131 = tpu.dynamic_rotate %130 by %c8_i32_142 dim 1 : vector<1x128xf32>, i32 -> vector<1x128xf32>
    %132 = arith.addf %130, %131 : vector<1x128xf32>
    %133 = arith.addf %122, %132 : vector<1x128xf32>
    %cst_143 = arith.constant 3.125000e-02 : f32
    %134 = vector.broadcast %cst_143 : f32 to vector<1x128xf32>
    %135 = arith.mulf %133, %134 : vector<1x128xf32>
    %136 = vector.shape_cast %135 : vector<1x128xf32> to vector<1x128xf32>
    %137 = vector.broadcast %136 : vector<1x128xf32> to vector<8x128xf32>
    %c0_144 = arith.constant 0 : index
    %c0_145 = arith.constant 0 : index
    %138 = vector.load %arg18[%c0_144, %c0_145] : memref<128x128xf32, #tpu.memory_space<vmem>>, vector<128x128xf32>
    %cst_146 = arith.constant dense<0.000000e+00> : vector<8x128xf32>
    %139 = tpu.matmul %137, %138, %cst_146 {dimension_numbers = #tpu.dot_dimension_numbers<[1], [0], [0], [1], [0, 0, 1, 1], [], []>} : vector<8x128xf32>, vector<128x128xf32>, vector<8x128xf32> -> vector<8x128xf32>
    %c0_147 = arith.constant 0 : index
    %c0_148 = arith.constant 0 : index
    %140 = vector.load %arg19[%c0_147, %c0_148] : memref<1x128xf32, #tpu.memory_space<vmem>>, vector<1x128xf32>
    %141 = vector.broadcast %140 : vector<1x128xf32> to vector<8x128xf32>
    %142 = arith.addf %139, %141 : vector<8x128xf32>
    %143 = vector.extract_strided_slice %142 {offsets = [0, 0], sizes = [1, 128], strides = [1, 1]} : vector<8x128xf32> to vector<1x128xf32>
    %cst_149 = arith.constant 0.000000e+00 : f32
    %144 = vector.broadcast %cst_149 : f32 to vector<1x128xf32>
    %145 = arith.subf %144, %143 : vector<1x128xf32>
    %146 = math.exp %145 : vector<1x128xf32>
    %cst_150 = arith.constant 1.000000e+00 : f32
    %147 = vector.broadcast %cst_150 : f32 to vector<1x128xf32>
    %148 = arith.addf %147, %146 : vector<1x128xf32>
    %cst_151 = arith.constant 1.000000e+00 : f32
    %149 = vector.broadcast %cst_151 : f32 to vector<1x128xf32>
    %150 = arith.divf %149, %148 : vector<1x128xf32>
    %151 = vector.broadcast %150 : vector<1x128xf32> to vector<16x128xf32>
    %152 = arith.mulf %112, %151 : vector<16x128xf32>
    %cst_152 = arith.constant 0.000000e+00 : f32
    %153 = vector.broadcast %cst_152 : f32 to vector<18x144xf32>
    %c0_153 = arith.constant 0 : index
    %c0_154 = arith.constant 0 : index
    %154 = vector.load %arg27[%c0_153, %c0_154] : memref<18x144xf32, #tpu.memory_space<vmem>>, vector<18x144xf32>
    tpu.vector_store %arg27[%c0_153, %c0_154], %153 {strides = array<i32>} : memref<18x144xf32, #tpu.memory_space<vmem>>, vector<18x144xf32>,
    %c1_155 = arith.constant 1 : index
    %c8_156 = arith.constant 8 : index
    %155 = vector.load %arg27[%c1_155, %c8_156] : memref<18x144xf32, #tpu.memory_space<vmem>>, vector<16x128xf32>
    tpu.vector_store %arg27[%c1_155, %c8_156], %152 {strides = array<i32>} : memref<18x144xf32, #tpu.memory_space<vmem>>, vector<16x128xf32>,
    %c0_157 = arith.constant 0 : index
    %c0_158 = arith.constant 0 : index
    %156 = vector.load %arg27[%c0_157, %c0_158] : memref<18x144xf32, #tpu.memory_space<vmem>>, vector<16x128xf32>
    %c0_159 = arith.constant 0 : index
    %c8_160 = arith.constant 8 : index
    %157 = vector.load %arg27[%c0_159, %c8_160] : memref<18x144xf32, #tpu.memory_space<vmem>>, vector<16x128xf32>
    %c0_161 = arith.constant 0 : index
    %c16 = arith.constant 16 : index
    %158 = vector.load %arg27[%c0_161, %c16] : memref<18x144xf32, #tpu.memory_space<vmem>>, vector<16x128xf32>
    %c1_162 = arith.constant 1 : index
    %c0_163 = arith.constant 0 : index
    %159 = vector.load %arg27[%c1_162, %c0_163] : memref<18x144xf32, #tpu.memory_space<vmem>>, vector<16x128xf32>
    %c1_164 = arith.constant 1 : index
    %c8_165 = arith.constant 8 : index
    %160 = vector.load %arg27[%c1_164, %c8_165] : memref<18x144xf32, #tpu.memory_space<vmem>>, vector<16x128xf32>
    %c1_166 = arith.constant 1 : index
    %c16_167 = arith.constant 16 : index
    %161 = vector.load %arg27[%c1_166, %c16_167] : memref<18x144xf32, #tpu.memory_space<vmem>>, vector<16x128xf32>
    %c2_168 = arith.constant 2 : index
    %c0_169 = arith.constant 0 : index
    %162 = vector.load %arg27[%c2_168, %c0_169] : memref<18x144xf32, #tpu.memory_space<vmem>>, vector<16x128xf32>
    %c2_170 = arith.constant 2 : index
    %c8_171 = arith.constant 8 : index
    %163 = vector.load %arg27[%c2_170, %c8_171] : memref<18x144xf32, #tpu.memory_space<vmem>>, vector<16x128xf32>
    %c2_172 = arith.constant 2 : index
    %c16_173 = arith.constant 16 : index
    %164 = vector.load %arg27[%c2_172, %c16_173] : memref<18x144xf32, #tpu.memory_space<vmem>>, vector<16x128xf32>
    %165 = tpu.concatenate %156, %157, %158, %159, %160, %161, %162, %163, %164 in 1 : vector<16x128xf32>, vector<16x128xf32>, vector<16x128xf32>, vector<16x128xf32>, vector<16x128xf32>, vector<16x128xf32>, vector<16x128xf32>, vector<16x128xf32>, vector<16x128xf32> -> vector<16x1152xf32>
    %c0_174 = arith.constant 0 : index
    %c0_175 = arith.constant 0 : index
    %166 = vector.load %arg20[%c0_174, %c0_175] : memref<1152x128xf32, #tpu.memory_space<vmem>>, vector<1152x128xf32>
    %cst_176 = arith.constant dense<0.000000e+00> : vector<16x128xf32>
    %167 = tpu.matmul %165, %166, %cst_176 {dimension_numbers = #tpu.dot_dimension_numbers<[1], [0], [0], [1], [0, 0, 1, 1], [], []>} : vector<16x1152xf32>, vector<1152x128xf32>, vector<16x128xf32> -> vector<16x128xf32>
    %c0_177 = arith.constant 0 : index
    %c0_178 = arith.constant 0 : index
    %168 = vector.load %arg21[%c0_177, %c0_178] : memref<1x128xf32, #tpu.memory_space<vmem>>, vector<1x128xf32>
    %169 = vector.broadcast %168 : vector<1x128xf32> to vector<16x128xf32>
    %170 = arith.addf %167, %169 : vector<16x128xf32>
    %cst_179 = arith.constant 0.000000e+00 : f32
    %171 = vector.broadcast %cst_179 : f32 to vector<16x128xf32>
    %172 = arith.maximumf %170, %171 : vector<16x128xf32>
    %173 = arith.addf %1, %172 : vector<16x128xf32>
    %cst_180 = arith.constant 0.000000e+00 : f32
    %174 = vector.broadcast %cst_180 : f32 to vector<18x144xf32>
    %c0_181 = arith.constant 0 : index
    %c0_182 = arith.constant 0 : index
    %175 = vector.load %arg27[%c0_181, %c0_182] : memref<18x144xf32, #tpu.memory_space<vmem>>, vector<18x144xf32>
    tpu.vector_store %arg27[%c0_181, %c0_182], %174 {strides = array<i32>} : memref<18x144xf32, #tpu.memory_space<vmem>>, vector<18x144xf32>,
    %c0_183 = arith.constant 0 : index
    %c8_184 = arith.constant 8 : index
    %176 = vector.load %arg27[%c0_183, %c8_184] : memref<18x144xf32, #tpu.memory_space<vmem>>, vector<16x128xf32>
    tpu.vector_store %arg27[%c0_183, %c8_184], %173 {strides = array<i32>} : memref<18x144xf32, #tpu.memory_space<vmem>>, vector<16x128xf32>,
    %c0_185 = arith.constant 0 : index
    %c0_186 = arith.constant 0 : index
    %177 = vector.load %arg27[%c0_185, %c0_186] : memref<18x144xf32, #tpu.memory_space<vmem>>, vector<16x128xf32>
    %c0_187 = arith.constant 0 : index
    %c8_188 = arith.constant 8 : index
    %178 = vector.load %arg27[%c0_187, %c8_188] : memref<18x144xf32, #tpu.memory_space<vmem>>, vector<16x128xf32>
    %c0_189 = arith.constant 0 : index
    %c16_190 = arith.constant 16 : index
    %179 = vector.load %arg27[%c0_189, %c16_190] : memref<18x144xf32, #tpu.memory_space<vmem>>, vector<16x128xf32>
    %180 = tpu.concatenate %177, %178, %179 in 1 : vector<16x128xf32>, vector<16x128xf32>, vector<16x128xf32> -> vector<16x384xf32>
    %c0_191 = arith.constant 0 : index
    %c0_192 = arith.constant 0 : index
    %181 = vector.load %arg22[%c0_191, %c0_192] : memref<384x128xf32, #tpu.memory_space<vmem>>, vector<384x128xf32>
    %cst_193 = arith.constant dense<0.000000e+00> : vector<16x128xf32>
    %182 = tpu.matmul %180, %181, %cst_193 {dimension_numbers = #tpu.dot_dimension_numbers<[1], [0], [0], [1], [0, 0, 1, 1], [], []>} : vector<16x384xf32>, vector<384x128xf32>, vector<16x128xf32> -> vector<16x128xf32>
    %c0_194 = arith.constant 0 : index
    %c0_195 = arith.constant 0 : index
    %183 = vector.load %arg23[%c0_194, %c0_195] : memref<1x128xf32, #tpu.memory_space<vmem>>, vector<1x128xf32>
    %184 = vector.broadcast %183 : vector<1x128xf32> to vector<16x128xf32>
    %185 = arith.addf %182, %184 : vector<16x128xf32>
    %cst_196 = arith.constant 0.000000e+00 : f32
    %186 = vector.broadcast %cst_196 : f32 to vector<16x128xf32>
    %187 = arith.maximumf %185, %186 : vector<16x128xf32>
    %cst_197 = arith.constant 0.000000e+00 : f32
    %188 = vector.broadcast %cst_197 : f32 to vector<18x144xf32>
    %c0_198 = arith.constant 0 : index
    %c0_199 = arith.constant 0 : index
    %189 = vector.load %arg27[%c0_198, %c0_199] : memref<18x144xf32, #tpu.memory_space<vmem>>, vector<18x144xf32>
    tpu.vector_store %arg27[%c0_198, %c0_199], %188 {strides = array<i32>} : memref<18x144xf32, #tpu.memory_space<vmem>>, vector<18x144xf32>,
    %c1_200 = arith.constant 1 : index
    %c0_201 = arith.constant 0 : index
    %190 = vector.load %arg27[%c1_200, %c0_201] : memref<18x144xf32, #tpu.memory_space<vmem>>, vector<16x128xf32>
    tpu.vector_store %arg27[%c1_200, %c0_201], %187 {strides = array<i32>} : memref<18x144xf32, #tpu.memory_space<vmem>>, vector<16x128xf32>,
    %c0_202 = arith.constant 0 : index
    %c0_203 = arith.constant 0 : index
    %191 = vector.load %arg27[%c0_202, %c0_203] : memref<18x144xf32, #tpu.memory_space<vmem>>, vector<16x128xf32>
    %c1_204 = arith.constant 1 : index
    %c0_205 = arith.constant 0 : index
    %192 = vector.load %arg27[%c1_204, %c0_205] : memref<18x144xf32, #tpu.memory_space<vmem>>, vector<16x128xf32>
    %c2_206 = arith.constant 2 : index
    %c0_207 = arith.constant 0 : index
    %193 = vector.load %arg27[%c2_206, %c0_207] : memref<18x144xf32, #tpu.memory_space<vmem>>, vector<16x128xf32>
    %194 = tpu.concatenate %191, %192, %193 in 1 : vector<16x128xf32>, vector<16x128xf32>, vector<16x128xf32> -> vector<16x384xf32>
    %c0_208 = arith.constant 0 : index
    %c0_209 = arith.constant 0 : index
    %195 = vector.load %arg24[%c0_208, %c0_209] : memref<384x128xf32, #tpu.memory_space<vmem>>, vector<384x128xf32>
    %cst_210 = arith.constant dense<0.000000e+00> : vector<16x128xf32>
    %196 = tpu.matmul %194, %195, %cst_210 {dimension_numbers = #tpu.dot_dimension_numbers<[1], [0], [0], [1], [0, 0, 1, 1], [], []>} : vector<16x384xf32>, vector<384x128xf32>, vector<16x128xf32> -> vector<16x128xf32>
    %c0_211 = arith.constant 0 : index
    %c0_212 = arith.constant 0 : index
    %197 = vector.load %arg25[%c0_211, %c0_212] : memref<1x128xf32, #tpu.memory_space<vmem>>, vector<1x128xf32>
    %198 = vector.broadcast %197 : vector<1x128xf32> to vector<16x128xf32>
    %199 = arith.addf %196, %198 : vector<16x128xf32>
    %cst_213 = arith.constant 0.000000e+00 : f32
    %200 = vector.broadcast %cst_213 : f32 to vector<16x128xf32>
    %201 = arith.maximumf %199, %200 : vector<16x128xf32>
    %c0_214 = arith.constant 0 : index
    %c0_215 = arith.constant 0 : index
    %c0_216 = arith.constant 0 : index
    %202 = vector.load %arg26[%c0_214, %c0_215, %c0_216] : memref<1x16x128xf32, #tpu.memory_space<vmem>>, vector<1x16x128xf32>
    %203 = vector.shape_cast %202 : vector<1x16x128xf32> to vector<16x128xf32>
    %204 = vector.shape_cast %201 : vector<16x128xf32> to vector<1x16x128xf32>
    tpu.vector_store %arg26[%c0_214, %c0_215, %c0_216], %204 {strides = array<i32>} : memref<1x16x128xf32, #tpu.memory_space<vmem>>, vector<1x16x128xf32>,
    return
  }
  func.func @transform_0(%arg0: i32) -> (i32, i32, i32) {
    %c0_i32 = arith.constant 0 : i32
    %c0_i32_0 = arith.constant 0 : i32
    %c0_i32_1 = arith.constant 0 : i32
    return %arg0, %c0_i32, %c0_i32_0 : i32, i32, i32
  }
  func.func @transform_1(%arg0: i32) -> (i32, i32) {
    %c0_i32 = arith.constant 0 : i32
    %c0_i32_0 = arith.constant 0 : i32
    %c0_i32_1 = arith.constant 0 : i32
    return %c0_i32, %c0_i32_0 : i32, i32
  }
  func.func @transform_2(%arg0: i32) -> (i32, i32) {
    %c0_i32 = arith.constant 0 : i32
    %c0_i32_0 = arith.constant 0 : i32
    %c0_i32_1 = arith.constant 0 : i32
    return %c0_i32, %c0_i32_0 : i32, i32
  }
  func.func @transform_3(%arg0: i32) -> (i32, i32) {
    %c0_i32 = arith.constant 0 : i32
    %c0_i32_0 = arith.constant 0 : i32
    %c0_i32_1 = arith.constant 0 : i32
    return %c0_i32, %c0_i32_0 : i32, i32
  }
  func.func @transform_4(%arg0: i32) -> (i32, i32) {
    %c0_i32 = arith.constant 0 : i32
    %c0_i32_0 = arith.constant 0 : i32
    %c0_i32_1 = arith.constant 0 : i32
    return %c0_i32, %c0_i32_0 : i32, i32
  }
  func.func @transform_5(%arg0: i32) -> (i32, i32) {
    %c0_i32 = arith.constant 0 : i32
    %c0_i32_0 = arith.constant 0 : i32
    %c0_i32_1 = arith.constant 0 : i32
    return %c0_i32, %c0_i32_0 : i32, i32
  }
  func.func @transform_6(%arg0: i32) -> (i32, i32) {
    %c0_i32 = arith.constant 0 : i32
    %c0_i32_0 = arith.constant 0 : i32
    %c0_i32_1 = arith.constant 0 : i32
    return %c0_i32, %c0_i32_0 : i32, i32
  }
  func.func @transform_7(%arg0: i32) -> (i32, i32) {
    %c0_i32 = arith.constant 0 : i32
    %c0_i32_0 = arith.constant 0 : i32
    %c0_i32_1 = arith.constant 0 : i32
    return %c0_i32, %c0_i32_0 : i32, i32
  }
  func.func @transform_8(%arg0: i32) -> (i32, i32) {
    %c0_i32 = arith.constant 0 : i32
    %c0_i32_0 = arith.constant 0 : i32
    %c0_i32_1 = arith.constant 0 : i32
    return %c0_i32, %c0_i32_0 : i32, i32
  }
  func.func @transform_9(%arg0: i32) -> (i32, i32) {
    %c0_i32 = arith.constant 0 : i32
    %c0_i32_0 = arith.constant 0 : i32
    %c0_i32_1 = arith.constant 0 : i32
    return %c0_i32, %c0_i32_0 : i32, i32
  }
  func.func @transform_10(%arg0: i32) -> (i32, i32) {
    %c0_i32 = arith.constant 0 : i32
    %c0_i32_0 = arith.constant 0 : i32
    %c0_i32_1 = arith.constant 0 : i32
    return %c0_i32, %c0_i32_0 : i32, i32
  }
  func.func @transform_11(%arg0: i32) -> (i32, i32) {
    %c0_i32 = arith.constant 0 : i32
    %c0_i32_0 = arith.constant 0 : i32
    %c0_i32_1 = arith.constant 0 : i32
    return %c0_i32, %c0_i32_0 : i32, i32
  }
  func.func @transform_12(%arg0: i32) -> (i32, i32) {
    %c0_i32 = arith.constant 0 : i32
    %c0_i32_0 = arith.constant 0 : i32
    %c0_i32_1 = arith.constant 0 : i32
    return %c0_i32, %c0_i32_0 : i32, i32
  }
  func.func @transform_13(%arg0: i32) -> (i32, i32) {
    %c0_i32 = arith.constant 0 : i32
    %c0_i32_0 = arith.constant 0 : i32
    %c0_i32_1 = arith.constant 0 : i32
    return %c0_i32, %c0_i32_0 : i32, i32
  }
  func.func @transform_14(%arg0: i32) -> (i32, i32) {
    %c0_i32 = arith.constant 0 : i32
    %c0_i32_0 = arith.constant 0 : i32
    %c0_i32_1 = arith.constant 0 : i32
    return %c0_i32, %c0_i32_0 : i32, i32
  }
  func.func @transform_15(%arg0: i32) -> (i32, i32) {
    %c0_i32 = arith.constant 0 : i32
    %c0_i32_0 = arith.constant 0 : i32
    %c0_i32_1 = arith.constant 0 : i32
    return %c0_i32, %c0_i32_0 : i32, i32
  }
  func.func @transform_16(%arg0: i32) -> (i32, i32) {
    %c0_i32 = arith.constant 0 : i32
    %c0_i32_0 = arith.constant 0 : i32
    %c0_i32_1 = arith.constant 0 : i32
    return %c0_i32, %c0_i32_0 : i32, i32
  }
  func.func @transform_17(%arg0: i32) -> (i32, i32) {
    %c0_i32 = arith.constant 0 : i32
    %c0_i32_0 = arith.constant 0 : i32
    %c0_i32_1 = arith.constant 0 : i32
    return %c0_i32, %c0_i32_0 : i32, i32
  }
  func.func @transform_18(%arg0: i32) -> (i32, i32) {
    %c0_i32 = arith.constant 0 : i32
    %c0_i32_0 = arith.constant 0 : i32
    %c0_i32_1 = arith.constant 0 : i32
    return %c0_i32, %c0_i32_0 : i32, i32
  }
  func.func @transform_19(%arg0: i32) -> (i32, i32) {
    %c0_i32 = arith.constant 0 : i32
    %c0_i32_0 = arith.constant 0 : i32
    %c0_i32_1 = arith.constant 0 : i32
    return %c0_i32, %c0_i32_0 : i32, i32
  }
  func.func @transform_20(%arg0: i32) -> (i32, i32) {
    %c0_i32 = arith.constant 0 : i32
    %c0_i32_0 = arith.constant 0 : i32
    %c0_i32_1 = arith.constant 0 : i32
    return %c0_i32, %c0_i32_0 : i32, i32
  }
  func.func @transform_21(%arg0: i32) -> (i32, i32) {
    %c0_i32 = arith.constant 0 : i32
    %c0_i32_0 = arith.constant 0 : i32
    %c0_i32_1 = arith.constant 0 : i32
    return %c0_i32, %c0_i32_0 : i32, i32
  }
  func.func @transform_22(%arg0: i32) -> (i32, i32) {
    %c0_i32 = arith.constant 0 : i32
    %c0_i32_0 = arith.constant 0 : i32
    %c0_i32_1 = arith.constant 0 : i32
    return %c0_i32, %c0_i32_0 : i32, i32
  }
  func.func @transform_23(%arg0: i32) -> (i32, i32) {
    %c0_i32 = arith.constant 0 : i32
    %c0_i32_0 = arith.constant 0 : i32
    %c0_i32_1 = arith.constant 0 : i32
    return %c0_i32, %c0_i32_0 : i32, i32
  }
  func.func @transform_24(%arg0: i32) -> (i32, i32) {
    %c0_i32 = arith.constant 0 : i32
    %c0_i32_0 = arith.constant 0 : i32
    %c0_i32_1 = arith.constant 0 : i32
    return %c0_i32, %c0_i32_0 : i32, i32
  }
  func.func @transform_25(%arg0: i32) -> (i32, i32, i32) {
    %c0_i32 = arith.constant 0 : i32
    %c0_i32_0 = arith.constant 0 : i32
    %c0_i32_1 = arith.constant 0 : i32
    return %arg0, %c0_i32, %c0_i32_0 : i32, i32, i32
  }
}

</mosaic_0001>

<llo_original>
// kernel: forward.1
$region0: #{forward.1}
  #allocation0 [shape = 'u32[]', space=smem, size = 0x4, offset = 0x4, fixed_abs, tag = 'smem constant byte address 0x4 - core index']
  #allocation1 [shape = 'u32[144,128]{1,0:T(1,128)}', space=vmem, size = 0x12000, scoped, tag = 'internal scratch']
  #allocation2 [shape = 'f32[18,144]{1,0:T(8,128)}', space=vmem, size = 0x6000, scoped, tag = 'scratch operand']
  %s0 = inlined_call_operand.vmem [shape: f32[2,16,128], index: 0, kind: input, shape index: {}]
  %s1 = inlined_call_operand.vmem [shape: f32[128,64], index: 1, kind: input, shape index: {}]
  %s2 = inlined_call_operand.vmem [shape: f32[1,64], index: 2, kind: input, shape index: {}]
  %s3 = inlined_call_operand.hbm [shape: f32[576,128], index: 3, kind: input, shape index: {}]
  %s4 = inlined_call_operand.vmem [shape: f32[1,128], index: 4, kind: input, shape index: {}]
  %s5 = inlined_call_operand.vmem [shape: f32[128,64], index: 5, kind: input, shape index: {}]
  %s6 = inlined_call_operand.vmem [shape: f32[1,64], index: 6, kind: input, shape index: {}]
  %s7 = inlined_call_operand.hbm [shape: f32[576,128], index: 7, kind: input, shape index: {}]
  %s8 = inlined_call_operand.vmem [shape: f32[1,128], index: 8, kind: input, shape index: {}]
  %s9 = inlined_call_operand.vmem [shape: f32[128,64], index: 9, kind: input, shape index: {}]
  %s10 = inlined_call_operand.vmem [shape: f32[1,64], index: 10, kind: input, shape index: {}]
  %s11 = inlined_call_operand.hbm [shape: f32[576,128], index: 11, kind: input, shape index: {}]
  %s12 = inlined_call_operand.vmem [shape: f32[1,128], index: 12, kind: input, shape index: {}]
  %s13 = inlined_call_operand.vmem [shape: f32[128,64], index: 13, kind: input, shape index: {}]
  %s14 = inlined_call_operand.vmem [shape: f32[1,64], index: 14, kind: input, shape index: {}]
  %s15 = inlined_call_operand.hbm [shape: f32[576,128], index: 15, kind: input, shape index: {}]
  %s16 = inlined_call_operand.vmem [shape: f32[1,128], index: 16, kind: input, shape index: {}]
  %s17 = inlined_call_operand.hbm [shape: f32[128,128], index: 17, kind: input, shape index: {}]
  %s18 = inlined_call_operand.vmem [shape: f32[1,128], index: 18, kind: input, shape index: {}]
  %s19 = inlined_call_operand.vmem [shape: f32[1152,128], index: 19, kind: input, shape index: {}]
  %s20 = inlined_call_operand.vmem [shape: f32[1,128], index: 20, kind: input, shape index: {}]
  %s21 = inlined_call_operand.vmem [shape: f32[384,128], index: 21, kind: input, shape index: {}]
  %s22 = inlined_call_operand.vmem [shape: f32[1,128], index: 22, kind: input, shape index: {}]
  %s23 = inlined_call_operand.hbm [shape: f32[384,128], index: 23, kind: input, shape index: {}]
  %s24 = inlined_call_operand.vmem [shape: f32[1,128], index: 24, kind: input, shape index: {}]
  %s25 = inlined_call_operand.vmem [shape: f32[2,16,128], index: 25, kind: output, shape index: {}]
  %s26 = sld [smem:[#allocation0]]
  $region157: #{forward.1} parent=0
    _
  %s28 = ssub.s32 1, %s26
  %s29 = scalar_select 0, %s28, %s26
  $region1: #{forward.1} parent=0
    #allocation3 [shape = 'u8[294912]{0}', space=vmem, size = 0x48000, scoped, tag = 'input window, operand 3, single buffered']
    #allocation4 [shape = 's32[2]{0}', space=sflag, size = 0x8, scoped, tag = 'scoped memory for forward.1']
    #allocation5 [shape = 'u8[294912]{0}', space=vmem, size = 0x48000, scoped, tag = 'input window, operand 7, single buffered']
    #allocation6 [shape = 's32[1]{0}', space=sflag, size = 0x4, scoped, tag = 'scoped memory for forward.1']
    #allocation7 [shape = 'u8[294912]{0}', space=vmem, size = 0x48000, scoped, tag = 'input window, operand 11, single buffered']
    #allocation8 [shape = 'u8[294912]{0}', space=vmem, size = 0x48000, scoped, tag = 'input window, operand 15, single buffered']
    #allocation9 [shape = 's32[1]{0}', space=sflag, size = 0x4, scoped, tag = 'scoped memory for forward.1']
    #allocation10 [shape = 'u8[65536]{0}', space=vmem, size = 0x10000, scoped, tag = 'input window, operand 17, single buffered']
    #allocation11 [shape = 'u8[196608]{0}', space=vmem, size = 0x30000, scoped, tag = 'input window, operand 23, single buffered']
    #allocation12 [shape = 's32[1]{0}', space=sflag, size = 0x4, scoped, tag = 'scoped memory for forward.1']
    %30 = vsyncpa [#allocation4], 0
    %31 = vsyncpa [#allocation6], 0
    %32 = vsyncpa [#allocation9], 0
    %33 = vsyncpa [#allocation12], 0
    loop: start=0, step=1, limit=4
    $region2: #{forward.1} parent=1 // loop_pre_header
      _
    $region3: #{forward.1} parent=1 // loop_header
      %s35 = sphi 0, %s39
      %p36 = scmp.ge.s32.totalorder %s35, 4
      %s45 = sphi 0, %s47
      %s48 = sphi 0, %s45
      %s49 = sphi 0, %s48
      %s65 = sphi 0, %s49
      %s69 = sphi 0, %s69
      %s71 = sphi 0, %s69
      %s72 = sphi 0, %s71
      %s86 = sphi 0, %s72
      %s90 = sphi 0, %s90
      %s92 = sphi 0, %s90
      %s93 = sphi 0, %s92
      %s107 = sphi 0, %s93
      %s111 = sphi 0, %s111
      %s113 = sphi 0, %s111
      %s114 = sphi 0, %s113
      %s128 = sphi 0, %s114
      %s132 = sphi 0, %s132
      %s134 = sphi 0, %s132
      %s135 = sphi 0, %s134
      %s149 = sphi 0, %s135
      %s153 = sphi 0, %s153
      %s155 = sphi 0, %s153
      %s156 = sphi 0, %s155
      %s170 = sphi 0, %s156
      %s174 = sphi 0, %s174
      %s176 = sphi 0, %s174
      %s177 = sphi 0, %s176
      %s191 = sphi 0, %s177
      %s195 = sphi 0, %s195
      %s197 = sphi 0, %s195
      %s198 = sphi 0, %s197
      %s212 = sphi 0, %s198
      %s216 = sphi 0, %s216
      %s218 = sphi 0, %s216
      %s219 = sphi 0, %s218
      %s233 = sphi 0, %s219
      %s237 = sphi 0, %s237
      %s239 = sphi 0, %s237
      %s240 = sphi 0, %s239
      %s254 = sphi 0, %s240
      %s258 = sphi 0, %s258
      %s260 = sphi 0, %s258
      %s261 = sphi 0, %s260
      %s275 = sphi 0, %s261
      %s279 = sphi 0, %s279
      %s281 = sphi 0, %s279
      %s282 = sphi 0, %s281
      %s296 = sphi 0, %s282
      %s300 = sphi 0, %s300
      %s302 = sphi 0, %s300
      %s303 = sphi 0, %s302
      %s317 = sphi 0, %s303
      %s321 = sphi 0, %s321
      %s323 = sphi 0, %s321
      %s324 = sphi 0, %s323
      %s338 = sphi 0, %s324
      %s342 = sphi 0, %s342
      %s344 = sphi 0, %s342
      %s345 = sphi 0, %s344
      %s359 = sphi 0, %s345
      %s363 = sphi 0, %s363
      %s365 = sphi 0, %s363
      %s366 = sphi 0, %s365
      %s380 = sphi 0, %s366
      %s384 = sphi 0, %s384
      %s386 = sphi 0, %s384
      %s387 = sphi 0, %s386
      %s401 = sphi 0, %s387
      %s405 = sphi 0, %s405
      %s407 = sphi 0, %s405
      %s408 = sphi 0, %s407
      %s422 = sphi 0, %s408
      %s426 = sphi 0, %s426
      %s428 = sphi 0, %s426
      %s429 = sphi 0, %s428
      %s443 = sphi 0, %s429
      %s447 = sphi 0, %s447
      %s449 = sphi 0, %s447
      %s450 = sphi 0, %s449
      %s464 = sphi 0, %s450
      %s468 = sphi 0, %s468
      %s470 = sphi 0, %s468
      %s471 = sphi 0, %s470
      %s485 = sphi 0, %s471
      %s489 = sphi 0, %s489
      %s491 = sphi 0, %s489
      %s492 = sphi 0, %s491
      %s506 = sphi 0, %s492
      %s510 = sphi 0, %s510
      %s512 = sphi 0, %s510
      %s513 = sphi 0, %s512
      %s527 = sphi 0, %s513
      %s531 = sphi 0, %s531
      %s533 = sphi 0, %s531
      %s534 = sphi 0, %s533
      %s548 = sphi 0, %s534
      %s552 = sphi 0, %s552
      %s554 = sphi 0, %s552
      %s555 = sphi 0, %s554
      %s569 = sphi 0, %s555
      %s575 = sphi 0, %s577
      %s578 = sphi 0, %s575
      %s579 = sphi 0, %s578
      %s595 = sphi 0, %s579
    $region4: #{forward.1} parent=1 // loop_header_branch
      %38 = sbr.rel (%p36) target = $region8
    $region5: #{forward.1} parent=1 // loop_body
      %s40 = ssub.s32 %s35, 1
      %s41 = ssub.s32 %s35, 2
      %s42 = sadd.s32 %s35, 1
      %s43 = ssub.s32 %s35, %s42
      %p44 = scmp.eq.s32.totalorder %s43, 0
      %s46 = sadd.s32 %s45, 1
      %s47 = scalar_select %p44, %s45, %s46
      %p50 = pneg %p44
      %p51 = scmp.eq.s32.totalorder %s35, 1
      %p52 = por %p50, %p51
      %p53 = scmp.ne.s32.totalorder %s45, %s48
      %p54 = scmp.eq.s32.totalorder %s35, 0
      %p55 = por %p53, %p54
      %p56 = scmp.ne.s32.totalorder %s45, %s48
      %p57 = scmp.eq.s32.totalorder %s40, 1
      %p58 = por %p56, %p57
      %p59 = scmp.ne.s32.totalorder %s48, %s49
      %p60 = scmp.eq.s32.totalorder %s40, 0
      %p61 = por %p59, %p60
      %p62 = scmp.ne.s32.totalorder %s48, %s49
      %p63 = scmp.eq.s32.totalorder %s41, 1
      %p64 = por %p62, %p63
      %p66 = scmp.ne.s32.totalorder %s49, %s65
      %p67 = scmp.eq.s32.totalorder %s41, 0
      %p68 = por %p66, %p67
      %s70 = sadd.s32 %s69, 1
      %p73 = scmp.eq.s32.totalorder %s35, 1
      %p74 = scmp.ne.s32.totalorder %s69, %s71
      %p75 = scmp.eq.s32.totalorder %s35, 0
      %p76 = por %p74, %p75
      %p77 = scmp.ne.s32.totalorder %s69, %s71
      %p78 = scmp.eq.s32.totalorder %s40, 1
      %p79 = por %p77, %p78
      %p80 = scmp.ne.s32.totalorder %s71, %s72
      %p81 = scmp.eq.s32.totalorder %s40, 0
      %p82 = por %p80, %p81
      %p83 = scmp.ne.s32.totalorder %s71, %s72
      %p84 = scmp.eq.s32.totalorder %s41, 1
      %p85 = por %p83, %p84
      %p87 = scmp.ne.s32.totalorder %s72, %s86
      %p88 = scmp.eq.s32.totalorder %s41, 0
      %p89 = por %p87, %p88
      %s91 = sadd.s32 %s90, 1
      %p94 = scmp.eq.s32.totalorder %s35, 1
      %p95 = scmp.ne.s32.totalorder %s90, %s92
      %p96 = scmp.eq.s32.totalorder %s35, 0
      %p97 = por %p95, %p96
      %p98 = scmp.ne.s32.totalorder %s90, %s92
      %p99 = scmp.eq.s32.totalorder %s40, 1
      %p100 = por %p98, %p99
      %p101 = scmp.ne.s32.totalorder %s92, %s93
      %p102 = scmp.eq.s32.totalorder %s40, 0
      %p103 = por %p101, %p102
      %p104 = scmp.ne.s32.totalorder %s92, %s93
      %p105 = scmp.eq.s32.totalorder %s41, 1
      %p106 = por %p104, %p105
      %p108 = scmp.ne.s32.totalorder %s93, %s107
      %p109 = scmp.eq.s32.totalorder %s41, 0
      %p110 = por %p108, %p109
      %s112 = sadd.s32 %s111, 1
      %p115 = scmp.eq.s32.totalorder %s35, 1
      %p116 = scmp.ne.s32.totalorder %s111, %s113
      %p117 = scmp.eq.s32.totalorder %s35, 0
      %p118 = por %p116, %p117
      %p119 = scmp.ne.s32.totalorder %s111, %s113
      %p120 = scmp.eq.s32.totalorder %s40, 1
      %p121 = por %p119, %p120
      %p122 = scmp.ne.s32.totalorder %s113, %s114
      %p123 = scmp.eq.s32.totalorder %s40, 0
      %p124 = por %p122, %p123
      %p125 = scmp.ne.s32.totalorder %s113, %s114
      %p126 = scmp.eq.s32.totalorder %s41, 1
      %p127 = por %p125, %p126
      %p129 = scmp.ne.s32.totalorder %s114, %s128
      %p130 = scmp.eq.s32.totalorder %s41, 0
      %p131 = por %p129, %p130
      %s133 = sadd.s32 %s132, 1
      %p136 = scmp.eq.s32.totalorder %s35, 1
      %p137 = scmp.ne.s32.totalorder %s132, %s134
      %p138 = scmp.eq.s32.totalorder %s35, 0
      %p139 = por %p137, %p138
      %p140 = scmp.ne.s32.totalorder %s132, %s134
      %p141 = scmp.eq.s32.totalorder %s40, 1
      %p142 = por %p140, %p141
      %p143 = scmp.ne.s32.totalorder %s134, %s135
      %p144 = scmp.eq.s32.totalorder %s40, 0
      %p145 = por %p143, %p144
      %p146 = scmp.ne.s32.totalorder %s134, %s135
      %p147 = scmp.eq.s32.totalorder %s41, 1
      %p148 = por %p146, %p147
      %p150 = scmp.ne.s32.totalorder %s135, %s149
      %p151 = scmp.eq.s32.totalorder %s41, 0
      %p152 = por %p150, %p151
      %s154 = sadd.s32 %s153, 1
      %p157 = scmp.eq.s32.totalorder %s35, 1
      %p158 = scmp.ne.s32.totalorder %s153, %s155
      %p159 = scmp.eq.s32.totalorder %s35, 0
      %p160 = por %p158, %p159
      %p161 = scmp.ne.s32.totalorder %s153, %s155
      %p162 = scmp.eq.s32.totalorder %s40, 1
      %p163 = por %p161, %p162
      %p164 = scmp.ne.s32.totalorder %s155, %s156
      %p165 = scmp.eq.s32.totalorder %s40, 0
      %p166 = por %p164, %p165
      %p167 = scmp.ne.s32.totalorder %s155, %s156
      %p168 = scmp.eq.s32.totalorder %s41, 1
      %p169 = por %p167, %p168
      %p171 = scmp.ne.s32.totalorder %s156, %s170
      %p172 = scmp.eq.s32.totalorder %s41, 0
      %p173 = por %p171, %p172
      %s175 = sadd.s32 %s174, 1
      %p178 = scmp.eq.s32.totalorder %s35, 1
      %p179 = scmp.ne.s32.totalorder %s174, %s176
      %p180 = scmp.eq.s32.totalorder %s35, 0
      %p181 = por %p179, %p180
      %p182 = scmp.ne.s32.totalorder %s174, %s176
      %p183 = scmp.eq.s32.totalorder %s40, 1
      %p184 = por %p182, %p183
      %p185 = scmp.ne.s32.totalorder %s176, %s177
      %p186 = scmp.eq.s32.totalorder %s40, 0
      %p187 = por %p185, %p186
      %p188 = scmp.ne.s32.totalorder %s176, %s177
      %p189 = scmp.eq.s32.totalorder %s41, 1
      %p190 = por %p188, %p189
      %p192 = scmp.ne.s32.totalorder %s177, %s191
      %p193 = scmp.eq.s32.totalorder %s41, 0
      %p194 = por %p192, %p193
      %s196 = sadd.s32 %s195, 1
      %p199 = scmp.eq.s32.totalorder %s35, 1
      %p200 = scmp.ne.s32.totalorder %s195, %s197
      %p201 = scmp.eq.s32.totalorder %s35, 0
      %p202 = por %p200, %p201
      %p203 = scmp.ne.s32.totalorder %s195, %s197
      %p204 = scmp.eq.s32.totalorder %s40, 1
      %p205 = por %p203, %p204
      %p206 = scmp.ne.s32.totalorder %s197, %s198
      %p207 = scmp.eq.s32.totalorder %s40, 0
      %p208 = por %p206, %p207
      %p209 = scmp.ne.s32.totalorder %s197, %s198
      %p210 = scmp.eq.s32.totalorder %s41, 1
      %p211 = por %p209, %p210
      %p213 = scmp.ne.s32.totalorder %s198, %s212
      %p214 = scmp.eq.s32.totalorder %s41, 0
      %p215 = por %p213, %p214
      %s217 = sadd.s32 %s216, 1
      %p220 = scmp.eq.s32.totalorder %s35, 1
      %p221 = scmp.ne.s32.totalorder %s216, %s218
      %p222 = scmp.eq.s32.totalorder %s35, 0
      %p223 = por %p221, %p222
      %p224 = scmp.ne.s32.totalorder %s216, %s218
      %p225 = scmp.eq.s32.totalorder %s40, 1
      %p226 = por %p224, %p225
      %p227 = scmp.ne.s32.totalorder %s218, %s219
      %p228 = scmp.eq.s32.totalorder %s40, 0
      %p229 = por %p227, %p228
      %p230 = scmp.ne.s32.totalorder %s218, %s219
      %p231 = scmp.eq.s32.totalorder %s41, 1
      %p232 = por %p230, %p231
      %p234 = scmp.ne.s32.totalorder %s219, %s233
      %p235 = scmp.eq.s32.totalorder %s41, 0
      %p236 = por %p234, %p235
      %s238 = sadd.s32 %s237, 1
      %p241 = scmp.eq.s32.totalorder %s35, 1
      %p242 = scmp.ne.s32.totalorder %s237, %s239
      %p243 = scmp.eq.s32.totalorder %s35, 0
      %p244 = por %p242, %p243
      %p245 = scmp.ne.s32.totalorder %s237, %s239
      %p246 = scmp.eq.s32.totalorder %s40, 1
      %p247 = por %p245, %p246
      %p248 = scmp.ne.s32.totalorder %s239, %s240
      %p249 = scmp.eq.s32.totalorder %s40, 0
      %p250 = por %p248, %p249
      %p251 = scmp.ne.s32.totalorder %s239, %s240
      %p252 = scmp.eq.s32.totalorder %s41, 1
      %p253 = por %p251, %p252
      %p255 = scmp.ne.s32.totalorder %s240, %s254
      %p256 = scmp.eq.s32.totalorder %s41, 0
      %p257 = por %p255, %p256
      %s259 = sadd.s32 %s258, 1
      %p262 = scmp.eq.s32.totalorder %s35, 1
      %p263 = scmp.ne.s32.totalorder %s258, %s260
      %p264 = scmp.eq.s32.totalorder %s35, 0
      %p265 = por %p263, %p264
      %p266 = scmp.ne.s32.totalorder %s258, %s260
      %p267 = scmp.eq.s32.totalorder %s40, 1
      %p268 = por %p266, %p267
      %p269 = scmp.ne.s32.totalorder %s260, %s261
      %p270 = scmp.eq.s32.totalorder %s40, 0
      %p271 = por %p269, %p270
      %p272 = scmp.ne.s32.totalorder %s260, %s261
      %p273 = scmp.eq.s32.totalorder %s41, 1
      %p274 = por %p272, %p273
      %p276 = scmp.ne.s32.totalorder %s261, %s275
      %p277 = scmp.eq.s32.totalorder %s41, 0
      %p278 = por %p276, %p277
      %s280 = sadd.s32 %s279, 1
      %p283 = scmp.eq.s32.totalorder %s35, 1
      %p284 = scmp.ne.s32.totalorder %s279, %s281
      %p285 = scmp.eq.s32.totalorder %s35, 0
      %p286 = por %p284, %p285
      %p287 = scmp.ne.s32.totalorder %s279, %s281
      %p288 = scmp.eq.s32.totalorder %s40, 1
      %p289 = por %p287, %p288
      %p290 = scmp.ne.s32.totalorder %s281, %s282
      %p291 = scmp.eq.s32.totalorder %s40, 0
      %p292 = por %p290, %p291
      %p293 = scmp.ne.s32.totalorder %s281, %s282
      %p294 = scmp.eq.s32.totalorder %s41, 1
      %p295 = por %p293, %p294
      %p297 = scmp.ne.s32.totalorder %s282, %s296
      %p298 = scmp.eq.s32.totalorder %s41, 0
      %p299 = por %p297, %p298
      %s301 = sadd.s32 %s300, 1
      %p304 = scmp.eq.s32.totalorder %s35, 1
      %p305 = scmp.ne.s32.totalorder %s300, %s302
      %p306 = scmp.eq.s32.totalorder %s35, 0
      %p307 = por %p305, %p306
      %p308 = scmp.ne.s32.totalorder %s300, %s302
      %p309 = scmp.eq.s32.totalorder %s40, 1
      %p310 = por %p308, %p309
      %p311 = scmp.ne.s32.totalorder %s302, %s303
      %p312 = scmp.eq.s32.totalorder %s40, 0
      %p313 = por %p311, %p312
      %p314 = scmp.ne.s32.totalorder %s302, %s303
      %p315 = scmp.eq.s32.totalorder %s41, 1
      %p316 = por %p314, %p315
      %p318 = scmp.ne.s32.totalorder %s303, %s317
      %p319 = scmp.eq.s32.totalorder %s41, 0
      %p320 = por %p318, %p319
      %s322 = sadd.s32 %s321, 1
      %p325 = scmp.eq.s32.totalorder %s35, 1
      %p326 = scmp.ne.s32.totalorder %s321, %s323
      %p327 = scmp.eq.s32.totalorder %s35, 0
      %p328 = por %p326, %p327
      %p329 = scmp.ne.s32.totalorder %s321, %s323
      %p330 = scmp.eq.s32.totalorder %s40, 1
      %p331 = por %p329, %p330
      %p332 = scmp.ne.s32.totalorder %s323, %s324
      %p333 = scmp.eq.s32.totalorder %s40, 0
      %p334 = por %p332, %p333
      %p335 = scmp.ne.s32.totalorder %s323, %s324
      %p336 = scmp.eq.s32.totalorder %s41, 1
      %p337 = por %p335, %p336
      %p339 = scmp.ne.s32.totalorder %s324, %s338
      %p340 = scmp.eq.s32.totalorder %s41, 0
      %p341 = por %p339, %p340
      %s343 = sadd.s32 %s342, 1
      %p346 = scmp.eq.s32.totalorder %s35, 1
      %p347 = scmp.ne.s32.totalorder %s342, %s344
      %p348 = scmp.eq.s32.totalorder %s35, 0
      %p349 = por %p347, %p348
      %p350 = scmp.ne.s32.totalorder %s342, %s344
      %p351 = scmp.eq.s32.totalorder %s40, 1
      %p352 = por %p350, %p351
      %p353 = scmp.ne.s32.totalorder %s344, %s345
      %p354 = scmp.eq.s32.totalorder %s40, 0
      %p355 = por %p353, %p354
      %p356 = scmp.ne.s32.totalorder %s344, %s345
      %p357 = scmp.eq.s32.totalorder %s41, 1
      %p358 = por %p356, %p357
      %p360 = scmp.ne.s32.totalorder %s345, %s359
      %p361 = scmp.eq.s32.totalorder %s41, 0
      %p362 = por %p360, %p361
      %s364 = sadd.s32 %s363, 1
      %p367 = scmp.eq.s32.totalorder %s35, 1
      %p368 = scmp.ne.s32.totalorder %s363, %s365
      %p369 = scmp.eq.s32.totalorder %s35, 0
      %p370 = por %p368, %p369
      %p371 = scmp.ne.s32.totalorder %s363, %s365
      %p372 = scmp.eq.s32.totalorder %s40, 1
      %p373 = por %p371, %p372
      %p374 = scmp.ne.s32.totalorder %s365, %s366
      %p375 = scmp.eq.s32.totalorder %s40, 0
      %p376 = por %p374, %p375
      %p377 = scmp.ne.s32.totalorder %s365, %s366
      %p378 = scmp.eq.s32.totalorder %s41, 1
      %p379 = por %p377, %p378
      %p381 = scmp.ne.s32.totalorder %s366, %s380
      %p382 = scmp.eq.s32.totalorder %s41, 0
      %p383 = por %p381, %p382
      %s385 = sadd.s32 %s384, 1
      %p388 = scmp.eq.s32.totalorder %s35, 1
      %p389 = scmp.ne.s32.totalorder %s384, %s386
      %p390 = scmp.eq.s32.totalorder %s35, 0
      %p391 = por %p389, %p390
      %p392 = scmp.ne.s32.totalorder %s384, %s386
      %p393 = scmp.eq.s32.totalorder %s40, 1
      %p394 = por %p392, %p393
      %p395 = scmp.ne.s32.totalorder %s386, %s387
      %p396 = scmp.eq.s32.totalorder %s40, 0
      %p397 = por %p395, %p396
      %p398 = scmp.ne.s32.totalorder %s386, %s387
      %p399 = scmp.eq.s32.totalorder %s41, 1
      %p400 = por %p398, %p399
      %p402 = scmp.ne.s32.totalorder %s387, %s401
      %p403 = scmp.eq.s32.totalorder %s41, 0
      %p404 = por %p402, %p403
      %s406 = sadd.s32 %s405, 1
      %p409 = scmp.eq.s32.totalorder %s35, 1
      %p410 = scmp.ne.s32.totalorder %s405, %s407
      %p411 = scmp.eq.s32.totalorder %s35, 0
      %p412 = por %p410, %p411
      %p413 = scmp.ne.s32.totalorder %s405, %s407
      %p414 = scmp.eq.s32.totalorder %s40, 1
      %p415 = por %p413, %p414
      %p416 = scmp.ne.s32.totalorder %s407, %s408
      %p417 = scmp.eq.s32.totalorder %s40, 0
      %p418 = por %p416, %p417
      %p419 = scmp.ne.s32.totalorder %s407, %s408
      %p420 = scmp.eq.s32.totalorder %s41, 1
      %p421 = por %p419, %p420
      %p423 = scmp.ne.s32.totalorder %s408, %s422
      %p424 = scmp.eq.s32.totalorder %s41, 0
      %p425 = por %p423, %p424
      %s427 = sadd.s32 %s426, 1
      %p430 = scmp.eq.s32.totalorder %s35, 1
      %p431 = scmp.ne.s32.totalorder %s426, %s428
      %p432 = scmp.eq.s32.totalorder %s35, 0
      %p433 = por %p431, %p432
      %p434 = scmp.ne.s32.totalorder %s426, %s428
      %p435 = scmp.eq.s32.totalorder %s40, 1
      %p436 = por %p434, %p435
      %p437 = scmp.ne.s32.totalorder %s428, %s429
      %p438 = scmp.eq.s32.totalorder %s40, 0
      %p439 = por %p437, %p438
      %p440 = scmp.ne.s32.totalorder %s428, %s429
      %p441 = scmp.eq.s32.totalorder %s41, 1
      %p442 = por %p440, %p441
      %p444 = scmp.ne.s32.totalorder %s429, %s443
      %p445 = scmp.eq.s32.totalorder %s41, 0
      %p446 = por %p444, %p445
      %s448 = sadd.s32 %s447, 1
      %p451 = scmp.eq.s32.totalorder %s35, 1
      %p452 = scmp.ne.s32.totalorder %s447, %s449
      %p453 = scmp.eq.s32.totalorder %s35, 0
      %p454 = por %p452, %p453
      %p455 = scmp.ne.s32.totalorder %s447, %s449
      %p456 = scmp.eq.s32.totalorder %s40, 1
      %p457 = por %p455, %p456
      %p458 = scmp.ne.s32.totalorder %s449, %s450
      %p459 = scmp.eq.s32.totalorder %s40, 0
      %p460 = por %p458, %p459
      %p461 = scmp.ne.s32.totalorder %s449, %s450
      %p462 = scmp.eq.s32.totalorder %s41, 1
      %p463 = por %p461, %p462
      %p465 = scmp.ne.s32.totalorder %s450, %s464
      %p466 = scmp.eq.s32.totalorder %s41, 0
      %p467 = por %p465, %p466
      %s469 = sadd.s32 %s468, 1
      %p472 = scmp.eq.s32.totalorder %s35, 1
      %p473 = scmp.ne.s32.totalorder %s468, %s470
      %p474 = scmp.eq.s32.totalorder %s35, 0
      %p475 = por %p473, %p474
      %p476 = scmp.ne.s32.totalorder %s468, %s470
      %p477 = scmp.eq.s32.totalorder %s40, 1
      %p478 = por %p476, %p477
      %p479 = scmp.ne.s32.totalorder %s470, %s471
      %p480 = scmp.eq.s32.totalorder %s40, 0
      %p481 = por %p479, %p480
      %p482 = scmp.ne.s32.totalorder %s470, %s471
      %p483 = scmp.eq.s32.totalorder %s41, 1
      %p484 = por %p482, %p483
      %p486 = scmp.ne.s32.totalorder %s471, %s485
      %p487 = scmp.eq.s32.totalorder %s41, 0
      %p488 = por %p486, %p487
      %s490 = sadd.s32 %s489, 1
      %p493 = scmp.eq.s32.totalorder %s35, 1
      %p494 = scmp.ne.s32.totalorder %s489, %s491
      %p495 = scmp.eq.s32.totalorder %s35, 0
      %p496 = por %p494, %p495
      %p497 = scmp.ne.s32.totalorder %s489, %s491
      %p498 = scmp.eq.s32.totalorder %s40, 1
      %p499 = por %p497, %p498
      %p500 = scmp.ne.s32.totalorder %s491, %s492
      %p501 = scmp.eq.s32.totalorder %s40, 0
      %p502 = por %p500, %p501
      %p503 = scmp.ne.s32.totalorder %s491, %s492
      %p504 = scmp.eq.s32.totalorder %s41, 1
      %p505 = por %p503, %p504
      %p507 = scmp.ne.s32.totalorder %s492, %s506
      %p508 = scmp.eq.s32.totalorder %s41, 0
      %p509 = por %p507, %p508
      %s511 = sadd.s32 %s510, 1
      %p514 = scmp.eq.s32.totalorder %s35, 1
      %p515 = scmp.ne.s32.totalorder %s510, %s512
      %p516 = scmp.eq.s32.totalorder %s35, 0
      %p517 = por %p515, %p516
      %p518 = scmp.ne.s32.totalorder %s510, %s512
      %p519 = scmp.eq.s32.totalorder %s40, 1
      %p520 = por %p518, %p519
      %p521 = scmp.ne.s32.totalorder %s512, %s513
      %p522 = scmp.eq.s32.totalorder %s40, 0
      %p523 = por %p521, %p522
      %p524 = scmp.ne.s32.totalorder %s512, %s513
      %p525 = scmp.eq.s32.totalorder %s41, 1
      %p526 = por %p524, %p525
      %p528 = scmp.ne.s32.totalorder %s513, %s527
      %p529 = scmp.eq.s32.totalorder %s41, 0
      %p530 = por %p528, %p529
      %s532 = sadd.s32 %s531, 1
      %p535 = scmp.eq.s32.totalorder %s35, 1
      %p536 = scmp.ne.s32.totalorder %s531, %s533
      %p537 = scmp.eq.s32.totalorder %s35, 0
      %p538 = por %p536, %p537
      %p539 = scmp.ne.s32.totalorder %s531, %s533
      %p540 = scmp.eq.s32.totalorder %s40, 1
      %p541 = por %p539, %p540
      %p542 = scmp.ne.s32.totalorder %s533, %s534
      %p543 = scmp.eq.s32.totalorder %s40, 0
      %p544 = por %p542, %p543
      %p545 = scmp.ne.s32.totalorder %s533, %s534
      %p546 = scmp.eq.s32.totalorder %s41, 1
      %p547 = por %p545, %p546
      %p549 = scmp.ne.s32.totalorder %s534, %s548
      %p550 = scmp.eq.s32.totalorder %s41, 0
      %p551 = por %p549, %p550
      %s553 = sadd.s32 %s552, 1
      %p556 = scmp.eq.s32.totalorder %s35, 1
      %p557 = scmp.ne.s32.totalorder %s552, %s554
      %p558 = scmp.eq.s32.totalorder %s35, 0
      %p559 = por %p557, %p558
      %p560 = scmp.ne.s32.totalorder %s552, %s554
      %p561 = scmp.eq.s32.totalorder %s40, 1
      %p562 = por %p560, %p561
      %p563 = scmp.ne.s32.totalorder %s554, %s555
      %p564 = scmp.eq.s32.totalorder %s40, 0
      %p565 = por %p563, %p564
      %p566 = scmp.ne.s32.totalorder %s554, %s555
      %p567 = scmp.eq.s32.totalorder %s41, 1
      %p568 = por %p566, %p567
      %p570 = scmp.ne.s32.totalorder %s555, %s569
      %p571 = scmp.eq.s32.totalorder %s41, 0
      %p572 = por %p570, %p571
      %s573 = ssub.s32 %s35, %s42
      %p574 = scmp.eq.s32.totalorder %s573, 0
      %s576 = sadd.s32 %s575, 1
      %s577 = scalar_select %p574, %s575, %s576
      %p580 = pneg %p574
      %p581 = scmp.eq.s32.totalorder %s35, 1
      %p582 = por %p580, %p581
      %p583 = scmp.ne.s32.totalorder %s575, %s578
      %p584 = scmp.eq.s32.totalorder %s35, 0
      %p585 = por %p583, %p584
      %p586 = scmp.ne.s32.totalorder %s575, %s578
      %p587 = scmp.eq.s32.totalorder %s40, 1
      %p588 = por %p586, %p587
      %p589 = scmp.ne.s32.totalorder %s578, %s579
      %p590 = scmp.eq.s32.totalorder %s40, 0
      %p591 = por %p589, %p590
      %p592 = scmp.ne.s32.totalorder %s578, %s579
      %p593 = scmp.eq.s32.totalorder %s41, 1
      %p594 = por %p592, %p593
      %p596 = scmp.ne.s32.totalorder %s579, %s595
      %p597 = scmp.eq.s32.totalorder %s41, 0
      %p598 = por %p596, %p597
      %p599 = scmp.le.s32.totalorder 1, %s35
      %p600 = scmp.lt.s32.totalorder %s35, 3
      %p601 = pnand %p599, %p600
      %p602 = pneg %p601
      // Predicated region
      $region9: #{forward.1} parent=5 // pred_check
        _
      $region10: #{forward.1} parent=5 // pred_check_branch
        %604 = sbr.rel (%p601) target = $region12
      $region11: #{forward.1} parent=5 // pred_region
        %s605 = ssub.s32 %s35, 1
        // Predicated region
        $region13: #{forward.1} parent=11 // pred_check
          %p606 = pneg %p82
        $region14: #{forward.1} parent=11 // pred_check_branch
          %608 = sbr.rel (%p606) target = $region16
        $region15: #{forward.1} parent=11 // pred_region
          _
        $region16: #{forward.1} parent=11 // pred_fallthru
          _
        // Predicated region
        $region17: #{forward.1} parent=11 // pred_check
          %p609 = pneg %p103
        $region18: #{forward.1} parent=11 // pred_check_branch
          %611 = sbr.rel (%p609) target = $region20
        $region19: #{forward.1} parent=11 // pred_region
          _
        $region20: #{forward.1} parent=11 // pred_fallthru
          _
        // Predicated region
        $region21: #{forward.1} parent=11 // pred_check
          %p612 = pneg %p124
        $region22: #{forward.1} parent=11 // pred_check_branch
          %614 = sbr.rel (%p612) target = $region24
        $region23: #{forward.1} parent=11 // pred_region
          %s616 = ssub.s32 9216, 9216
          %617 = vsyncadd [#allocation4], %s616
          %s618 = sshll.u32 [#allocation3], 4
          %s619 = int_to_ptr.vmem [resolvable:$true] %s618
          %624 = dma.hbm_to_vmem [thread:$0]  %s3, 9216, %s619, [#allocation4], 128, 128, 8
        $region24: #{forward.1} parent=11 // pred_fallthru
          _
        // Predicated region
        $region25: #{forward.1} parent=11 // pred_check
          %p625 = pneg %p145
        $region26: #{forward.1} parent=11 // pred_check_branch
          %627 = sbr.rel (%p625) target = $region28
        $region27: #{forward.1} parent=11 // pred_region
          _
        $region28: #{forward.1} parent=11 // pred_fallthru
          _
        // Predicated region
        $region29: #{forward.1} parent=11 // pred_check
          %p628 = pneg %p166
        $region30: #{forward.1} parent=11 // pred_check_branch
          %630 = sbr.rel (%p628) target = $region32
        $region31: #{forward.1} parent=11 // pred_region
          _
        $region32: #{forward.1} parent=11 // pred_fallthru
          _
        // Predicated region
        $region33: #{forward.1} parent=11 // pred_check
          %p631 = pneg %p187
        $region34: #{forward.1} parent=11 // pred_check_branch
          %633 = sbr.rel (%p631) target = $region36
        $region35: #{forward.1} parent=11 // pred_region
          _
        $region36: #{forward.1} parent=11 // pred_fallthru
          _
        // Predicated region
        $region37: #{forward.1} parent=11 // pred_check
          %p634 = pneg %p208
        $region38: #{forward.1} parent=11 // pred_check_branch
          %636 = sbr.rel (%p634) target = $region40
        $region39: #{forward.1} parent=11 // pred_region
          %s638 = ssub.s32 9216, 9216
          %639 = vsyncadd [#allocation6], %s638
          %s640 = sshll.u32 [#allocation5], 4
          %s641 = int_to_ptr.vmem [resolvable:$true] %s640
          %646 = dma.hbm_to_vmem [thread:$0]  %s7, 9216, %s641, [#allocation6], 128, 128, 8
        $region40: #{forward.1} parent=11 // pred_fallthru
          _
        // Predicated region
        $region41: #{forward.1} parent=11 // pred_check
          %p647 = pneg %p229
        $region42: #{forward.1} parent=11 // pred_check_branch
          %649 = sbr.rel (%p647) target = $region44
        $region43: #{forward.1} parent=11 // pred_region
          _
        $region44: #{forward.1} parent=11 // pred_fallthru
          _
        // Predicated region
        $region45: #{forward.1} parent=11 // pred_check
          %p650 = pneg %p250
        $region46: #{forward.1} parent=11 // pred_check_branch
          %652 = sbr.rel (%p650) target = $region48
        $region47: #{forward.1} parent=11 // pred_region
          _
        $region48: #{forward.1} parent=11 // pred_fallthru
          _
        // Predicated region
        $region49: #{forward.1} parent=11 // pred_check
          %p653 = pneg %p271
        $region50: #{forward.1} parent=11 // pred_check_branch
          %655 = sbr.rel (%p653) target = $region52
        $region51: #{forward.1} parent=11 // pred_region
          _
        $region52: #{forward.1} parent=11 // pred_fallthru
          _
        // Predicated region
        $region53: #{forward.1} parent=11 // pred_check
          %p656 = pneg %p292
        $region54: #{forward.1} parent=11 // pred_check_branch
          %658 = sbr.rel (%p656) target = $region56
        $region55: #{forward.1} parent=11 // pred_region
          %s660 = ssub.s32 9216, 9216
          %661 = vsyncadd [#allocation6], %s660
          %s662 = sshll.u32 [#allocation7], 4
          %s663 = int_to_ptr.vmem [resolvable:$true] %s662
          %668 = dma.hbm_to_vmem [thread:$0]  %s11, 9216, %s663, [#allocation6], 128, 128, 8
        $region56: #{forward.1} parent=11 // pred_fallthru
          _
        // Predicated region
        $region57: #{forward.1} parent=11 // pred_check
          %p669 = pneg %p313
        $region58: #{forward.1} parent=11 // pred_check_branch
          %671 = sbr.rel (%p669) target = $region60
        $region59: #{forward.1} parent=11 // pred_region
          _
        $region60: #{forward.1} parent=11 // pred_fallthru
          _
        // Predicated region
        $region61: #{forward.1} parent=11 // pred_check
          %p672 = pneg %p334
        $region62: #{forward.1} parent=11 // pred_check_branch
          %674 = sbr.rel (%p672) target = $region64
        $region63: #{forward.1} parent=11 // pred_region
          _
        $region64: #{forward.1} parent=11 // pred_fallthru
          _
        // Predicated region
        $region65: #{forward.1} parent=11 // pred_check
          %p675 = pneg %p355
        $region66: #{forward.1} parent=11 // pred_check_branch
          %677 = sbr.rel (%p675) target = $region68
        $region67: #{forward.1} parent=11 // pred_region
          _
        $region68: #{forward.1} parent=11 // pred_fallthru
          _
        // Predicated region
        $region69: #{forward.1} parent=11 // pred_check
          %p678 = pneg %p376
        $region70: #{forward.1} parent=11 // pred_check_branch
          %680 = sbr.rel (%p678) target = $region72
        $region71: #{forward.1} parent=11 // pred_region
          %s682 = ssub.s32 9216, 9216
          %683 = vsyncadd [#allocation9], %s682
          %s684 = sshll.u32 [#allocation8], 4
          %s685 = int_to_ptr.vmem [resolvable:$true] %s684
          %690 = dma.hbm_to_vmem [thread:$0]  %s15, 9216, %s685, [#allocation9], 128, 128, 8
        $region72: #{forward.1} parent=11 // pred_fallthru
          _
        // Predicated region
        $region73: #{forward.1} parent=11 // pred_check
          %p691 = pneg %p397
        $region74: #{forward.1} parent=11 // pred_check_branch
          %693 = sbr.rel (%p691) target = $region76
        $region75: #{forward.1} parent=11 // pred_region
          _
        $region76: #{forward.1} parent=11 // pred_fallthru
          _
        // Predicated region
        $region77: #{forward.1} parent=11 // pred_check
          %p694 = pneg %p418
        $region78: #{forward.1} parent=11 // pred_check_branch
          %696 = sbr.rel (%p694) target = $region80
        $region79: #{forward.1} parent=11 // pred_region
          %s698 = ssub.s32 2048, 2048
          %699 = vsyncadd [#allocation9], %s698
          %s700 = sshll.u32 [#allocation10], 4
          %s701 = int_to_ptr.vmem [resolvable:$true] %s700
          %706 = dma.hbm_to_vmem [thread:$0]  %s17, 2048, %s701, [#allocation9], 128, 128, 8
        $region80: #{forward.1} parent=11 // pred_fallthru
          _
        // Predicated region
        $region81: #{forward.1} parent=11 // pred_check
          %p707 = pneg %p439
        $region82: #{forward.1} parent=11 // pred_check_branch
          %709 = sbr.rel (%p707) target = $region84
        $region83: #{forward.1} parent=11 // pred_region
          _
        $region84: #{forward.1} parent=11 // pred_fallthru
          _
        // Predicated region
        $region85: #{forward.1} parent=11 // pred_check
          %p710 = pneg %p460
        $region86: #{forward.1} parent=11 // pred_check_branch
          %712 = sbr.rel (%p710) target = $region88
        $region87: #{forward.1} parent=11 // pred_region
          _
        $region88: #{forward.1} parent=11 // pred_fallthru
          _
        // Predicated region
        $region89: #{forward.1} parent=11 // pred_check
          %p713 = pneg %p481
        $region90: #{forward.1} parent=11 // pred_check_branch
          %715 = sbr.rel (%p713) target = $region92
        $region91: #{forward.1} parent=11 // pred_region
          _
        $region92: #{forward.1} parent=11 // pred_fallthru
          _
        // Predicated region
        $region93: #{forward.1} parent=11 // pred_check
          %p716 = pneg %p502
        $region94: #{forward.1} parent=11 // pred_check_branch
          %718 = sbr.rel (%p716) target = $region96
        $region95: #{forward.1} parent=11 // pred_region
          _
        $region96: #{forward.1} parent=11 // pred_fallthru
          _
        // Predicated region
        $region97: #{forward.1} parent=11 // pred_check
          %p719 = pneg %p523
        $region98: #{forward.1} parent=11 // pred_check_branch
          %721 = sbr.rel (%p719) target = $region100
        $region99: #{forward.1} parent=11 // pred_region
          _
        $region100: #{forward.1} parent=11 // pred_fallthru
          _
        // Predicated region
        $region101: #{forward.1} parent=11 // pred_check
          %p722 = pneg %p544
        $region102: #{forward.1} parent=11 // pred_check_branch
          %724 = sbr.rel (%p722) target = $region104
        $region103: #{forward.1} parent=11 // pred_region
          %s726 = ssub.s32 6144, 6144
          %727 = vsyncadd [#allocation12], %s726
          %s728 = sshll.u32 [#allocation11], 4
          %s729 = int_to_ptr.vmem [resolvable:$true] %s728
          %734 = dma.hbm_to_vmem [thread:$0]  %s23, 6144, %s729, [#allocation12], 128, 128, 8
        $region104: #{forward.1} parent=11 // pred_fallthru
          _
        // Predicated region
        $region105: #{forward.1} parent=11 // pred_check
          %p735 = pneg %p565
        $region106: #{forward.1} parent=11 // pred_check_branch
          %737 = sbr.rel (%p735) target = $region108
        $region107: #{forward.1} parent=11 // pred_region
          _
        $region108: #{forward.1} parent=11 // pred_fallthru
          _
      $region12: #{forward.1} parent=5 // pred_fallthru
        _
      %p738 = scmp.lt.s32.totalorder %s35, 2
      // Predicated region
      $region109: #{forward.1} parent=5 // pred_check
        %p739 = pneg %p738
      $region110: #{forward.1} parent=5 // pred_check_branch
        %741 = sbr.rel (%p739) target = $region112
      $region111: #{forward.1} parent=5 // pred_region
        // Predicated region
        $region113: #{forward.1} parent=111 // pred_check
          %p742 = pneg %p55
        $region114: #{forward.1} parent=111 // pred_check_branch
          %744 = sbr.rel (%p742) target = $region116
        $region115: #{forward.1} parent=111 // pred_region
          %p745 = scmp.lt.s32.totalorder %s35, 1
          %s746 = scalar_select %p745, %s35, 1
          %s747 = smul.addr %s746, 2
          %s748 = smul.addr %s747, 8
          %s749 = scalar_lea.vmem %s0, %s748
        $region116: #{forward.1} parent=111 // pred_fallthru
          _
      $region112: #{forward.1} parent=5 // pred_fallthru
        _
      %p750 = scmp.le.s32.totalorder 1, %s35
      %p751 = scmp.lt.s32.totalorder %s35, 3
      %p752 = pnand %p750, %p751
      %p753 = pneg %p752
      // Predicated region
      $region117: #{forward.1} parent=5 // pred_check
        _
      $region118: #{forward.1} parent=5 // pred_check_branch
        %755 = sbr.rel (%p752) target = $region120
      $region119: #{forward.1} parent=5 // pred_region
        %s756 = ssub.s32 %s35, 1
        // Predicated region
        $region121: #{forward.1} parent=119 // pred_check
          %p757 = pneg %p124
        $region122: #{forward.1} parent=119 // pred_check_branch
          %759 = sbr.rel (%p757) target = $region124
        $region123: #{forward.1} parent=119 // pred_region
          %760 = dma.done [#allocation4], 9216
        $region124: #{forward.1} parent=119 // pred_fallthru
          _
        // Predicated region
        $region125: #{forward.1} parent=119 // pred_check
          %p761 = pneg %p208
        $region126: #{forward.1} parent=119 // pred_check_branch
          %763 = sbr.rel (%p761) target = $region128
        $region127: #{forward.1} parent=119 // pred_region
          %764 = dma.done [#allocation6], 9216
        $region128: #{forward.1} parent=119 // pred_fallthru
          _
        // Predicated region
        $region129: #{forward.1} parent=119 // pred_check
          %p765 = pneg %p292
        $region130: #{forward.1} parent=119 // pred_check_branch
          %767 = sbr.rel (%p765) target = $region132
        $region131: #{forward.1} parent=119 // pred_region
          %768 = dma.done [#allocation6], 9216
        $region132: #{forward.1} parent=119 // pred_fallthru
          _
        // Predicated region
        $region133: #{forward.1} parent=119 // pred_check
          %p769 = pneg %p376
        $region134: #{forward.1} parent=119 // pred_check_branch
          %771 = sbr.rel (%p769) target = $region136
        $region135: #{forward.1} parent=119 // pred_region
          %772 = dma.done [#allocation9], 9216
        $region136: #{forward.1} parent=119 // pred_fallthru
          _
        // Predicated region
        $region137: #{forward.1} parent=119 // pred_check
          %p773 = pneg %p418
        $region138: #{forward.1} parent=119 // pred_check_branch
          %775 = sbr.rel (%p773) target = $region140
        $region139: #{forward.1} parent=119 // pred_region
          %776 = dma.done [#allocation9], 2048
        $region140: #{forward.1} parent=119 // pred_fallthru
          _
        // Predicated region
        $region141: #{forward.1} parent=119 // pred_check
          %p777 = pneg %p544
        $region142: #{forward.1} parent=119 // pred_check_branch
          %779 = sbr.rel (%p777) target = $region144
        $region143: #{forward.1} parent=119 // pred_region
          %780 = dma.done [#allocation12], 6144
        $region144: #{forward.1} parent=119 // pred_fallthru
          _
        %p781 = scmp.lt.s32.totalorder %s40, 1
        %s782 = scalar_select %p781, %s40, 1
        %s783 = smul.addr %s782, 2
        %s784 = smul.addr %s783, 8
        %s785 = scalar_lea.vmem %s0, %s784
        %p786 = pneg %p61
        %p787 = pneg %p58
        %p788 = pneg %p82
        %p789 = pneg %p79
        %p790 = pneg %p103
        %p791 = pneg %p100
        %p792 = pneg %p124
        %p793 = pneg %p121
        %p794 = pneg %p145
        %p795 = pneg %p142
        %p796 = pneg %p166
        %p797 = pneg %p163
        %p798 = pneg %p187
        %p799 = pneg %p184
        %p800 = pneg %p208
        %p801 = pneg %p205
        %p802 = pneg %p229
        %p803 = pneg %p226
        %p804 = pneg %p250
        %p805 = pneg %p247
        %p806 = pneg %p271
        %p807 = pneg %p268
        %p808 = pneg %p292
        %p809 = pneg %p289
        %p810 = pneg %p313
        %p811 = pneg %p310
        %p812 = pneg %p334
        %p813 = pneg %p331
        %p814 = pneg %p355
        %p815 = pneg %p352
        %p816 = pneg %p376
        %p817 = pneg %p373
        %p818 = pneg %p397
        %p819 = pneg %p394
        %p820 = pneg %p418
        %p821 = pneg %p415
        %p822 = pneg %p439
        %p823 = pneg %p436
        %p824 = pneg %p460
        %p825 = pneg %p457
        %p826 = pneg %p481
        %p827 = pneg %p478
        %p828 = pneg %p502
        %p829 = pneg %p499
        %p830 = pneg %p523
        %p831 = pneg %p520
        %p832 = pneg %p544
        %p833 = pneg %p541
        %p834 = pneg %p565
        %p835 = pneg %p562
        %p836 = pneg %p591
        %p837 = pneg %p588
        %p838 = scmp.lt.s32.totalorder %s40, 1
        %s839 = scalar_select %p838, %s40, 1
        %s840 = smul.addr %s839, 2
        %s841 = smul.addr %s840, 8
        %s842 = scalar_lea.vmem %s25, %s841
        %p843 = scmp.lt.s32.totalorder %s40, 1
        %s844 = scalar_select %p843, %s40, 1
        %s845 = smul.addr %s844, 2
        %s846 = smul.addr %s845, 8
        %s847 = scalar_lea.vmem %s0, %s846
        %p848 = scmp.lt.s32.totalorder %s40, 1
        %s849 = scalar_select %p848, %s40, 1
        %s850 = smul.addr %s849, 2
        %s851 = smul.addr %s850, 8
        %s852 = scalar_lea.vmem %s25, %s851
        %v853 = vld [vmem:[%s847] sm:$0xff]
        %v854 = vld [vmem:[%s847 + $0x8] sm:$0xff]
        %v855 = vld [vmem:[%s1] sm:$0xff]
        %v856 = vld [vmem:[%s1 + $0x8] sm:$0xff]
        %v857 = vld [vmem:[%s1 + $0x10] sm:$0xff]
        %v858 = vld [vmem:[%s1 + $0x18] sm:$0xff]
        %v859 = vld [vmem:[%s1 + $0x20] sm:$0xff]
        %v860 = vld [vmem:[%s1 + $0x28] sm:$0xff]
        %v861 = vld [vmem:[%s1 + $0x30] sm:$0xff]
        %v862 = vld [vmem:[%s1 + $0x38] sm:$0xff]
        %v863 = vld [vmem:[%s1 + $0x40] sm:$0xff]
        %v864 = vld [vmem:[%s1 + $0x48] sm:$0xff]
        %v865 = vld [vmem:[%s1 + $0x50] sm:$0xff]
        %v866 = vld [vmem:[%s1 + $0x58] sm:$0xff]
        %v867 = vld [vmem:[%s1 + $0x60] sm:$0xff]
        %v868 = vld [vmem:[%s1 + $0x68] sm:$0xff]
        %v869 = vld [vmem:[%s1 + $0x70] sm:$0xff]
        %v870 = vld [vmem:[%s1 + $0x78] sm:$0xff]
        %v871 = vld [vmem:[%s2] sm:$0x1]
        %v873 = vlaneseq
        %v874 = vshrl.u32 %v873, 7
        %v875 = vsub.s32 0, %v874
        %v876 = vrot.slane %v871, %v875
        %878 = vmatprep.subr.mxu0 0.0
        %879 = vmatpush1.msra.mxu0 %v855
        %880 = vmatprep.subr.mxu0 0.0
        %881 = vmatpush1.msra.mxu0 %v856
        %882 = vmatprep.subr.mxu0 0.0
        %883 = vmatpush1.msra.mxu0 %v857
        %884 = vmatprep.subr.mxu0 0.0
        %885 = vmatpush1.msra.mxu0 %v858
        %886 = vmatprep.subr.mxu0 0.0
        %887 = vmatpush1.msra.mxu0 %v859
        %888 = vmatprep.subr.mxu0 0.0
        %889 = vmatpush1.msra.mxu0 %v860
        %890 = vmatprep.subr.mxu0 0.0
        %891 = vmatpush1.msra.mxu0 %v861
        %892 = vmatprep.subr.mxu0 0.0
        %893 = vmatpush1.msra.mxu0 %v862
        %894 = vmatprep.subr.mxu0 0.0
        %895 = vmatpush1.msra.mxu0 %v863
        %896 = vmatprep.subr.mxu0 0.0
        %897 = vmatpush1.msra.mxu0 %v864
        %898 = vmatprep.subr.mxu0 0.0
        %899 = vmatpush1.msra.mxu0 %v865
        %900 = vmatprep.subr.mxu0 0.0
        %901 = vmatpush1.msra.mxu0 %v866
        %902 = vmatprep.subr.mxu0 0.0
        %903 = vmatpush1.msra.mxu0 %v867
        %904 = vmatprep.subr.mxu0 0.0
        %905 = vmatpush1.msra.mxu0 %v868
        %906 = vmatprep.subr.mxu0 0.0
        %907 = vmatpush1.msra.mxu0 %v869
        %908 = vmatprep.subr.mxu0 0.0
        %909 = vmatpush1.msra.mxu0 %v870
        %910 = vmatprep.subr.mxu0 0.0
        %911 = vmatpush1.msra.mxu0 0.0
        %912 = vmatprep.subr.mxu0 0.0
        %913 = vmatpush1.msra.mxu0 0.0
        %914 = vmatprep.subr.mxu0 0.0
        %915 = vmatpush1.msra.mxu0 0.0
        %916 = vmatprep.subr.mxu0 0.0
        %917 = vmatpush1.msra.mxu0 0.0
        %918 = vmatprep.subr.mxu0 0.0
        %919 = vmatpush1.msra.mxu0 0.0
        %920 = vmatprep.subr.mxu0 0.0
        %921 = vmatpush1.msra.mxu0 0.0
        %922 = vmatprep.subr.mxu0 0.0
        %923 = vmatpush1.msra.mxu0 0.0
        %924 = vmatprep.subr.mxu0 0.0
        %925 = vmatpush1.msra.mxu0 0.0
        %926 = vmatprep.subr.mxu0 0.0
        %927 = vmatpush1.msra.mxu0 0.0
        %928 = vmatprep.subr.mxu0 0.0
        %929 = vmatpush1.msra.mxu0 0.0
        %930 = vmatprep.subr.mxu0 0.0
        %931 = vmatpush1.msra.mxu0 0.0
        %932 = vmatprep.subr.mxu0 0.0
        %933 = vmatpush1.msra.mxu0 0.0
        %934 = vmatprep.subr.mxu0 0.0
        %935 = vmatpush1.msra.mxu0 0.0
        %936 = vmatprep.subr.mxu0 0.0
        %937 = vmatpush1.msra.mxu0 0.0
        %938 = vmatprep.subr.mxu0 0.0
        %939 = vmatpush1.msra.mxu0 0.0
        %940 = vmatprep.subr.mxu0 0.0
        %941 = vmatpush1.msra.mxu0 0.0
        %942 = vmatprep.mubr.f32.mxu0 0.0
        %943 = vmatmul.mubr.f32.gmra.mrb[0].mxu0 %v853
        %v944 = vpop.f32.mrb[0].mxu0
        %v945 = vadd.f32 %v876, %v944
        %v946 = vpop.f32.mrb[0].mxu0
        %947 = vmatprep.mubr.f32.mxu0 0.0
        %948 = vmatmul.mubr.f32.gmra.mrb[0].mxu0 %v854
        %v949 = vpop.f32.mrb[0].mxu0
        %v950 = vadd.f32 %v876, %v949
        %v951 = vpop.f32.mrb[0].mxu0
        %952 = vdwg.mxu0
        %v953 = vmax.f32 %v945, 0.0
        %v954 = vmax.f32 %v950, 0.0
        %955 = vst [vmem:[#allocation2] sm:$0xff] 0.0
        %vm956 = vcmask 130048
        %957 = vst.msk [vmem:[#allocation2 + $0x8] sm:$0xff] %vm956, 0.0
        %958 = vst [vmem:[#allocation2 + $0x10] sm:$0xff] 0.0
        %959 = vst.msk [vmem:[#allocation2 + $0x18] sm:$0xff] %vm956, 0.0
        %960 = vst [vmem:[#allocation2 + $0x20] sm:$0x3] 0.0
        %vm961 = vcmask 123904
        %962 = vst.msk [vmem:[#allocation2 + $0x28] sm:$0x3] %vm961, 0.0
        %vm965 = vcmask 1040384
        %v966 = vrot.slane %v953, 7
        %v967 = vrot.slane %v954, 7
        %v968 = vsel %vm965, %v966, %v967
        %969 = vrot.lane.b32.xlu0 %v966, 4
        %v970 = vpop.permute.xlu0 %969
        %971 = vrot.lane.b32.xlu0 %v968, 4
        %v972 = vpop.permute.xlu0 %971
        %973 = vrot.lane.b32.xlu0 %v967, 4
        %v974 = vpop.permute.xlu0 %973
        %vm978 = vcmask 556065
        %979 = vst.msk [vmem:[#allocation2] sm:$0xfe] %vm978, %v970
        %vm980 = vcmask 556064
        %981 = vst.msk [vmem:[#allocation2 + $0x10] sm:$0xff] %vm980, %v972
        %vm982 = vcmask 548896
        %983 = vst.msk [vmem:[#allocation2 + $0x20] sm:$0x1] %vm982, %v974
        %v984 = vld [vmem:[#allocation2] sm:$0xff]
        %v985 = vld [vmem:[#allocation2 + $0x10] sm:$0xff]
        %v986 = vld [vmem:[#allocation2] sm:$0xfe]
        %v987 = vld [vmem:[#allocation2 + $0x20] sm:$0x1]
        %v988 = vld [vmem:[#allocation2] sm:$0xfc]
        %v989 = vld [vmem:[#allocation2 + $0x20] sm:$0x3]
        %992 = vrot.lane.b32.xlu0 %v984, 60
        %v993 = vpop.permute.xlu0 %992
        %994 = vrot.lane.b32.xlu0 %v985, 60
        %v995 = vpop.permute.xlu0 %994
        %998 = vrot.lane.b32.xlu0 %v984, 120
        %v999 = vpop.permute.xlu0 %998
        %1000 = vrot.lane.b32.xlu0 %v985, 120
        %v1001 = vpop.permute.xlu0 %1000
        %vm1006 = vcmask 1046528
        %v1007 = vrot.slane %v986, 1
        %v1008 = vrot.slane %v985, 1
        %v1009 = vsel %vm1006, %v1007, %v1008
        %v1010 = vrot.slane %v987, 1
        %v1011 = vsel %vm1006, %v1008, %v1010
        %1012 = vrot.lane.b32.xlu0 %v1009, 64
        %v1013 = vpop.permute.xlu0 %1012
        %1014 = vrot.lane.b32.xlu0 %v1011, 64
        %v1015 = vpop.permute.xlu0 %1014
        %1018 = vrot.lane.b32.xlu0 %v1009, 124
        %v1019 = vpop.permute.xlu0 %1018
        %1020 = vrot.lane.b32.xlu0 %v1011, 124
        %v1021 = vpop.permute.xlu0 %1020
        %1024 = vrot.lane.b32.xlu0 %v1009, 56
        %v1025 = vpop.permute.xlu0 %1024
        %1026 = vrot.lane.b32.xlu0 %v1011, 56
        %v1027 = vpop.permute.xlu0 %1026
        %vm1032 = vcmask 1045504
        %v1033 = vrot.slane %v988, 2
        %v1034 = vrot.slane %v985, 2
        %v1035 = vsel %vm1032, %v1033, %v1034
        %v1036 = vrot.slane %v989, 2
        %v1037 = vsel %vm1032, %v1034, %v1036
        %1040 = vrot.lane.b32.xlu0 %v1035, 60
        %v1041 = vpop.permute.xlu0 %1040
        %1042 = vrot.lane.b32.xlu0 %v1037, 60
        %v1043 = vpop.permute.xlu0 %1042
        %1046 = vrot.lane.b32.xlu0 %v1035, 120
        %v1047 = vpop.permute.xlu0 %1046
        %1048 = vrot.lane.b32.xlu0 %v1037, 120
        %v1049 = vpop.permute.xlu0 %1048
        %vm1050 = vcmask 523264
        %v1051 = vsel %vm1050, %v984, %v993
        %v1052 = vsel %vm1050, %v985, %v995
        %v1053 = vsel %vm1050, %v999, %v1013
        %v1054 = vsel %vm1050, %v1001, %v1015
        %v1055 = vsel %vm1050, %v1019, %v1025
        %v1056 = vsel %vm1050, %v1021, %v1027
        %v1057 = vsel %vm1050, %v1035, %v1041
        %v1058 = vsel %vm1050, %v1037, %v1043
        %v1059 = vld [vmem:[#allocation3] sm:$0xff]
        %v1060 = vld [vmem:[#allocation3 + $0x8] sm:$0xff]
        %v1061 = vld [vmem:[#allocation3 + $0x10] sm:$0xff]
        %v1062 = vld [vmem:[#allocation3 + $0x18] sm:$0xff]
        %v1063 = vld [vmem:[#allocation3 + $0x20] sm:$0xff]
        %v1064 = vld [vmem:[#allocation3 + $0x28] sm:$0xff]
        %v1065 = vld [vmem:[#allocation3 + $0x30] sm:$0xff]
        %v1066 = vld [vmem:[#allocation3 + $0x38] sm:$0xff]
        %v1067 = vld [vmem:[#allocation3 + $0x40] sm:$0xff]
        %v1068 = vld [vmem:[#allocation3 + $0x48] sm:$0xff]
        %v1069 = vld [vmem:[#allocation3 + $0x50] sm:$0xff]
        %v1070 = vld [vmem:[#allocation3 + $0x58] sm:$0xff]
        %v1071 = vld [vmem:[#allocation3 + $0x60] sm:$0xff]
        %v1072 = vld [vmem:[#allocation3 + $0x68] sm:$0xff]
        %v1073 = vld [vmem:[#allocation3 + $0x70] sm:$0xff]
        %v1074 = vld [vmem:[#allocation3 + $0x78] sm:$0xff]
        %v1075 = vld [vmem:[#allocation3 + $0x80] sm:$0xff]
        %v1076 = vld [vmem:[#allocation3 + $0x88] sm:$0xff]
        %v1077 = vld [vmem:[#allocation3 + $0x90] sm:$0xff]
        %v1078 = vld [vmem:[#allocation3 + $0x98] sm:$0xff]
        %v1079 = vld [vmem:[#allocation3 + $0xa0] sm:$0xff]
        %v1080 = vld [vmem:[#allocation3 + $0xa8] sm:$0xff]
        %v1081 = vld [vmem:[#allocation3 + $0xb0] sm:$0xff]
        %v1082 = vld [vmem:[#allocation3 + $0xb8] sm:$0xff]
        %v1083 = vld [vmem:[#allocation3 + $0xc0] sm:$0xff]
        %v1084 = vld [vmem:[#allocation3 + $0xc8] sm:$0xff]
        %v1085 = vld [vmem:[#allocation3 + $0xd0] sm:$0xff]
        %v1086 = vld [vmem:[#allocation3 + $0xd8] sm:$0xff]
        %v1087 = vld [vmem:[#allocation3 + $0xe0] sm:$0xff]
        %v1088 = vld [vmem:[#allocation3 + $0xe8] sm:$0xff]
        %v1089 = vld [vmem:[#allocation3 + $0xf0] sm:$0xff]
        %v1090 = vld [vmem:[#allocation3 + $0xf8] sm:$0xff]
        %v1091 = vld [vmem:[#allocation3 + $0x100] sm:$0xff]
        %v1092 = vld [vmem:[#allocation3 + $0x108] sm:$0xff]
        %v1093 = vld [vmem:[#allocation3 + $0x110] sm:$0xff]
        %v1094 = vld [vmem:[#allocation3 + $0x118] sm:$0xff]
        %v1095 = vld [vmem:[#allocation3 + $0x120] sm:$0xff]
        %v1096 = vld [vmem:[#allocation3 + $0x128] sm:$0xff]
        %v1097 = vld [vmem:[#allocation3 + $0x130] sm:$0xff]
        %v1098 = vld [vmem:[#allocation3 + $0x138] sm:$0xff]
        %v1099 = vld [vmem:[#allocation3 + $0x140] sm:$0xff]
        %v1100 = vld [vmem:[#allocation3 + $0x148] sm:$0xff]
        %v1101 = vld [vmem:[#allocation3 + $0x150] sm:$0xff]
        %v1102 = vld [vmem:[#allocation3 + $0x158] sm:$0xff]
        %v1103 = vld [vmem:[#allocation3 + $0x160] sm:$0xff]
        %v1104 = vld [vmem:[#allocation3 + $0x168] sm:$0xff]
        %v1105 = vld [vmem:[#allocation3 + $0x170] sm:$0xff]
        %v1106 = vld [vmem:[#allocation3 + $0x178] sm:$0xff]
        %v1107 = vld [vmem:[#allocation3 + $0x180] sm:$0xff]
        %v1108 = vld [vmem:[#allocation3 + $0x188] sm:$0xff]
        %v1109 = vld [vmem:[#allocation3 + $0x190] sm:$0xff]
        %v1110 = vld [vmem:[#allocation3 + $0x198] sm:$0xff]
        %v1111 = vld [vmem:[#allocation3 + $0x1a0] sm:$0xff]
        %v1112 = vld [vmem:[#allocation3 + $0x1a8] sm:$0xff]
        %v1113 = vld [vmem:[#allocation3 + $0x1b0] sm:$0xff]
        %v1114 = vld [vmem:[#allocation3 + $0x1b8] sm:$0xff]
        %v1115 = vld [vmem:[#allocation3 + $0x1c0] sm:$0xff]
        %v1116 = vld [vmem:[#allocation3 + $0x1c8] sm:$0xff]
        %v1117 = vld [vmem:[#allocation3 + $0x1d0] sm:$0xff]
        %v1118 = vld [vmem:[#allocation3 + $0x1d8] sm:$0xff]
        %v1119 = vld [vmem:[#allocation3 + $0x1e0] sm:$0xff]
        %v1120 = vld [vmem:[#allocation3 + $0x1e8] sm:$0xff]
        %v1121 = vld [vmem:[#allocation3 + $0x1f0] sm:$0xff]
        %v1122 = vld [vmem:[#allocation3 + $0x1f8] sm:$0xff]
        %v1123 = vld [vmem:[#allocation3 + $0x200] sm:$0xff]
        %v1124 = vld [vmem:[#allocation3 + $0x208] sm:$0xff]
        %v1125 = vld [vmem:[#allocation3 + $0x210] sm:$0xff]
        %v1126 = vld [vmem:[#allocation3 + $0x218] sm:$0xff]
        %v1127 = vld [vmem:[#allocation3 + $0x220] sm:$0xff]
        %v1128 = vld [vmem:[#allocation3 + $0x228] sm:$0xff]
        %v1129 = vld [vmem:[#allocation3 + $0x230] sm:$0xff]
        %v1130 = vld [vmem:[#allocation3 + $0x238] sm:$0xff]
        %v1131 = vld [vmem:[%s4] sm:$0x1]
        %v1133 = vlaneseq
        %v1134 = vshrl.u32 %v1133, 7
        %v1135 = vsub.s32 0, %v1134
        %v1136 = vrot.slane %v1131, %v1135
        %v1138 = vsel %vm1050, %v1047, 0
        %v1140 = vsel %vm1050, %v1049, 0
        %1142 = vmatprep.subr.mxu0 0.0
        %1143 = vmatpush1.msra.mxu0 %v1059
        %1144 = vmatprep.subr.mxu0 0.0
        %1145 = vmatpush1.msra.mxu0 %v1060
        %1146 = vmatprep.subr.mxu0 0.0
        %1147 = vmatpush1.msra.mxu0 %v1061
        %1148 = vmatprep.subr.mxu0 0.0
        %1149 = vmatpush1.msra.mxu0 %v1062
        %1150 = vmatprep.subr.mxu0 0.0
        %1151 = vmatpush1.msra.mxu0 %v1063
        %1152 = vmatprep.subr.mxu0 0.0
        %1153 = vmatpush1.msra.mxu0 %v1064
        %1154 = vmatprep.subr.mxu0 0.0
        %1155 = vmatpush1.msra.mxu0 %v1065
        %1156 = vmatprep.subr.mxu0 0.0
        %1157 = vmatpush1.msra.mxu0 %v1066
        %1158 = vmatprep.subr.mxu0 0.0
        %1159 = vmatpush1.msra.mxu0 %v1067
        %1160 = vmatprep.subr.mxu0 0.0
        %1161 = vmatpush1.msra.mxu0 %v1068
        %1162 = vmatprep.subr.mxu0 0.0
        %1163 = vmatpush1.msra.mxu0 %v1069
        %1164 = vmatprep.subr.mxu0 0.0
        %1165 = vmatpush1.msra.mxu0 %v1070
        %1166 = vmatprep.subr.mxu0 0.0
        %1167 = vmatpush1.msra.mxu0 %v1071
        %1168 = vmatprep.subr.mxu0 0.0
        %1169 = vmatpush1.msra.mxu0 %v1072
        %1170 = vmatprep.subr.mxu0 0.0
        %1171 = vmatpush1.msra.mxu0 %v1073
        %1172 = vmatprep.subr.mxu0 0.0
        %1173 = vmatpush1.msra.mxu0 %v1074
        %1174 = vmatprep.subr.mxu0 0.0
        %1175 = vmatpush1.msra.mxu0 %v1075
        %1176 = vmatprep.subr.mxu0 0.0
        %1177 = vmatpush1.msra.mxu0 %v1076
        %1178 = vmatprep.subr.mxu0 0.0
        %1179 = vmatpush1.msra.mxu0 %v1077
        %1180 = vmatprep.subr.mxu0 0.0
        %1181 = vmatpush1.msra.mxu0 %v1078
        %1182 = vmatprep.subr.mxu0 0.0
        %1183 = vmatpush1.msra.mxu0 %v1079
        %1184 = vmatprep.subr.mxu0 0.0
        %1185 = vmatpush1.msra.mxu0 %v1080
        %1186 = vmatprep.subr.mxu0 0.0
        %1187 = vmatpush1.msra.mxu0 %v1081
        %1188 = vmatprep.subr.mxu0 0.0
        %1189 = vmatpush1.msra.mxu0 %v1082
        %1190 = vmatprep.subr.mxu0 0.0
        %1191 = vmatpush1.msra.mxu0 %v1083
        %1192 = vmatprep.subr.mxu0 0.0
        %1193 = vmatpush1.msra.mxu0 %v1084
        %1194 = vmatprep.subr.mxu0 0.0
        %1195 = vmatpush1.msra.mxu0 %v1085
        %1196 = vmatprep.subr.mxu0 0.0
        %1197 = vmatpush1.msra.mxu0 %v1086
        %1198 = vmatprep.subr.mxu0 0.0
        %1199 = vmatpush1.msra.mxu0 %v1087
        %1200 = vmatprep.subr.mxu0 0.0
        %1201 = vmatpush1.msra.mxu0 %v1088
        %1202 = vmatprep.subr.mxu0 0.0
        %1203 = vmatpush1.msra.mxu0 %v1089
        %1204 = vmatprep.subr.mxu0 0.0
        %1205 = vmatpush1.msra.mxu0 %v1090
        %1206 = vmatprep.mubr.f32.mxu0 %v1053
        %1207 = vmatmul.mubr.f32.gmra.mrb[0].mxu0 %v1051
        %v1208 = vpop.f32.mrb[0].mxu0
        %v1209 = vadd.f32 %v1136, %v1208
        %v1210 = vpop.f32.mrb[0].mxu0
        %1211 = vmatprep.mubr.f32.mxu0 %v1054
        %1212 = vmatmul.mubr.f32.gmra.mrb[0].mxu0 %v1052
        %v1213 = vpop.f32.mrb[0].mxu0
        %v1214 = vadd.f32 %v1136, %v1213
        %v1215 = vpop.f32.mrb[0].mxu0
        %1216 = vdwg.mxu0
        %1217 = vmatprep.subr.mxu0 0.0
        %1218 = vmatpush1.msra.mxu0 %v1091
        %1219 = vmatprep.subr.mxu0 0.0
        %1220 = vmatpush1.msra.mxu0 %v1092
        %1221 = vmatprep.subr.mxu0 0.0
        %1222 = vmatpush1.msra.mxu0 %v1093
        %1223 = vmatprep.subr.mxu0 0.0
        %1224 = vmatpush1.msra.mxu0 %v1094
        %1225 = vmatprep.subr.mxu0 0.0
        %1226 = vmatpush1.msra.mxu0 %v1095
        %1227 = vmatprep.subr.mxu0 0.0
        %1228 = vmatpush1.msra.mxu0 %v1096
        %1229 = vmatprep.subr.mxu0 0.0
        %1230 = vmatpush1.msra.mxu0 %v1097
        %1231 = vmatprep.subr.mxu0 0.0
        %1232 = vmatpush1.msra.mxu0 %v1098
        %1233 = vmatprep.subr.mxu0 0.0
        %1234 = vmatpush1.msra.mxu0 %v1099
        %1235 = vmatprep.subr.mxu0 0.0
        %1236 = vmatpush1.msra.mxu0 %v1100
        %1237 = vmatprep.subr.mxu0 0.0
        %1238 = vmatpush1.msra.mxu0 %v1101
        %1239 = vmatprep.subr.mxu0 0.0
        %1240 = vmatpush1.msra.mxu0 %v1102
        %1241 = vmatprep.subr.mxu0 0.0
        %1242 = vmatpush1.msra.mxu0 %v1103
        %1243 = vmatprep.subr.mxu0 0.0
        %1244 = vmatpush1.msra.mxu0 %v1104
        %1245 = vmatprep.subr.mxu0 0.0
        %1246 = vmatpush1.msra.mxu0 %v1105
        %1247 = vmatprep.subr.mxu0 0.0
        %1248 = vmatpush1.msra.mxu0 %v1106
        %1249 = vmatprep.subr.mxu0 0.0
        %1250 = vmatpush1.msra.mxu0 %v1107
        %1251 = vmatprep.subr.mxu0 0.0
        %1252 = vmatpush1.msra.mxu0 %v1108
        %1253 = vmatprep.subr.mxu0 0.0
        %1254 = vmatpush1.msra.mxu0 %v1109
        %1255 = vmatprep.subr.mxu0 0.0
        %1256 = vmatpush1.msra.mxu0 %v1110
        %1257 = vmatprep.subr.mxu0 0.0
        %1258 = vmatpush1.msra.mxu0 %v1111
        %1259 = vmatprep.subr.mxu0 0.0
        %1260 = vmatpush1.msra.mxu0 %v1112
        %1261 = vmatprep.subr.mxu0 0.0
        %1262 = vmatpush1.msra.mxu0 %v1113
        %1263 = vmatprep.subr.mxu0 0.0
        %1264 = vmatpush1.msra.mxu0 %v1114
        %1265 = vmatprep.subr.mxu0 0.0
        %1266 = vmatpush1.msra.mxu0 %v1115
        %1267 = vmatprep.subr.mxu0 0.0
        %1268 = vmatpush1.msra.mxu0 %v1116
        %1269 = vmatprep.subr.mxu0 0.0
        %1270 = vmatpush1.msra.mxu0 %v1117
        %1271 = vmatprep.subr.mxu0 0.0
        %1272 = vmatpush1.msra.mxu0 %v1118
        %1273 = vmatprep.subr.mxu0 0.0
        %1274 = vmatpush1.msra.mxu0 %v1119
        %1275 = vmatprep.subr.mxu0 0.0
        %1276 = vmatpush1.msra.mxu0 %v1120
        %1277 = vmatprep.subr.mxu0 0.0
        %1278 = vmatpush1.msra.mxu0 %v1121
        %1279 = vmatprep.subr.mxu0 0.0
        %1280 = vmatpush1.msra.mxu0 %v1122
        %1281 = vmatprep.mubr.f32.mxu0 %v1057
        %1282 = vmatmul.mubr.f32.gmra.mrb[0].mxu0 %v1055
        %v1283 = vpop.f32.mrb[0].mxu0
        %v1284 = vadd.f32 %v1209, %v1283
        %v1285 = vpop.f32.mrb[0].mxu0
        %1286 = vmatprep.mubr.f32.mxu0 %v1058
        %1287 = vmatmul.mubr.f32.gmra.mrb[0].mxu0 %v1056
        %v1288 = vpop.f32.mrb[0].mxu0
        %v1289 = vadd.f32 %v1214, %v1288
        %v1290 = vpop.f32.mrb[0].mxu0
        %1291 = vdwg.mxu0
        %1292 = vmatprep.subr.mxu0 0.0
        %1293 = vmatpush1.msra.mxu0 %v1123
        %1294 = vmatprep.subr.mxu0 0.0
        %1295 = vmatpush1.msra.mxu0 %v1124
        %1296 = vmatprep.subr.mxu0 0.0
        %1297 = vmatpush1.msra.mxu0 %v1125
        %1298 = vmatprep.subr.mxu0 0.0
        %1299 = vmatpush1.msra.mxu0 %v1126
        %1300 = vmatprep.subr.mxu0 0.0
        %1301 = vmatpush1.msra.mxu0 %v1127
        %1302 = vmatprep.subr.mxu0 0.0
        %1303 = vmatpush1.msra.mxu0 %v1128
        %1304 = vmatprep.subr.mxu0 0.0
        %1305 = vmatpush1.msra.mxu0 %v1129
        %1306 = vmatprep.subr.mxu0 0.0
        %1307 = vmatpush1.msra.mxu0 %v1130
        %1308 = vmatprep.subr.mxu0 0.0
        %1309 = vmatpush1.msra.mxu0 0.0
        %1310 = vmatprep.subr.mxu0 0.0
        %1311 = vmatpush1.msra.mxu0 0.0
        %1312 = vmatprep.subr.mxu0 0.0
        %1313 = vmatpush1.msra.mxu0 0.0
        %1314 = vmatprep.subr.mxu0 0.0
        %1315 = vmatpush1.msra.mxu0 0.0
        %1316 = vmatprep.subr.mxu0 0.0
        %1317 = vmatpush1.msra.mxu0 0.0
        %1318 = vmatprep.subr.mxu0 0.0
        %1319 = vmatpush1.msra.mxu0 0.0
        %1320 = vmatprep.subr.mxu0 0.0
        %1321 = vmatpush1.msra.mxu0 0.0
        %1322 = vmatprep.subr.mxu0 0.0
        %1323 = vmatpush1.msra.mxu0 0.0
        %1324 = vmatprep.subr.mxu0 0.0
        %1325 = vmatpush1.msra.mxu0 0.0
        %1326 = vmatprep.subr.mxu0 0.0
        %1327 = vmatpush1.msra.mxu0 0.0
        %1328 = vmatprep.subr.mxu0 0.0
        %1329 = vmatpush1.msra.mxu0 0.0
        %1330 = vmatprep.subr.mxu0 0.0
        %1331 = vmatpush1.msra.mxu0 0.0
        %1332 = vmatprep.subr.mxu0 0.0
        %1333 = vmatpush1.msra.mxu0 0.0
        %1334 = vmatprep.subr.mxu0 0.0
        %1335 = vmatpush1.msra.mxu0 0.0
        %1336 = vmatprep.subr.mxu0 0.0
        %1337 = vmatpush1.msra.mxu0 0.0
        %1338 = vmatprep.subr.mxu0 0.0
        %1339 = vmatpush1.msra.mxu0 0.0
        %1340 = vmatprep.subr.mxu0 0.0
        %1341 = vmatpush1.msra.mxu0 0.0
        %1342 = vmatprep.subr.mxu0 0.0
        %1343 = vmatpush1.msra.mxu0 0.0
        %1344 = vmatprep.subr.mxu0 0.0
        %1345 = vmatpush1.msra.mxu0 0.0
        %1346 = vmatprep.subr.mxu0 0.0
        %1347 = vmatpush1.msra.mxu0 0.0
        %1348 = vmatprep.subr.mxu0 0.0
        %1349 = vmatpush1.msra.mxu0 0.0
        %1350 = vmatprep.subr.mxu0 0.0
        %1351 = vmatpush1.msra.mxu0 0.0
        %1352 = vmatprep.subr.mxu0 0.0
        %1353 = vmatpush1.msra.mxu0 0.0
        %1354 = vmatprep.subr.mxu0 0.0
        %1355 = vmatpush1.msra.mxu0 0.0
        %1356 = vmatprep.mubr.f32.mxu0 0.0
        %1357 = vmatmul.mubr.f32.gmra.mrb[0].mxu0 %v1138
        %v1358 = vpop.f32.mrb[0].mxu0
        %v1359 = vadd.f32 %v1284, %v1358
        %v1360 = vpop.f32.mrb[0].mxu0
        %1361 = vmatprep.mubr.f32.mxu0 0.0
        %1362 = vmatmul.mubr.f32.gmra.mrb[0].mxu0 %v1140
        %v1363 = vpop.f32.mrb[0].mxu0
        %v1364 = vadd.f32 %v1289, %v1363
        %v1365 = vpop.f32.mrb[0].mxu0
        %1366 = vdwg.mxu0
        %v1367 = vmax.f32 %v1359, 0.0
        %v1368 = vmax.f32 %v1364, 0.0
        %v1369 = vld [vmem:[%s5] sm:$0xff]
        %v1370 = vld [vmem:[%s5 + $0x8] sm:$0xff]
        %v1371 = vld [vmem:[%s5 + $0x10] sm:$0xff]
        %v1372 = vld [vmem:[%s5 + $0x18] sm:$0xff]
        %v1373 = vld [vmem:[%s5 + $0x20] sm:$0xff]
        %v1374 = vld [vmem:[%s5 + $0x28] sm:$0xff]
        %v1375 = vld [vmem:[%s5 + $0x30] sm:$0xff]
        %v1376 = vld [vmem:[%s5 + $0x38] sm:$0xff]
        %v1377 = vld [vmem:[%s5 + $0x40] sm:$0xff]
        %v1378 = vld [vmem:[%s5 + $0x48] sm:$0xff]
        %v1379 = vld [vmem:[%s5 + $0x50] sm:$0xff]
        %v1380 = vld [vmem:[%s5 + $0x58] sm:$0xff]
        %v1381 = vld [vmem:[%s5 + $0x60] sm:$0xff]
        %v1382 = vld [vmem:[%s5 + $0x68] sm:$0xff]
        %v1383 = vld [vmem:[%s5 + $0x70] sm:$0xff]
        %v1384 = vld [vmem:[%s5 + $0x78] sm:$0xff]
        %v1385 = vld [vmem:[%s6] sm:$0x1]
        %v1387 = vlaneseq
        %v1388 = vshrl.u32 %v1387, 7
        %v1389 = vsub.s32 0, %v1388
        %v1390 = vrot.slane %v1385, %v1389
        %1392 = vmatprep.subr.mxu0 0.0
        %1393 = vmatpush1.msra.mxu0 %v1369
        %1394 = vmatprep.subr.mxu0 0.0
        %1395 = vmatpush1.msra.mxu0 %v1370
        %1396 = vmatprep.subr.mxu0 0.0
        %1397 = vmatpush1.msra.mxu0 %v1371
        %1398 = vmatprep.subr.mxu0 0.0
        %1399 = vmatpush1.msra.mxu0 %v1372
        %1400 = vmatprep.subr.mxu0 0.0
        %1401 = vmatpush1.msra.mxu0 %v1373
        %1402 = vmatprep.subr.mxu0 0.0
        %1403 = vmatpush1.msra.mxu0 %v1374
        %1404 = vmatprep.subr.mxu0 0.0
        %1405 = vmatpush1.msra.mxu0 %v1375
        %1406 = vmatprep.subr.mxu0 0.0
        %1407 = vmatpush1.msra.mxu0 %v1376
        %1408 = vmatprep.subr.mxu0 0.0
        %1409 = vmatpush1.msra.mxu0 %v1377
        %1410 = vmatprep.subr.mxu0 0.0
        %1411 = vmatpush1.msra.mxu0 %v1378
        %1412 = vmatprep.subr.mxu0 0.0
        %1413 = vmatpush1.msra.mxu0 %v1379
        %1414 = vmatprep.subr.mxu0 0.0
        %1415 = vmatpush1.msra.mxu0 %v1380
        %1416 = vmatprep.subr.mxu0 0.0
        %1417 = vmatpush1.msra.mxu0 %v1381
        %1418 = vmatprep.subr.mxu0 0.0
        %1419 = vmatpush1.msra.mxu0 %v1382
        %1420 = vmatprep.subr.mxu0 0.0
        %1421 = vmatpush1.msra.mxu0 %v1383
        %1422 = vmatprep.subr.mxu0 0.0
        %1423 = vmatpush1.msra.mxu0 %v1384
        %1424 = vmatprep.subr.mxu0 0.0
        %1425 = vmatpush1.msra.mxu0 0.0
        %1426 = vmatprep.subr.mxu0 0.0
        %1427 = vmatpush1.msra.mxu0 0.0
        %1428 = vmatprep.subr.mxu0 0.0
        %1429 = vmatpush1.msra.mxu0 0.0
        %1430 = vmatprep.subr.mxu0 0.0
        %1431 = vmatpush1.msra.mxu0 0.0
        %1432 = vmatprep.subr.mxu0 0.0
        %1433 = vmatpush1.msra.mxu0 0.0
        %1434 = vmatprep.subr.mxu0 0.0
        %1435 = vmatpush1.msra.mxu0 0.0
        %1436 = vmatprep.subr.mxu0 0.0
        %1437 = vmatpush1.msra.mxu0 0.0
        %1438 = vmatprep.subr.mxu0 0.0
        %1439 = vmatpush1.msra.mxu0 0.0
        %1440 = vmatprep.subr.mxu0 0.0
        %1441 = vmatpush1.msra.mxu0 0.0
        %1442 = vmatprep.subr.mxu0 0.0
        %1443 = vmatpush1.msra.mxu0 0.0
        %1444 = vmatprep.subr.mxu0 0.0
        %1445 = vmatpush1.msra.mxu0 0.0
        %1446 = vmatprep.subr.mxu0 0.0
        %1447 = vmatpush1.msra.mxu0 0.0
        %1448 = vmatprep.subr.mxu0 0.0
        %1449 = vmatpush1.msra.mxu0 0.0
        %1450 = vmatprep.subr.mxu0 0.0
        %1451 = vmatpush1.msra.mxu0 0.0
        %1452 = vmatprep.subr.mxu0 0.0
        %1453 = vmatpush1.msra.mxu0 0.0
        %1454 = vmatprep.subr.mxu0 0.0
        %1455 = vmatpush1.msra.mxu0 0.0
        %1456 = vmatprep.mubr.f32.mxu0 0.0
        %1457 = vmatmul.mubr.f32.gmra.mrb[0].mxu0 %v1367
        %v1458 = vpop.f32.mrb[0].mxu0
        %v1459 = vadd.f32 %v1390, %v1458
        %v1460 = vpop.f32.mrb[0].mxu0
        %1461 = vmatprep.mubr.f32.mxu0 0.0
        %1462 = vmatmul.mubr.f32.gmra.mrb[0].mxu0 %v1368
        %v1463 = vpop.f32.mrb[0].mxu0
        %v1464 = vadd.f32 %v1390, %v1463
        %v1465 = vpop.f32.mrb[0].mxu0
        %1466 = vdwg.mxu0
        %v1467 = vmax.f32 %v1459, 0.0
        %v1468 = vmax.f32 %v1464, 0.0
        %1469 = vst [vmem:[#allocation2] sm:$0xff] 0.0
        %1470 = vst.msk [vmem:[#allocation2 + $0x8] sm:$0xff] %vm956, 0.0
        %1471 = vst [vmem:[#allocation2 + $0x10] sm:$0xff] 0.0
        %1472 = vst.msk [vmem:[#allocation2 + $0x18] sm:$0xff] %vm956, 0.0
        %1473 = vst [vmem:[#allocation2 + $0x20] sm:$0x3] 0.0
        %1474 = vst.msk [vmem:[#allocation2 + $0x28] sm:$0x3] %vm961, 0.0
        %v1477 = vrot.slane %v1467, 7
        %v1478 = vrot.slane %v1468, 7
        %v1479 = vsel %vm965, %v1477, %v1478
        %1480 = vrot.lane.b32.xlu0 %v1477, 4
        %v1481 = vpop.permute.xlu0 %1480
        %1482 = vrot.lane.b32.xlu0 %v1479, 4
        %v1483 = vpop.permute.xlu0 %1482
        %1484 = vrot.lane.b32.xlu0 %v1478, 4
        %v1485 = vpop.permute.xlu0 %1484
        %1489 = vst.msk [vmem:[#allocation2] sm:$0xfe] %vm978, %v1481
        %1490 = vst.msk [vmem:[#allocation2 + $0x10] sm:$0xff] %vm980, %v1483
        %1491 = vst.msk [vmem:[#allocation2 + $0x20] sm:$0x1] %vm982, %v1485
        %v1492 = vld [vmem:[#allocation2] sm:$0xff]
        %v1493 = vld [vmem:[#allocation2 + $0x10] sm:$0xff]
        %v1494 = vld [vmem:[#allocation2] sm:$0xfe]
        %v1495 = vld [vmem:[#allocation2 + $0x20] sm:$0x1]
        %v1496 = vld [vmem:[#allocation2] sm:$0xfc]
        %v1497 = vld [vmem:[#allocation2 + $0x20] sm:$0x3]
        %1500 = vrot.lane.b32.xlu0 %v1492, 60
        %v1501 = vpop.permute.xlu0 %1500
        %1502 = vrot.lane.b32.xlu0 %v1493, 60
        %v1503 = vpop.permute.xlu0 %1502
        %1506 = vrot.lane.b32.xlu0 %v1492, 120
        %v1507 = vpop.permute.xlu0 %1506
        %1508 = vrot.lane.b32.xlu0 %v1493, 120
        %v1509 = vpop.permute.xlu0 %1508
        %v1514 = vrot.slane %v1494, 1
        %v1515 = vrot.slane %v1493, 1
        %v1516 = vsel %vm1006, %v1514, %v1515
        %v1517 = vrot.slane %v1495, 1
        %v1518 = vsel %vm1006, %v1515, %v1517
        %1519 = vrot.lane.b32.xlu0 %v1516, 64
        %v1520 = vpop.permute.xlu0 %1519
        %1521 = vrot.lane.b32.xlu0 %v1518, 64
        %v1522 = vpop.permute.xlu0 %1521
        %1525 = vrot.lane.b32.xlu0 %v1516, 124
        %v1526 = vpop.permute.xlu0 %1525
        %1527 = vrot.lane.b32.xlu0 %v1518, 124
        %v1528 = vpop.permute.xlu0 %1527
        %1531 = vrot.lane.b32.xlu0 %v1516, 56
        %v1532 = vpop.permute.xlu0 %1531
        %1533 = vrot.lane.b32.xlu0 %v1518, 56
        %v1534 = vpop.permute.xlu0 %1533
        %v1539 = vrot.slane %v1496, 2
        %v1540 = vrot.slane %v1493, 2
        %v1541 = vsel %vm1032, %v1539, %v1540
        %v1542 = vrot.slane %v1497, 2
        %v1543 = vsel %vm1032, %v1540, %v1542
        %1546 = vrot.lane.b32.xlu0 %v1541, 60
        %v1547 = vpop.permute.xlu0 %1546
        %1548 = vrot.lane.b32.xlu0 %v1543, 60
        %v1549 = vpop.permute.xlu0 %1548
        %1552 = vrot.lane.b32.xlu0 %v1541, 120
        %v1553 = vpop.permute.xlu0 %1552
        %1554 = vrot.lane.b32.xlu0 %v1543, 120
        %v1555 = vpop.permute.xlu0 %1554
        %v1556 = vsel %vm1050, %v1492, %v1501
        %v1557 = vsel %vm1050, %v1493, %v1503
        %v1558 = vsel %vm1050, %v1507, %v1520
        %v1559 = vsel %vm1050, %v1509, %v1522
        %v1560 = vsel %vm1050, %v1526, %v1532
        %v1561 = vsel %vm1050, %v1528, %v1534
        %v1562 = vsel %vm1050, %v1541, %v1547
        %v1563 = vsel %vm1050, %v1543, %v1549
        %v1564 = vld [vmem:[#allocation5] sm:$0xff]
        %v1565 = vld [vmem:[#allocation5 + $0x8] sm:$0xff]
        %v1566 = vld [vmem:[#allocation5 + $0x10] sm:$0xff]
        %v1567 = vld [vmem:[#allocation5 + $0x18] sm:$0xff]
        %v1568 = vld [vmem:[#allocation5 + $0x20] sm:$0xff]
        %v1569 = vld [vmem:[#allocation5 + $0x28] sm:$0xff]
        %v1570 = vld [vmem:[#allocation5 + $0x30] sm:$0xff]
        %v1571 = vld [vmem:[#allocation5 + $0x38] sm:$0xff]
        %v1572 = vld [vmem:[#allocation5 + $0x40] sm:$0xff]
        %v1573 = vld [vmem:[#allocation5 + $0x48] sm:$0xff]
        %v1574 = vld [vmem:[#allocation5 + $0x50] sm:$0xff]
        %v1575 = vld [vmem:[#allocation5 + $0x58] sm:$0xff]
        %v1576 = vld [vmem:[#allocation5 + $0x60] sm:$0xff]
        %v1577 = vld [vmem:[#allocation5 + $0x68] sm:$0xff]
        %v1578 = vld [vmem:[#allocation5 + $0x70] sm:$0xff]
        %v1579 = vld [vmem:[#allocation5 + $0x78] sm:$0xff]
        %v1580 = vld [vmem:[#allocation5 + $0x80] sm:$0xff]
        %v1581 = vld [vmem:[#allocation5 + $0x88] sm:$0xff]
        %v1582 = vld [vmem:[#allocation5 + $0x90] sm:$0xff]
        %v1583 = vld [vmem:[#allocation5 + $0x98] sm:$0xff]
        %v1584 = vld [vmem:[#allocation5 + $0xa0] sm:$0xff]
        %v1585 = vld [vmem:[#allocation5 + $0xa8] sm:$0xff]
        %v1586 = vld [vmem:[#allocation5 + $0xb0] sm:$0xff]
        %v1587 = vld [vmem:[#allocation5 + $0xb8] sm:$0xff]
        %v1588 = vld [vmem:[#allocation5 + $0xc0] sm:$0xff]
        %v1589 = vld [vmem:[#allocation5 + $0xc8] sm:$0xff]
        %v1590 = vld [vmem:[#allocation5 + $0xd0] sm:$0xff]
        %v1591 = vld [vmem:[#allocation5 + $0xd8] sm:$0xff]
        %v1592 = vld [vmem:[#allocation5 + $0xe0] sm:$0xff]
        %v1593 = vld [vmem:[#allocation5 + $0xe8] sm:$0xff]
        %v1594 = vld [vmem:[#allocation5 + $0xf0] sm:$0xff]
        %v1595 = vld [vmem:[#allocation5 + $0xf8] sm:$0xff]
        %v1596 = vld [vmem:[#allocation5 + $0x100] sm:$0xff]
        %v1597 = vld [vmem:[#allocation5 + $0x108] sm:$0xff]
        %v1598 = vld [vmem:[#allocation5 + $0x110] sm:$0xff]
        %v1599 = vld [vmem:[#allocation5 + $0x118] sm:$0xff]
        %v1600 = vld [vmem:[#allocation5 + $0x120] sm:$0xff]
        %v1601 = vld [vmem:[#allocation5 + $0x128] sm:$0xff]
        %v1602 = vld [vmem:[#allocation5 + $0x130] sm:$0xff]
        %v1603 = vld [vmem:[#allocation5 + $0x138] sm:$0xff]
        %v1604 = vld [vmem:[#allocation5 + $0x140] sm:$0xff]
        %v1605 = vld [vmem:[#allocation5 + $0x148] sm:$0xff]
        %v1606 = vld [vmem:[#allocation5 + $0x150] sm:$0xff]
        %v1607 = vld [vmem:[#allocation5 + $0x158] sm:$0xff]
        %v1608 = vld [vmem:[#allocation5 + $0x160] sm:$0xff]
        %v1609 = vld [vmem:[#allocation5 + $0x168] sm:$0xff]
        %v1610 = vld [vmem:[#allocation5 + $0x170] sm:$0xff]
        %v1611 = vld [vmem:[#allocation5 + $0x178] sm:$0xff]
        %v1612 = vld [vmem:[#allocation5 + $0x180] sm:$0xff]
        %v1613 = vld [vmem:[#allocation5 + $0x188] sm:$0xff]
        %v1614 = vld [vmem:[#allocation5 + $0x190] sm:$0xff]
        %v1615 = vld [vmem:[#allocation5 + $0x198] sm:$0xff]
        %v1616 = vld [vmem:[#allocation5 + $0x1a0] sm:$0xff]
        %v1617 = vld [vmem:[#allocation5 + $0x1a8] sm:$0xff]
        %v1618 = vld [vmem:[#allocation5 + $0x1b0] sm:$0xff]
        %v1619 = vld [vmem:[#allocation5 + $0x1b8] sm:$0xff]
        %v1620 = vld [vmem:[#allocation5 + $0x1c0] sm:$0xff]
        %v1621 = vld [vmem:[#allocation5 + $0x1c8] sm:$0xff]
        %v1622 = vld [vmem:[#allocation5 + $0x1d0] sm:$0xff]
        %v1623 = vld [vmem:[#allocation5 + $0x1d8] sm:$0xff]
        %v1624 = vld [vmem:[#allocation5 + $0x1e0] sm:$0xff]
        %v1625 = vld [vmem:[#allocation5 + $0x1e8] sm:$0xff]
        %v1626 = vld [vmem:[#allocation5 + $0x1f0] sm:$0xff]
        %v1627 = vld [vmem:[#allocation5 + $0x1f8] sm:$0xff]
        %v1628 = vld [vmem:[#allocation5 + $0x200] sm:$0xff]
        %v1629 = vld [vmem:[#allocation5 + $0x208] sm:$0xff]
        %v1630 = vld [vmem:[#allocation5 + $0x210] sm:$0xff]
        %v1631 = vld [vmem:[#allocation5 + $0x218] sm:$0xff]
        %v1632 = vld [vmem:[#allocation5 + $0x220] sm:$0xff]
        %v1633 = vld [vmem:[#allocation5 + $0x228] sm:$0xff]
        %v1634 = vld [vmem:[#allocation5 + $0x230] sm:$0xff]
        %v1635 = vld [vmem:[#allocation5 + $0x238] sm:$0xff]
        %v1636 = vld [vmem:[%s8] sm:$0x1]
        %v1638 = vlaneseq
        %v1639 = vshrl.u32 %v1638, 7
        %v1640 = vsub.s32 0, %v1639
        %v1641 = vrot.slane %v1636, %v1640
        %v1643 = vsel %vm1050, %v1553, 0
        %v1645 = vsel %vm1050, %v1555, 0
        %1647 = vmatprep.subr.mxu0 0.0
        %1648 = vmatpush1.msra.mxu0 %v1564
        %1649 = vmatprep.subr.mxu0 0.0
        %1650 = vmatpush1.msra.mxu0 %v1565
        %1651 = vmatprep.subr.mxu0 0.0
        %1652 = vmatpush1.msra.mxu0 %v1566
        %1653 = vmatprep.subr.mxu0 0.0
        %1654 = vmatpush1.msra.mxu0 %v1567
        %1655 = vmatprep.subr.mxu0 0.0
        %1656 = vmatpush1.msra.mxu0 %v1568
        %1657 = vmatprep.subr.mxu0 0.0
        %1658 = vmatpush1.msra.mxu0 %v1569
        %1659 = vmatprep.subr.mxu0 0.0
        %1660 = vmatpush1.msra.mxu0 %v1570
        %1661 = vmatprep.subr.mxu0 0.0
        %1662 = vmatpush1.msra.mxu0 %v1571
        %1663 = vmatprep.subr.mxu0 0.0
        %1664 = vmatpush1.msra.mxu0 %v1572
        %1665 = vmatprep.subr.mxu0 0.0
        %1666 = vmatpush1.msra.mxu0 %v1573
        %1667 = vmatprep.subr.mxu0 0.0
        %1668 = vmatpush1.msra.mxu0 %v1574
        %1669 = vmatprep.subr.mxu0 0.0
        %1670 = vmatpush1.msra.mxu0 %v1575
        %1671 = vmatprep.subr.mxu0 0.0
        %1672 = vmatpush1.msra.mxu0 %v1576
        %1673 = vmatprep.subr.mxu0 0.0
        %1674 = vmatpush1.msra.mxu0 %v1577
        %1675 = vmatprep.subr.mxu0 0.0
        %1676 = vmatpush1.msra.mxu0 %v1578
        %1677 = vmatprep.subr.mxu0 0.0
        %1678 = vmatpush1.msra.mxu0 %v1579
        %1679 = vmatprep.subr.mxu0 0.0
        %1680 = vmatpush1.msra.mxu0 %v1580
        %1681 = vmatprep.subr.mxu0 0.0
        %1682 = vmatpush1.msra.mxu0 %v1581
        %1683 = vmatprep.subr.mxu0 0.0
        %1684 = vmatpush1.msra.mxu0 %v1582
        %1685 = vmatprep.subr.mxu0 0.0
        %1686 = vmatpush1.msra.mxu0 %v1583
        %1687 = vmatprep.subr.mxu0 0.0
        %1688 = vmatpush1.msra.mxu0 %v1584
        %1689 = vmatprep.subr.mxu0 0.0
        %1690 = vmatpush1.msra.mxu0 %v1585
        %1691 = vmatprep.subr.mxu0 0.0
        %1692 = vmatpush1.msra.mxu0 %v1586
        %1693 = vmatprep.subr.mxu0 0.0
        %1694 = vmatpush1.msra.mxu0 %v1587
        %1695 = vmatprep.subr.mxu0 0.0
        %1696 = vmatpush1.msra.mxu0 %v1588
        %1697 = vmatprep.subr.mxu0 0.0
        %1698 = vmatpush1.msra.mxu0 %v1589
        %1699 = vmatprep.subr.mxu0 0.0
        %1700 = vmatpush1.msra.mxu0 %v1590
        %1701 = vmatprep.subr.mxu0 0.0
        %1702 = vmatpush1.msra.mxu0 %v1591
        %1703 = vmatprep.subr.mxu0 0.0
        %1704 = vmatpush1.msra.mxu0 %v1592
        %1705 = vmatprep.subr.mxu0 0.0
        %1706 = vmatpush1.msra.mxu0 %v1593
        %1707 = vmatprep.subr.mxu0 0.0
        %1708 = vmatpush1.msra.mxu0 %v1594
        %1709 = vmatprep.subr.mxu0 0.0
        %1710 = vmatpush1.msra.mxu0 %v1595
        %1711 = vmatprep.mubr.f32.mxu0 %v1558
        %1712 = vmatmul.mubr.f32.gmra.mrb[0].mxu0 %v1556
        %v1713 = vpop.f32.mrb[0].mxu0
        %v1714 = vadd.f32 %v1641, %v1713
        %v1715 = vpop.f32.mrb[0].mxu0
        %1716 = vmatprep.mubr.f32.mxu0 %v1559
        %1717 = vmatmul.mubr.f32.gmra.mrb[0].mxu0 %v1557
        %v1718 = vpop.f32.mrb[0].mxu0
        %v1719 = vadd.f32 %v1641, %v1718
        %v1720 = vpop.f32.mrb[0].mxu0
        %1721 = vdwg.mxu0
        %1722 = vmatprep.subr.mxu0 0.0
        %1723 = vmatpush1.msra.mxu0 %v1596
        %1724 = vmatprep.subr.mxu0 0.0
        %1725 = vmatpush1.msra.mxu0 %v1597
        %1726 = vmatprep.subr.mxu0 0.0
        %1727 = vmatpush1.msra.mxu0 %v1598
        %1728 = vmatprep.subr.mxu0 0.0
        %1729 = vmatpush1.msra.mxu0 %v1599
        %1730 = vmatprep.subr.mxu0 0.0
        %1731 = vmatpush1.msra.mxu0 %v1600
        %1732 = vmatprep.subr.mxu0 0.0
        %1733 = vmatpush1.msra.mxu0 %v1601
        %1734 = vmatprep.subr.mxu0 0.0
        %1735 = vmatpush1.msra.mxu0 %v1602
        %1736 = vmatprep.subr.mxu0 0.0
        %1737 = vmatpush1.msra.mxu0 %v1603
        %1738 = vmatprep.subr.mxu0 0.0
        %1739 = vmatpush1.msra.mxu0 %v1604
        %1740 = vmatprep.subr.mxu0 0.0
        %1741 = vmatpush1.msra.mxu0 %v1605
        %1742 = vmatprep.subr.mxu0 0.0
        %1743 = vmatpush1.msra.mxu0 %v1606
        %1744 = vmatprep.subr.mxu0 0.0
        %1745 = vmatpush1.msra.mxu0 %v1607
        %1746 = vmatprep.subr.mxu0 0.0
        %1747 = vmatpush1.msra.mxu0 %v1608
        %1748 = vmatprep.subr.mxu0 0.0
        %1749 = vmatpush1.msra.mxu0 %v1609
        %1750 = vmatprep.subr.mxu0 0.0
        %1751 = vmatpush1.msra.mxu0 %v1610
        %1752 = vmatprep.subr.mxu0 0.0
        %1753 = vmatpush1.msra.mxu0 %v1611
        %1754 = vmatprep.subr.mxu0 0.0
        %1755 = vmatpush1.msra.mxu0 %v1612
        %1756 = vmatprep.subr.mxu0 0.0
        %1757 = vmatpush1.msra.mxu0 %v1613
        %1758 = vmatprep.subr.mxu0 0.0
        %1759 = vmatpush1.msra.mxu0 %v1614
        %1760 = vmatprep.subr.mxu0 0.0
        %1761 = vmatpush1.msra.mxu0 %v1615
        %1762 = vmatprep.subr.mxu0 0.0
        %1763 = vmatpush1.msra.mxu0 %v1616
        %1764 = vmatprep.subr.mxu0 0.0
        %1765 = vmatpush1.msra.mxu0 %v1617
        %1766 = vmatprep.subr.mxu0 0.0
        %1767 = vmatpush1.msra.mxu0 %v1618
        %1768 = vmatprep.subr.mxu0 0.0
        %1769 = vmatpush1.msra.mxu0 %v1619
        %1770 = vmatprep.subr.mxu0 0.0
        %1771 = vmatpush1.msra.mxu0 %v1620
        %1772 = vmatprep.subr.mxu0 0.0
        %1773 = vmatpush1.msra.mxu0 %v1621
        %1774 = vmatprep.subr.mxu0 0.0
        %1775 = vmatpush1.msra.mxu0 %v1622
        %1776 = vmatprep.subr.mxu0 0.0
        %1777 = vmatpush1.msra.mxu0 %v1623
        %1778 = vmatprep.subr.mxu0 0.0
        %1779 = vmatpush1.msra.mxu0 %v1624
        %1780 = vmatprep.subr.mxu0 0.0
        %1781 = vmatpush1.msra.mxu0 %v1625
        %1782 = vmatprep.subr.mxu0 0.0
        %1783 = vmatpush1.msra.mxu0 %v1626
        %1784 = vmatprep.subr.mxu0 0.0
        %1785 = vmatpush1.msra.mxu0 %v1627
        %1786 = vmatprep.mubr.f32.mxu0 %v1562
        %1787 = vmatmul.mubr.f32.gmra.mrb[0].mxu0 %v1560
        %v1788 = vpop.f32.mrb[0].mxu0
        %v1789 = vadd.f32 %v1714, %v1788
        %v1790 = vpop.f32.mrb[0].mxu0
        %1791 = vmatprep.mubr.f32.mxu0 %v1563
        %1792 = vmatmul.mubr.f32.gmra.mrb[0].mxu0 %v1561
        %v1793 = vpop.f32.mrb[0].mxu0
        %v1794 = vadd.f32 %v1719, %v1793
        %v1795 = vpop.f32.mrb[0].mxu0
        %1796 = vdwg.mxu0
        %1797 = vmatprep.subr.mxu0 0.0
        %1798 = vmatpush1.msra.mxu0 %v1628
        %1799 = vmatprep.subr.mxu0 0.0
        %1800 = vmatpush1.msra.mxu0 %v1629
        %1801 = vmatprep.subr.mxu0 0.0
        %1802 = vmatpush1.msra.mxu0 %v1630
        %1803 = vmatprep.subr.mxu0 0.0
        %1804 = vmatpush1.msra.mxu0 %v1631
        %1805 = vmatprep.subr.mxu0 0.0
        %1806 = vmatpush1.msra.mxu0 %v1632
        %1807 = vmatprep.subr.mxu0 0.0
        %1808 = vmatpush1.msra.mxu0 %v1633
        %1809 = vmatprep.subr.mxu0 0.0
        %1810 = vmatpush1.msra.mxu0 %v1634
        %1811 = vmatprep.subr.mxu0 0.0
        %1812 = vmatpush1.msra.mxu0 %v1635
        %1813 = vmatprep.subr.mxu0 0.0
        %1814 = vmatpush1.msra.mxu0 0.0
        %1815 = vmatprep.subr.mxu0 0.0
        %1816 = vmatpush1.msra.mxu0 0.0
        %1817 = vmatprep.subr.mxu0 0.0
        %1818 = vmatpush1.msra.mxu0 0.0
        %1819 = vmatprep.subr.mxu0 0.0
        %1820 = vmatpush1.msra.mxu0 0.0
        %1821 = vmatprep.subr.mxu0 0.0
        %1822 = vmatpush1.msra.mxu0 0.0
        %1823 = vmatprep.subr.mxu0 0.0
        %1824 = vmatpush1.msra.mxu0 0.0
        %1825 = vmatprep.subr.mxu0 0.0
        %1826 = vmatpush1.msra.mxu0 0.0
        %1827 = vmatprep.subr.mxu0 0.0
        %1828 = vmatpush1.msra.mxu0 0.0
        %1829 = vmatprep.subr.mxu0 0.0
        %1830 = vmatpush1.msra.mxu0 0.0
        %1831 = vmatprep.subr.mxu0 0.0
        %1832 = vmatpush1.msra.mxu0 0.0
        %1833 = vmatprep.subr.mxu0 0.0
        %1834 = vmatpush1.msra.mxu0 0.0
        %1835 = vmatprep.subr.mxu0 0.0
        %1836 = vmatpush1.msra.mxu0 0.0
        %1837 = vmatprep.subr.mxu0 0.0
        %1838 = vmatpush1.msra.mxu0 0.0
        %1839 = vmatprep.subr.mxu0 0.0
        %1840 = vmatpush1.msra.mxu0 0.0
        %1841 = vmatprep.subr.mxu0 0.0
        %1842 = vmatpush1.msra.mxu0 0.0
        %1843 = vmatprep.subr.mxu0 0.0
        %1844 = vmatpush1.msra.mxu0 0.0
        %1845 = vmatprep.subr.mxu0 0.0
        %1846 = vmatpush1.msra.mxu0 0.0
        %1847 = vmatprep.subr.mxu0 0.0
        %1848 = vmatpush1.msra.mxu0 0.0
        %1849 = vmatprep.subr.mxu0 0.0
        %1850 = vmatpush1.msra.mxu0 0.0
        %1851 = vmatprep.subr.mxu0 0.0
        %1852 = vmatpush1.msra.mxu0 0.0
        %1853 = vmatprep.subr.mxu0 0.0
        %1854 = vmatpush1.msra.mxu0 0.0
        %1855 = vmatprep.subr.mxu0 0.0
        %1856 = vmatpush1.msra.mxu0 0.0
        %1857 = vmatprep.subr.mxu0 0.0
        %1858 = vmatpush1.msra.mxu0 0.0
        %1859 = vmatprep.subr.mxu0 0.0
        %1860 = vmatpush1.msra.mxu0 0.0
        %1861 = vmatprep.mubr.f32.mxu0 0.0
        %1862 = vmatmul.mubr.f32.gmra.mrb[0].mxu0 %v1643
        %v1863 = vpop.f32.mrb[0].mxu0
        %v1864 = vadd.f32 %v1789, %v1863
        %v1865 = vpop.f32.mrb[0].mxu0
        %1866 = vmatprep.mubr.f32.mxu0 0.0
        %1867 = vmatmul.mubr.f32.gmra.mrb[0].mxu0 %v1645
        %v1868 = vpop.f32.mrb[0].mxu0
        %v1869 = vadd.f32 %v1794, %v1868
        %v1870 = vpop.f32.mrb[0].mxu0
        %1871 = vdwg.mxu0
        %v1872 = vmax.f32 %v1864, 0.0
        %v1873 = vmax.f32 %v1869, 0.0
        %v1874 = vld [vmem:[%s9] sm:$0xff]
        %v1875 = vld [vmem:[%s9 + $0x8] sm:$0xff]
        %v1876 = vld [vmem:[%s9 + $0x10] sm:$0xff]
        %v1877 = vld [vmem:[%s9 + $0x18] sm:$0xff]
        %v1878 = vld [vmem:[%s9 + $0x20] sm:$0xff]
        %v1879 = vld [vmem:[%s9 + $0x28] sm:$0xff]
        %v1880 = vld [vmem:[%s9 + $0x30] sm:$0xff]
        %v1881 = vld [vmem:[%s9 + $0x38] sm:$0xff]
        %v1882 = vld [vmem:[%s9 + $0x40] sm:$0xff]
        %v1883 = vld [vmem:[%s9 + $0x48] sm:$0xff]
        %v1884 = vld [vmem:[%s9 + $0x50] sm:$0xff]
        %v1885 = vld [vmem:[%s9 + $0x58] sm:$0xff]
        %v1886 = vld [vmem:[%s9 + $0x60] sm:$0xff]
        %v1887 = vld [vmem:[%s9 + $0x68] sm:$0xff]
        %v1888 = vld [vmem:[%s9 + $0x70] sm:$0xff]
        %v1889 = vld [vmem:[%s9 + $0x78] sm:$0xff]
        %v1890 = vld [vmem:[%s10] sm:$0x1]
        %v1892 = vlaneseq
        %v1893 = vshrl.u32 %v1892, 7
        %v1894 = vsub.s32 0, %v1893
        %v1895 = vrot.slane %v1890, %v1894
        %1897 = vmatprep.subr.mxu0 0.0
        %1898 = vmatpush1.msra.mxu0 %v1874
        %1899 = vmatprep.subr.mxu0 0.0
        %1900 = vmatpush1.msra.mxu0 %v1875
        %1901 = vmatprep.subr.mxu0 0.0
        %1902 = vmatpush1.msra.mxu0 %v1876
        %1903 = vmatprep.subr.mxu0 0.0
        %1904 = vmatpush1.msra.mxu0 %v1877
        %1905 = vmatprep.subr.mxu0 0.0
        %1906 = vmatpush1.msra.mxu0 %v1878
        %1907 = vmatprep.subr.mxu0 0.0
        %1908 = vmatpush1.msra.mxu0 %v1879
        %1909 = vmatprep.subr.mxu0 0.0
        %1910 = vmatpush1.msra.mxu0 %v1880
        %1911 = vmatprep.subr.mxu0 0.0
        %1912 = vmatpush1.msra.mxu0 %v1881
        %1913 = vmatprep.subr.mxu0 0.0
        %1914 = vmatpush1.msra.mxu0 %v1882
        %1915 = vmatprep.subr.mxu0 0.0
        %1916 = vmatpush1.msra.mxu0 %v1883
        %1917 = vmatprep.subr.mxu0 0.0
        %1918 = vmatpush1.msra.mxu0 %v1884
        %1919 = vmatprep.subr.mxu0 0.0
        %1920 = vmatpush1.msra.mxu0 %v1885
        %1921 = vmatprep.subr.mxu0 0.0
        %1922 = vmatpush1.msra.mxu0 %v1886
        %1923 = vmatprep.subr.mxu0 0.0
        %1924 = vmatpush1.msra.mxu0 %v1887
        %1925 = vmatprep.subr.mxu0 0.0
        %1926 = vmatpush1.msra.mxu0 %v1888
        %1927 = vmatprep.subr.mxu0 0.0
        %1928 = vmatpush1.msra.mxu0 %v1889
        %1929 = vmatprep.subr.mxu0 0.0
        %1930 = vmatpush1.msra.mxu0 0.0
        %1931 = vmatprep.subr.mxu0 0.0
        %1932 = vmatpush1.msra.mxu0 0.0
        %1933 = vmatprep.subr.mxu0 0.0
        %1934 = vmatpush1.msra.mxu0 0.0
        %1935 = vmatprep.subr.mxu0 0.0
        %1936 = vmatpush1.msra.mxu0 0.0
        %1937 = vmatprep.subr.mxu0 0.0
        %1938 = vmatpush1.msra.mxu0 0.0
        %1939 = vmatprep.subr.mxu0 0.0
        %1940 = vmatpush1.msra.mxu0 0.0
        %1941 = vmatprep.subr.mxu0 0.0
        %1942 = vmatpush1.msra.mxu0 0.0
        %1943 = vmatprep.subr.mxu0 0.0
        %1944 = vmatpush1.msra.mxu0 0.0
        %1945 = vmatprep.subr.mxu0 0.0
        %1946 = vmatpush1.msra.mxu0 0.0
        %1947 = vmatprep.subr.mxu0 0.0
        %1948 = vmatpush1.msra.mxu0 0.0
        %1949 = vmatprep.subr.mxu0 0.0
        %1950 = vmatpush1.msra.mxu0 0.0
        %1951 = vmatprep.subr.mxu0 0.0
        %1952 = vmatpush1.msra.mxu0 0.0
        %1953 = vmatprep.subr.mxu0 0.0
        %1954 = vmatpush1.msra.mxu0 0.0
        %1955 = vmatprep.subr.mxu0 0.0
        %1956 = vmatpush1.msra.mxu0 0.0
        %1957 = vmatprep.subr.mxu0 0.0
        %1958 = vmatpush1.msra.mxu0 0.0
        %1959 = vmatprep.subr.mxu0 0.0
        %1960 = vmatpush1.msra.mxu0 0.0
        %1961 = vmatprep.mubr.f32.mxu0 0.0
        %1962 = vmatmul.mubr.f32.gmra.mrb[0].mxu0 %v1872
        %v1963 = vpop.f32.mrb[0].mxu0
        %v1964 = vadd.f32 %v1895, %v1963
        %v1965 = vpop.f32.mrb[0].mxu0
        %1966 = vmatprep.mubr.f32.mxu0 0.0
        %1967 = vmatmul.mubr.f32.gmra.mrb[0].mxu0 %v1873
        %v1968 = vpop.f32.mrb[0].mxu0
        %v1969 = vadd.f32 %v1895, %v1968
        %v1970 = vpop.f32.mrb[0].mxu0
        %1971 = vdwg.mxu0
        %v1972 = vmax.f32 %v1964, 0.0
        %v1973 = vmax.f32 %v1969, 0.0
        %1974 = vst [vmem:[#allocation2] sm:$0xff] 0.0
        %1975 = vst.msk [vmem:[#allocation2 + $0x8] sm:$0xff] %vm956, 0.0
        %1976 = vst [vmem:[#allocation2 + $0x10] sm:$0xff] 0.0
        %1977 = vst.msk [vmem:[#allocation2 + $0x18] sm:$0xff] %vm956, 0.0
        %1978 = vst [vmem:[#allocation2 + $0x20] sm:$0x3] 0.0
        %1979 = vst.msk [vmem:[#allocation2 + $0x28] sm:$0x3] %vm961, 0.0
        %v1982 = vrot.slane %v1972, 7
        %v1983 = vrot.slane %v1973, 7
        %v1984 = vsel %vm965, %v1982, %v1983
        %1985 = vrot.lane.b32.xlu0 %v1982, 4
        %v1986 = vpop.permute.xlu0 %1985
        %1987 = vrot.lane.b32.xlu0 %v1984, 4
        %v1988 = vpop.permute.xlu0 %1987
        %1989 = vrot.lane.b32.xlu0 %v1983, 4
        %v1990 = vpop.permute.xlu0 %1989
        %1994 = vst.msk [vmem:[#allocation2] sm:$0xfe] %vm978, %v1986
        %1995 = vst.msk [vmem:[#allocation2 + $0x10] sm:$0xff] %vm980, %v1988
        %1996 = vst.msk [vmem:[#allocation2 + $0x20] sm:$0x1] %vm982, %v1990
        %v1997 = vld [vmem:[#allocation2] sm:$0xff]
        %v1998 = vld [vmem:[#allocation2 + $0x10] sm:$0xff]
        %v1999 = vld [vmem:[#allocation2] sm:$0xfe]
        %v2000 = vld [vmem:[#allocation2 + $0x20] sm:$0x1]
        %v2001 = vld [vmem:[#allocation2] sm:$0xfc]
        %v2002 = vld [vmem:[#allocation2 + $0x20] sm:$0x3]
        %2005 = vrot.lane.b32.xlu0 %v1997, 60
        %v2006 = vpop.permute.xlu0 %2005
        %2007 = vrot.lane.b32.xlu0 %v1998, 60
        %v2008 = vpop.permute.xlu0 %2007
        %2011 = vrot.lane.b32.xlu0 %v1997, 120
        %v2012 = vpop.permute.xlu0 %2011
        %2013 = vrot.lane.b32.xlu0 %v1998, 120
        %v2014 = vpop.permute.xlu0 %2013
        %v2019 = vrot.slane %v1999, 1
        %v2020 = vrot.slane %v1998, 1
        %v2021 = vsel %vm1006, %v2019, %v2020
        %v2022 = vrot.slane %v2000, 1
        %v2023 = vsel %vm1006, %v2020, %v2022
        %2024 = vrot.lane.b32.xlu0 %v2021, 64
        %v2025 = vpop.permute.xlu0 %2024
        %2026 = vrot.lane.b32.xlu0 %v2023, 64
        %v2027 = vpop.permute.xlu0 %2026
        %2030 = vrot.lane.b32.xlu0 %v2021, 124
        %v2031 = vpop.permute.xlu0 %2030
        %2032 = vrot.lane.b32.xlu0 %v2023, 124
        %v2033 = vpop.permute.xlu0 %2032
        %2036 = vrot.lane.b32.xlu0 %v2021, 56
        %v2037 = vpop.permute.xlu0 %2036
        %2038 = vrot.lane.b32.xlu0 %v2023, 56
        %v2039 = vpop.permute.xlu0 %2038
        %v2044 = vrot.slane %v2001, 2
        %v2045 = vrot.slane %v1998, 2
        %v2046 = vsel %vm1032, %v2044, %v2045
        %v2047 = vrot.slane %v2002, 2
        %v2048 = vsel %vm1032, %v2045, %v2047
        %2051 = vrot.lane.b32.xlu0 %v2046, 60
        %v2052 = vpop.permute.xlu0 %2051
        %2053 = vrot.lane.b32.xlu0 %v2048, 60
        %v2054 = vpop.permute.xlu0 %2053
        %2057 = vrot.lane.b32.xlu0 %v2046, 120
        %v2058 = vpop.permute.xlu0 %2057
        %2059 = vrot.lane.b32.xlu0 %v2048, 120
        %v2060 = vpop.permute.xlu0 %2059
        %v2061 = vsel %vm1050, %v1997, %v2006
        %v2062 = vsel %vm1050, %v1998, %v2008
        %v2063 = vsel %vm1050, %v2012, %v2025
        %v2064 = vsel %vm1050, %v2014, %v2027
        %v2065 = vsel %vm1050, %v2031, %v2037
        %v2066 = vsel %vm1050, %v2033, %v2039
        %v2067 = vsel %vm1050, %v2046, %v2052
        %v2068 = vsel %vm1050, %v2048, %v2054
        %v2069 = vld [vmem:[#allocation7] sm:$0xff]
        %v2070 = vld [vmem:[#allocation7 + $0x8] sm:$0xff]
        %v2071 = vld [vmem:[#allocation7 + $0x10] sm:$0xff]
        %v2072 = vld [vmem:[#allocation7 + $0x18] sm:$0xff]
        %v2073 = vld [vmem:[#allocation7 + $0x20] sm:$0xff]
        %v2074 = vld [vmem:[#allocation7 + $0x28] sm:$0xff]
        %v2075 = vld [vmem:[#allocation7 + $0x30] sm:$0xff]
        %v2076 = vld [vmem:[#allocation7 + $0x38] sm:$0xff]
        %v2077 = vld [vmem:[#allocation7 + $0x40] sm:$0xff]
        %v2078 = vld [vmem:[#allocation7 + $0x48] sm:$0xff]
        %v2079 = vld [vmem:[#allocation7 + $0x50] sm:$0xff]
        %v2080 = vld [vmem:[#allocation7 + $0x58] sm:$0xff]
        %v2081 = vld [vmem:[#allocation7 + $0x60] sm:$0xff]
        %v2082 = vld [vmem:[#allocation7 + $0x68] sm:$0xff]
        %v2083 = vld [vmem:[#allocation7 + $0x70] sm:$0xff]
        %v2084 = vld [vmem:[#allocation7 + $0x78] sm:$0xff]
        %v2085 = vld [vmem:[#allocation7 + $0x80] sm:$0xff]
        %v2086 = vld [vmem:[#allocation7 + $0x88] sm:$0xff]
        %v2087 = vld [vmem:[#allocation7 + $0x90] sm:$0xff]
        %v2088 = vld [vmem:[#allocation7 + $0x98] sm:$0xff]
        %v2089 = vld [vmem:[#allocation7 + $0xa0] sm:$0xff]
        %v2090 = vld [vmem:[#allocation7 + $0xa8] sm:$0xff]
        %v2091 = vld [vmem:[#allocation7 + $0xb0] sm:$0xff]
        %v2092 = vld [vmem:[#allocation7 + $0xb8] sm:$0xff]
        %v2093 = vld [vmem:[#allocation7 + $0xc0] sm:$0xff]
        %v2094 = vld [vmem:[#allocation7 + $0xc8] sm:$0xff]
        %v2095 = vld [vmem:[#allocation7 + $0xd0] sm:$0xff]
        %v2096 = vld [vmem:[#allocation7 + $0xd8] sm:$0xff]
        %v2097 = vld [vmem:[#allocation7 + $0xe0] sm:$0xff]
        %v2098 = vld [vmem:[#allocation7 + $0xe8] sm:$0xff]
        %v2099 = vld [vmem:[#allocation7 + $0xf0] sm:$0xff]
        %v2100 = vld [vmem:[#allocation7 + $0xf8] sm:$0xff]
        %v2101 = vld [vmem:[#allocation7 + $0x100] sm:$0xff]
        %v2102 = vld [vmem:[#allocation7 + $0x108] sm:$0xff]
        %v2103 = vld [vmem:[#allocation7 + $0x110] sm:$0xff]
        %v2104 = vld [vmem:[#allocation7 + $0x118] sm:$0xff]
        %v2105 = vld [vmem:[#allocation7 + $0x120] sm:$0xff]
        %v2106 = vld [vmem:[#allocation7 + $0x128] sm:$0xff]
        %v2107 = vld [vmem:[#allocation7 + $0x130] sm:$0xff]
        %v2108 = vld [vmem:[#allocation7 + $0x138] sm:$0xff]
        %v2109 = vld [vmem:[#allocation7 + $0x140] sm:$0xff]
        %v2110 = vld [vmem:[#allocation7 + $0x148] sm:$0xff]
        %v2111 = vld [vmem:[#allocation7 + $0x150] sm:$0xff]
        %v2112 = vld [vmem:[#allocation7 + $0x158] sm:$0xff]
        %v2113 = vld [vmem:[#allocation7 + $0x160] sm:$0xff]
        %v2114 = vld [vmem:[#allocation7 + $0x168] sm:$0xff]
        %v2115 = vld [vmem:[#allocation7 + $0x170] sm:$0xff]
        %v2116 = vld [vmem:[#allocation7 + $0x178] sm:$0xff]
        %v2117 = vld [vmem:[#allocation7 + $0x180] sm:$0xff]
        %v2118 = vld [vmem:[#allocation7 + $0x188] sm:$0xff]
        %v2119 = vld [vmem:[#allocation7 + $0x190] sm:$0xff]
        %v2120 = vld [vmem:[#allocation7 + $0x198] sm:$0xff]
        %v2121 = vld [vmem:[#allocation7 + $0x1a0] sm:$0xff]
        %v2122 = vld [vmem:[#allocation7 + $0x1a8] sm:$0xff]
        %v2123 = vld [vmem:[#allocation7 + $0x1b0] sm:$0xff]
        %v2124 = vld [vmem:[#allocation7 + $0x1b8] sm:$0xff]
        %v2125 = vld [vmem:[#allocation7 + $0x1c0] sm:$0xff]
        %v2126 = vld [vmem:[#allocation7 + $0x1c8] sm:$0xff]
        %v2127 = vld [vmem:[#allocation7 + $0x1d0] sm:$0xff]
        %v2128 = vld [vmem:[#allocation7 + $0x1d8] sm:$0xff]
        %v2129 = vld [vmem:[#allocation7 + $0x1e0] sm:$0xff]
        %v2130 = vld [vmem:[#allocation7 + $0x1e8] sm:$0xff]
        %v2131 = vld [vmem:[#allocation7 + $0x1f0] sm:$0xff]
        %v2132 = vld [vmem:[#allocation7 + $0x1f8] sm:$0xff]
        %v2133 = vld [vmem:[#allocation7 + $0x200] sm:$0xff]
        %v2134 = vld [vmem:[#allocation7 + $0x208] sm:$0xff]
        %v2135 = vld [vmem:[#allocation7 + $0x210] sm:$0xff]
        %v2136 = vld [vmem:[#allocation7 + $0x218] sm:$0xff]
        %v2137 = vld [vmem:[#allocation7 + $0x220] sm:$0xff]
        %v2138 = vld [vmem:[#allocation7 + $0x228] sm:$0xff]
        %v2139 = vld [vmem:[#allocation7 + $0x230] sm:$0xff]
        %v2140 = vld [vmem:[#allocation7 + $0x238] sm:$0xff]
        %v2141 = vld [vmem:[%s12] sm:$0x1]
        %v2143 = vlaneseq
        %v2144 = vshrl.u32 %v2143, 7
        %v2145 = vsub.s32 0, %v2144
        %v2146 = vrot.slane %v2141, %v2145
        %v2148 = vsel %vm1050, %v2058, 0
        %v2150 = vsel %vm1050, %v2060, 0
        %2152 = vmatprep.subr.mxu0 0.0
        %2153 = vmatpush1.msra.mxu0 %v2069
        %2154 = vmatprep.subr.mxu0 0.0
        %2155 = vmatpush1.msra.mxu0 %v2070
        %2156 = vmatprep.subr.mxu0 0.0
        %2157 = vmatpush1.msra.mxu0 %v2071
        %2158 = vmatprep.subr.mxu0 0.0
        %2159 = vmatpush1.msra.mxu0 %v2072
        %2160 = vmatprep.subr.mxu0 0.0
        %2161 = vmatpush1.msra.mxu0 %v2073
        %2162 = vmatprep.subr.mxu0 0.0
        %2163 = vmatpush1.msra.mxu0 %v2074
        %2164 = vmatprep.subr.mxu0 0.0
        %2165 = vmatpush1.msra.mxu0 %v2075
        %2166 = vmatprep.subr.mxu0 0.0
        %2167 = vmatpush1.msra.mxu0 %v2076
        %2168 = vmatprep.subr.mxu0 0.0
        %2169 = vmatpush1.msra.mxu0 %v2077
        %2170 = vmatprep.subr.mxu0 0.0
        %2171 = vmatpush1.msra.mxu0 %v2078
        %2172 = vmatprep.subr.mxu0 0.0
        %2173 = vmatpush1.msra.mxu0 %v2079
        %2174 = vmatprep.subr.mxu0 0.0
        %2175 = vmatpush1.msra.mxu0 %v2080
        %2176 = vmatprep.subr.mxu0 0.0
        %2177 = vmatpush1.msra.mxu0 %v2081
        %2178 = vmatprep.subr.mxu0 0.0
        %2179 = vmatpush1.msra.mxu0 %v2082
        %2180 = vmatprep.subr.mxu0 0.0
        %2181 = vmatpush1.msra.mxu0 %v2083
        %2182 = vmatprep.subr.mxu0 0.0
        %2183 = vmatpush1.msra.mxu0 %v2084
        %2184 = vmatprep.subr.mxu0 0.0
        %2185 = vmatpush1.msra.mxu0 %v2085
        %2186 = vmatprep.subr.mxu0 0.0
        %2187 = vmatpush1.msra.mxu0 %v2086
        %2188 = vmatprep.subr.mxu0 0.0
        %2189 = vmatpush1.msra.mxu0 %v2087
        %2190 = vmatprep.subr.mxu0 0.0
        %2191 = vmatpush1.msra.mxu0 %v2088
        %2192 = vmatprep.subr.mxu0 0.0
        %2193 = vmatpush1.msra.mxu0 %v2089
        %2194 = vmatprep.subr.mxu0 0.0
        %2195 = vmatpush1.msra.mxu0 %v2090
        %2196 = vmatprep.subr.mxu0 0.0
        %2197 = vmatpush1.msra.mxu0 %v2091
        %2198 = vmatprep.subr.mxu0 0.0
        %2199 = vmatpush1.msra.mxu0 %v2092
        %2200 = vmatprep.subr.mxu0 0.0
        %2201 = vmatpush1.msra.mxu0 %v2093
        %2202 = vmatprep.subr.mxu0 0.0
        %2203 = vmatpush1.msra.mxu0 %v2094
        %2204 = vmatprep.subr.mxu0 0.0
        %2205 = vmatpush1.msra.mxu0 %v2095
        %2206 = vmatprep.subr.mxu0 0.0
        %2207 = vmatpush1.msra.mxu0 %v2096
        %2208 = vmatprep.subr.mxu0 0.0
        %2209 = vmatpush1.msra.mxu0 %v2097
        %2210 = vmatprep.subr.mxu0 0.0
        %2211 = vmatpush1.msra.mxu0 %v2098
        %2212 = vmatprep.subr.mxu0 0.0
        %2213 = vmatpush1.msra.mxu0 %v2099
        %2214 = vmatprep.subr.mxu0 0.0
        %2215 = vmatpush1.msra.mxu0 %v2100
        %2216 = vmatprep.mubr.f32.mxu0 %v2063
        %2217 = vmatmul.mubr.f32.gmra.mrb[0].mxu0 %v2061
        %v2218 = vpop.f32.mrb[0].mxu0
        %v2219 = vadd.f32 %v2146, %v2218
        %v2220 = vpop.f32.mrb[0].mxu0
        %2221 = vmatprep.mubr.f32.mxu0 %v2064
        %2222 = vmatmul.mubr.f32.gmra.mrb[0].mxu0 %v2062
        %v2223 = vpop.f32.mrb[0].mxu0
        %v2224 = vadd.f32 %v2146, %v2223
        %v2225 = vpop.f32.mrb[0].mxu0
        %2226 = vdwg.mxu0
        %2227 = vmatprep.subr.mxu0 0.0
        %2228 = vmatpush1.msra.mxu0 %v2101
        %2229 = vmatprep.subr.mxu0 0.0
        %2230 = vmatpush1.msra.mxu0 %v2102
        %2231 = vmatprep.subr.mxu0 0.0
        %2232 = vmatpush1.msra.mxu0 %v2103
        %2233 = vmatprep.subr.mxu0 0.0
        %2234 = vmatpush1.msra.mxu0 %v2104
        %2235 = vmatprep.subr.mxu0 0.0
        %2236 = vmatpush1.msra.mxu0 %v2105
        %2237 = vmatprep.subr.mxu0 0.0
        %2238 = vmatpush1.msra.mxu0 %v2106
        %2239 = vmatprep.subr.mxu0 0.0
        %2240 = vmatpush1.msra.mxu0 %v2107
        %2241 = vmatprep.subr.mxu0 0.0
        %2242 = vmatpush1.msra.mxu0 %v2108
        %2243 = vmatprep.subr.mxu0 0.0
        %2244 = vmatpush1.msra.mxu0 %v2109
        %2245 = vmatprep.subr.mxu0 0.0
        %2246 = vmatpush1.msra.mxu0 %v2110
        %2247 = vmatprep.subr.mxu0 0.0
        %2248 = vmatpush1.msra.mxu0 %v2111
        %2249 = vmatprep.subr.mxu0 0.0
        %2250 = vmatpush1.msra.mxu0 %v2112
        %2251 = vmatprep.subr.mxu0 0.0
        %2252 = vmatpush1.msra.mxu0 %v2113
        %2253 = vmatprep.subr.mxu0 0.0
        %2254 = vmatpush1.msra.mxu0 %v2114
        %2255 = vmatprep.subr.mxu0 0.0
        %2256 = vmatpush1.msra.mxu0 %v2115
        %2257 = vmatprep.subr.mxu0 0.0
        %2258 = vmatpush1.msra.mxu0 %v2116
        %2259 = vmatprep.subr.mxu0 0.0
        %2260 = vmatpush1.msra.mxu0 %v2117
        %2261 = vmatprep.subr.mxu0 0.0
        %2262 = vmatpush1.msra.mxu0 %v2118
        %2263 = vmatprep.subr.mxu0 0.0
        %2264 = vmatpush1.msra.mxu0 %v2119
        %2265 = vmatprep.subr.mxu0 0.0
        %2266 = vmatpush1.msra.mxu0 %v2120
        %2267 = vmatprep.subr.mxu0 0.0
        %2268 = vmatpush1.msra.mxu0 %v2121
        %2269 = vmatprep.subr.mxu0 0.0
        %2270 = vmatpush1.msra.mxu0 %v2122
        %2271 = vmatprep.subr.mxu0 0.0
        %2272 = vmatpush1.msra.mxu0 %v2123
        %2273 = vmatprep.subr.mxu0 0.0
        %2274 = vmatpush1.msra.mxu0 %v2124
        %2275 = vmatprep.subr.mxu0 0.0
        %2276 = vmatpush1.msra.mxu0 %v2125
        %2277 = vmatprep.subr.mxu0 0.0
        %2278 = vmatpush1.msra.mxu0 %v2126
        %2279 = vmatprep.subr.mxu0 0.0
        %2280 = vmatpush1.msra.mxu0 %v2127
        %2281 = vmatprep.subr.mxu0 0.0
        %2282 = vmatpush1.msra.mxu0 %v2128
        %2283 = vmatprep.subr.mxu0 0.0
        %2284 = vmatpush1.msra.mxu0 %v2129
        %2285 = vmatprep.subr.mxu0 0.0
        %2286 = vmatpush1.msra.mxu0 %v2130
        %2287 = vmatprep.subr.mxu0 0.0
        %2288 = vmatpush1.msra.mxu0 %v2131
        %2289 = vmatprep.subr.mxu0 0.0
        %2290 = vmatpush1.msra.mxu0 %v2132
        %2291 = vmatprep.mubr.f32.mxu0 %v2067
        %2292 = vmatmul.mubr.f32.gmra.mrb[0].mxu0 %v2065
        %v2293 = vpop.f32.mrb[0].mxu0
        %v2294 = vadd.f32 %v2219, %v2293
        %v2295 = vpop.f32.mrb[0].mxu0
        %2296 = vmatprep.mubr.f32.mxu0 %v2068
        %2297 = vmatmul.mubr.f32.gmra.mrb[0].mxu0 %v2066
        %v2298 = vpop.f32.mrb[0].mxu0
        %v2299 = vadd.f32 %v2224, %v2298
        %v2300 = vpop.f32.mrb[0].mxu0
        %2301 = vdwg.mxu0
        %2302 = vmatprep.subr.mxu0 0.0
        %2303 = vmatpush1.msra.mxu0 %v2133
        %2304 = vmatprep.subr.mxu0 0.0
        %2305 = vmatpush1.msra.mxu0 %v2134
        %2306 = vmatprep.subr.mxu0 0.0
        %2307 = vmatpush1.msra.mxu0 %v2135
        %2308 = vmatprep.subr.mxu0 0.0
        %2309 = vmatpush1.msra.mxu0 %v2136
        %2310 = vmatprep.subr.mxu0 0.0
        %2311 = vmatpush1.msra.mxu0 %v2137
        %2312 = vmatprep.subr.mxu0 0.0
        %2313 = vmatpush1.msra.mxu0 %v2138
        %2314 = vmatprep.subr.mxu0 0.0
        %2315 = vmatpush1.msra.mxu0 %v2139
        %2316 = vmatprep.subr.mxu0 0.0
        %2317 = vmatpush1.msra.mxu0 %v2140
        %2318 = vmatprep.subr.mxu0 0.0
        %2319 = vmatpush1.msra.mxu0 0.0
        %2320 = vmatprep.subr.mxu0 0.0
        %2321 = vmatpush1.msra.mxu0 0.0
        %2322 = vmatprep.subr.mxu0 0.0
        %2323 = vmatpush1.msra.mxu0 0.0
        %2324 = vmatprep.subr.mxu0 0.0
        %2325 = vmatpush1.msra.mxu0 0.0
        %2326 = vmatprep.subr.mxu0 0.0
        %2327 = vmatpush1.msra.mxu0 0.0
        %2328 = vmatprep.subr.mxu0 0.0
        %2329 = vmatpush1.msra.mxu0 0.0
        %2330 = vmatprep.subr.mxu0 0.0
        %2331 = vmatpush1.msra.mxu0 0.0
        %2332 = vmatprep.subr.mxu0 0.0
        %2333 = vmatpush1.msra.mxu0 0.0
        %2334 = vmatprep.subr.mxu0 0.0
        %2335 = vmatpush1.msra.mxu0 0.0
        %2336 = vmatprep.subr.mxu0 0.0
        %2337 = vmatpush1.msra.mxu0 0.0
        %2338 = vmatprep.subr.mxu0 0.0
        %2339 = vmatpush1.msra.mxu0 0.0
        %2340 = vmatprep.subr.mxu0 0.0
        %2341 = vmatpush1.msra.mxu0 0.0
        %2342 = vmatprep.subr.mxu0 0.0
        %2343 = vmatpush1.msra.mxu0 0.0
        %2344 = vmatprep.subr.mxu0 0.0
        %2345 = vmatpush1.msra.mxu0 0.0
        %2346 = vmatprep.subr.mxu0 0.0
        %2347 = vmatpush1.msra.mxu0 0.0
        %2348 = vmatprep.subr.mxu0 0.0
        %2349 = vmatpush1.msra.mxu0 0.0
        %2350 = vmatprep.subr.mxu0 0.0
        %2351 = vmatpush1.msra.mxu0 0.0
        %2352 = vmatprep.subr.mxu0 0.0
        %2353 = vmatpush1.msra.mxu0 0.0
        %2354 = vmatprep.subr.mxu0 0.0
        %2355 = vmatpush1.msra.mxu0 0.0
        %2356 = vmatprep.subr.mxu0 0.0
        %2357 = vmatpush1.msra.mxu0 0.0
        %2358 = vmatprep.subr.mxu0 0.0
        %2359 = vmatpush1.msra.mxu0 0.0
        %2360 = vmatprep.subr.mxu0 0.0
        %2361 = vmatpush1.msra.mxu0 0.0
        %2362 = vmatprep.subr.mxu0 0.0
        %2363 = vmatpush1.msra.mxu0 0.0
        %2364 = vmatprep.subr.mxu0 0.0
        %2365 = vmatpush1.msra.mxu0 0.0
        %2366 = vmatprep.mubr.f32.mxu0 0.0
        %2367 = vmatmul.mubr.f32.gmra.mrb[0].mxu0 %v2148
        %v2368 = vpop.f32.mrb[0].mxu0
        %v2369 = vadd.f32 %v2294, %v2368
        %v2370 = vpop.f32.mrb[0].mxu0
        %2371 = vmatprep.mubr.f32.mxu0 0.0
        %2372 = vmatmul.mubr.f32.gmra.mrb[0].mxu0 %v2150
        %v2373 = vpop.f32.mrb[0].mxu0
        %v2374 = vadd.f32 %v2299, %v2373
        %v2375 = vpop.f32.mrb[0].mxu0
        %2376 = vdwg.mxu0
        %v2377 = vmax.f32 %v2369, 0.0
        %v2378 = vmax.f32 %v2374, 0.0
        %v2379 = vld [vmem:[%s13] sm:$0xff]
        %v2380 = vld [vmem:[%s13 + $0x8] sm:$0xff]
        %v2381 = vld [vmem:[%s13 + $0x10] sm:$0xff]
        %v2382 = vld [vmem:[%s13 + $0x18] sm:$0xff]
        %v2383 = vld [vmem:[%s13 + $0x20] sm:$0xff]
        %v2384 = vld [vmem:[%s13 + $0x28] sm:$0xff]
        %v2385 = vld [vmem:[%s13 + $0x30] sm:$0xff]
        %v2386 = vld [vmem:[%s13 + $0x38] sm:$0xff]
        %v2387 = vld [vmem:[%s13 + $0x40] sm:$0xff]
        %v2388 = vld [vmem:[%s13 + $0x48] sm:$0xff]
        %v2389 = vld [vmem:[%s13 + $0x50] sm:$0xff]
        %v2390 = vld [vmem:[%s13 + $0x58] sm:$0xff]
        %v2391 = vld [vmem:[%s13 + $0x60] sm:$0xff]
        %v2392 = vld [vmem:[%s13 + $0x68] sm:$0xff]
        %v2393 = vld [vmem:[%s13 + $0x70] sm:$0xff]
        %v2394 = vld [vmem:[%s13 + $0x78] sm:$0xff]
        %v2395 = vld [vmem:[%s14] sm:$0x1]
        %v2397 = vlaneseq
        %v2398 = vshrl.u32 %v2397, 7
        %v2399 = vsub.s32 0, %v2398
        %v2400 = vrot.slane %v2395, %v2399
        %2402 = vmatprep.subr.mxu0 0.0
        %2403 = vmatpush1.msra.mxu0 %v2379
        %2404 = vmatprep.subr.mxu0 0.0
        %2405 = vmatpush1.msra.mxu0 %v2380
        %2406 = vmatprep.subr.mxu0 0.0
        %2407 = vmatpush1.msra.mxu0 %v2381
        %2408 = vmatprep.subr.mxu0 0.0
        %2409 = vmatpush1.msra.mxu0 %v2382
        %2410 = vmatprep.subr.mxu0 0.0
        %2411 = vmatpush1.msra.mxu0 %v2383
        %2412 = vmatprep.subr.mxu0 0.0
        %2413 = vmatpush1.msra.mxu0 %v2384
        %2414 = vmatprep.subr.mxu0 0.0
        %2415 = vmatpush1.msra.mxu0 %v2385
        %2416 = vmatprep.subr.mxu0 0.0
        %2417 = vmatpush1.msra.mxu0 %v2386
        %2418 = vmatprep.subr.mxu0 0.0
        %2419 = vmatpush1.msra.mxu0 %v2387
        %2420 = vmatprep.subr.mxu0 0.0
        %2421 = vmatpush1.msra.mxu0 %v2388
        %2422 = vmatprep.subr.mxu0 0.0
        %2423 = vmatpush1.msra.mxu0 %v2389
        %2424 = vmatprep.subr.mxu0 0.0
        %2425 = vmatpush1.msra.mxu0 %v2390
        %2426 = vmatprep.subr.mxu0 0.0
        %2427 = vmatpush1.msra.mxu0 %v2391
        %2428 = vmatprep.subr.mxu0 0.0
        %2429 = vmatpush1.msra.mxu0 %v2392
        %2430 = vmatprep.subr.mxu0 0.0
        %2431 = vmatpush1.msra.mxu0 %v2393
        %2432 = vmatprep.subr.mxu0 0.0
        %2433 = vmatpush1.msra.mxu0 %v2394
        %2434 = vmatprep.subr.mxu0 0.0
        %2435 = vmatpush1.msra.mxu0 0.0
        %2436 = vmatprep.subr.mxu0 0.0
        %2437 = vmatpush1.msra.mxu0 0.0
        %2438 = vmatprep.subr.mxu0 0.0
        %2439 = vmatpush1.msra.mxu0 0.0
        %2440 = vmatprep.subr.mxu0 0.0
        %2441 = vmatpush1.msra.mxu0 0.0
        %2442 = vmatprep.subr.mxu0 0.0
        %2443 = vmatpush1.msra.mxu0 0.0
        %2444 = vmatprep.subr.mxu0 0.0
        %2445 = vmatpush1.msra.mxu0 0.0
        %2446 = vmatprep.subr.mxu0 0.0
        %2447 = vmatpush1.msra.mxu0 0.0
        %2448 = vmatprep.subr.mxu0 0.0
        %2449 = vmatpush1.msra.mxu0 0.0
        %2450 = vmatprep.subr.mxu0 0.0
        %2451 = vmatpush1.msra.mxu0 0.0
        %2452 = vmatprep.subr.mxu0 0.0
        %2453 = vmatpush1.msra.mxu0 0.0
        %2454 = vmatprep.subr.mxu0 0.0
        %2455 = vmatpush1.msra.mxu0 0.0
        %2456 = vmatprep.subr.mxu0 0.0
        %2457 = vmatpush1.msra.mxu0 0.0
        %2458 = vmatprep.subr.mxu0 0.0
        %2459 = vmatpush1.msra.mxu0 0.0
        %2460 = vmatprep.subr.mxu0 0.0
        %2461 = vmatpush1.msra.mxu0 0.0
        %2462 = vmatprep.subr.mxu0 0.0
        %2463 = vmatpush1.msra.mxu0 0.0
        %2464 = vmatprep.subr.mxu0 0.0
        %2465 = vmatpush1.msra.mxu0 0.0
        %2466 = vmatprep.mubr.f32.mxu0 0.0
        %2467 = vmatmul.mubr.f32.gmra.mrb[0].mxu0 %v2377
        %v2468 = vpop.f32.mrb[0].mxu0
        %v2469 = vadd.f32 %v2400, %v2468
        %v2470 = vpop.f32.mrb[0].mxu0
        %2471 = vmatprep.mubr.f32.mxu0 0.0
        %2472 = vmatmul.mubr.f32.gmra.mrb[0].mxu0 %v2378
        %v2473 = vpop.f32.mrb[0].mxu0
        %v2474 = vadd.f32 %v2400, %v2473
        %v2475 = vpop.f32.mrb[0].mxu0
        %2476 = vdwg.mxu0
        %v2477 = vmax.f32 %v2469, 0.0
        %v2478 = vmax.f32 %v2474, 0.0
        %2479 = vst [vmem:[#allocation2] sm:$0xff] 0.0
        %2480 = vst.msk [vmem:[#allocation2 + $0x8] sm:$0xff] %vm956, 0.0
        %2481 = vst [vmem:[#allocation2 + $0x10] sm:$0xff] 0.0
        %2482 = vst.msk [vmem:[#allocation2 + $0x18] sm:$0xff] %vm956, 0.0
        %2483 = vst [vmem:[#allocation2 + $0x20] sm:$0x3] 0.0
        %2484 = vst.msk [vmem:[#allocation2 + $0x28] sm:$0x3] %vm961, 0.0
        %v2487 = vrot.slane %v2477, 7
        %v2488 = vrot.slane %v2478, 7
        %v2489 = vsel %vm965, %v2487, %v2488
        %2490 = vrot.lane.b32.xlu0 %v2487, 4
        %v2491 = vpop.permute.xlu0 %2490
        %2492 = vrot.lane.b32.xlu0 %v2489, 4
        %v2493 = vpop.permute.xlu0 %2492
        %2494 = vrot.lane.b32.xlu0 %v2488, 4
        %v2495 = vpop.permute.xlu0 %2494
        %2499 = vst.msk [vmem:[#allocation2] sm:$0xfe] %vm978, %v2491
        %2500 = vst.msk [vmem:[#allocation2 + $0x10] sm:$0xff] %vm980, %v2493
        %2501 = vst.msk [vmem:[#allocation2 + $0x20] sm:$0x1] %vm982, %v2495
        %v2502 = vld [vmem:[#allocation2] sm:$0xff]
        %v2503 = vld [vmem:[#allocation2 + $0x10] sm:$0xff]
        %v2504 = vld [vmem:[#allocation2] sm:$0xfe]
        %v2505 = vld [vmem:[#allocation2 + $0x20] sm:$0x1]
        %v2506 = vld [vmem:[#allocation2] sm:$0xfc]
        %v2507 = vld [vmem:[#allocation2 + $0x20] sm:$0x3]
        %2510 = vrot.lane.b32.xlu0 %v2502, 60
        %v2511 = vpop.permute.xlu0 %2510
        %2512 = vrot.lane.b32.xlu0 %v2503, 60
        %v2513 = vpop.permute.xlu0 %2512
        %2516 = vrot.lane.b32.xlu0 %v2502, 120
        %v2517 = vpop.permute.xlu0 %2516
        %2518 = vrot.lane.b32.xlu0 %v2503, 120
        %v2519 = vpop.permute.xlu0 %2518
        %v2524 = vrot.slane %v2504, 1
        %v2525 = vrot.slane %v2503, 1
        %v2526 = vsel %vm1006, %v2524, %v2525
        %v2527 = vrot.slane %v2505, 1
        %v2528 = vsel %vm1006, %v2525, %v2527
        %2529 = vrot.lane.b32.xlu0 %v2526, 64
        %v2530 = vpop.permute.xlu0 %2529
        %2531 = vrot.lane.b32.xlu0 %v2528, 64
        %v2532 = vpop.permute.xlu0 %2531
        %2535 = vrot.lane.b32.xlu0 %v2526, 124
        %v2536 = vpop.permute.xlu0 %2535
        %2537 = vrot.lane.b32.xlu0 %v2528, 124
        %v2538 = vpop.permute.xlu0 %2537
        %2541 = vrot.lane.b32.xlu0 %v2526, 56
        %v2542 = vpop.permute.xlu0 %2541
        %2543 = vrot.lane.b32.xlu0 %v2528, 56
        %v2544 = vpop.permute.xlu0 %2543
        %v2549 = vrot.slane %v2506, 2
        %v2550 = vrot.slane %v2503, 2
        %v2551 = vsel %vm1032, %v2549, %v2550
        %v2552 = vrot.slane %v2507, 2
        %v2553 = vsel %vm1032, %v2550, %v2552
        %2556 = vrot.lane.b32.xlu0 %v2551, 60
        %v2557 = vpop.permute.xlu0 %2556
        %2558 = vrot.lane.b32.xlu0 %v2553, 60
        %v2559 = vpop.permute.xlu0 %2558
        %2562 = vrot.lane.b32.xlu0 %v2551, 120
        %v2563 = vpop.permute.xlu0 %2562
        %2564 = vrot.lane.b32.xlu0 %v2553, 120
        %v2565 = vpop.permute.xlu0 %2564
        %v2566 = vsel %vm1050, %v2502, %v2511
        %v2567 = vsel %vm1050, %v2503, %v2513
        %v2568 = vsel %vm1050, %v2517, %v2530
        %v2569 = vsel %vm1050, %v2519, %v2532
        %v2570 = vsel %vm1050, %v2536, %v2542
        %v2571 = vsel %vm1050, %v2538, %v2544
        %v2572 = vsel %vm1050, %v2551, %v2557
        %v2573 = vsel %vm1050, %v2553, %v2559
        %v2574 = vld [vmem:[#allocation8] sm:$0xff]
        %v2575 = vld [vmem:[#allocation8 + $0x8] sm:$0xff]
        %v2576 = vld [vmem:[#allocation8 + $0x10] sm:$0xff]
        %v2577 = vld [vmem:[#allocation8 + $0x18] sm:$0xff]
        %v2578 = vld [vmem:[#allocation8 + $0x20] sm:$0xff]
        %v2579 = vld [vmem:[#allocation8 + $0x28] sm:$0xff]
        %v2580 = vld [vmem:[#allocation8 + $0x30] sm:$0xff]
        %v2581 = vld [vmem:[#allocation8 + $0x38] sm:$0xff]
        %v2582 = vld [vmem:[#allocation8 + $0x40] sm:$0xff]
        %v2583 = vld [vmem:[#allocation8 + $0x48] sm:$0xff]
        %v2584 = vld [vmem:[#allocation8 + $0x50] sm:$0xff]
        %v2585 = vld [vmem:[#allocation8 + $0x58] sm:$0xff]
        %v2586 = vld [vmem:[#allocation8 + $0x60] sm:$0xff]
        %v2587 = vld [vmem:[#allocation8 + $0x68] sm:$0xff]
        %v2588 = vld [vmem:[#allocation8 + $0x70] sm:$0xff]
        %v2589 = vld [vmem:[#allocation8 + $0x78] sm:$0xff]
        %v2590 = vld [vmem:[#allocation8 + $0x80] sm:$0xff]
        %v2591 = vld [vmem:[#allocation8 + $0x88] sm:$0xff]
        %v2592 = vld [vmem:[#allocation8 + $0x90] sm:$0xff]
        %v2593 = vld [vmem:[#allocation8 + $0x98] sm:$0xff]
        %v2594 = vld [vmem:[#allocation8 + $0xa0] sm:$0xff]
        %v2595 = vld [vmem:[#allocation8 + $0xa8] sm:$0xff]
        %v2596 = vld [vmem:[#allocation8 + $0xb0] sm:$0xff]
        %v2597 = vld [vmem:[#allocation8 + $0xb8] sm:$0xff]
        %v2598 = vld [vmem:[#allocation8 + $0xc0] sm:$0xff]
        %v2599 = vld [vmem:[#allocation8 + $0xc8] sm:$0xff]
        %v2600 = vld [vmem:[#allocation8 + $0xd0] sm:$0xff]
        %v2601 = vld [vmem:[#allocation8 + $0xd8] sm:$0xff]
        %v2602 = vld [vmem:[#allocation8 + $0xe0] sm:$0xff]
        %v2603 = vld [vmem:[#allocation8 + $0xe8] sm:$0xff]
        %v2604 = vld [vmem:[#allocation8 + $0xf0] sm:$0xff]
        %v2605 = vld [vmem:[#allocation8 + $0xf8] sm:$0xff]
        %v2606 = vld [vmem:[#allocation8 + $0x100] sm:$0xff]
        %v2607 = vld [vmem:[#allocation8 + $0x108] sm:$0xff]
        %v2608 = vld [vmem:[#allocation8 + $0x110] sm:$0xff]
        %v2609 = vld [vmem:[#allocation8 + $0x118] sm:$0xff]
        %v2610 = vld [vmem:[#allocation8 + $0x120] sm:$0xff]
        %v2611 = vld [vmem:[#allocation8 + $0x128] sm:$0xff]
        %v2612 = vld [vmem:[#allocation8 + $0x130] sm:$0xff]
        %v2613 = vld [vmem:[#allocation8 + $0x138] sm:$0xff]
        %v2614 = vld [vmem:[#allocation8 + $0x140] sm:$0xff]
        %v2615 = vld [vmem:[#allocation8 + $0x148] sm:$0xff]
        %v2616 = vld [vmem:[#allocation8 + $0x150] sm:$0xff]
        %v2617 = vld [vmem:[#allocation8 + $0x158] sm:$0xff]
        %v2618 = vld [vmem:[#allocation8 + $0x160] sm:$0xff]
        %v2619 = vld [vmem:[#allocation8 + $0x168] sm:$0xff]
        %v2620 = vld [vmem:[#allocation8 + $0x170] sm:$0xff]
        %v2621 = vld [vmem:[#allocation8 + $0x178] sm:$0xff]
        %v2622 = vld [vmem:[#allocation8 + $0x180] sm:$0xff]
        %v2623 = vld [vmem:[#allocation8 + $0x188] sm:$0xff]
        %v2624 = vld [vmem:[#allocation8 + $0x190] sm:$0xff]
        %v2625 = vld [vmem:[#allocation8 + $0x198] sm:$0xff]
        %v2626 = vld [vmem:[#allocation8 + $0x1a0] sm:$0xff]
        %v2627 = vld [vmem:[#allocation8 + $0x1a8] sm:$0xff]
        %v2628 = vld [vmem:[#allocation8 + $0x1b0] sm:$0xff]
        %v2629 = vld [vmem:[#allocation8 + $0x1b8] sm:$0xff]
        %v2630 = vld [vmem:[#allocation8 + $0x1c0] sm:$0xff]
        %v2631 = vld [vmem:[#allocation8 + $0x1c8] sm:$0xff]
        %v2632 = vld [vmem:[#allocation8 + $0x1d0] sm:$0xff]
        %v2633 = vld [vmem:[#allocation8 + $0x1d8] sm:$0xff]
        %v2634 = vld [vmem:[#allocation8 + $0x1e0] sm:$0xff]
        %v2635 = vld [vmem:[#allocation8 + $0x1e8] sm:$0xff]
        %v2636 = vld [vmem:[#allocation8 + $0x1f0] sm:$0xff]
        %v2637 = vld [vmem:[#allocation8 + $0x1f8] sm:$0xff]
        %v2638 = vld [vmem:[#allocation8 + $0x200] sm:$0xff]
        %v2639 = vld [vmem:[#allocation8 + $0x208] sm:$0xff]
        %v2640 = vld [vmem:[#allocation8 + $0x210] sm:$0xff]
        %v2641 = vld [vmem:[#allocation8 + $0x218] sm:$0xff]
        %v2642 = vld [vmem:[#allocation8 + $0x220] sm:$0xff]
        %v2643 = vld [vmem:[#allocation8 + $0x228] sm:$0xff]
        %v2644 = vld [vmem:[#allocation8 + $0x230] sm:$0xff]
        %v2645 = vld [vmem:[#allocation8 + $0x238] sm:$0xff]
        %v2646 = vld [vmem:[%s16] sm:$0x1]
        %v2648 = vlaneseq
        %v2649 = vshrl.u32 %v2648, 7
        %v2650 = vsub.s32 0, %v2649
        %v2651 = vrot.slane %v2646, %v2650
        %v2653 = vsel %vm1050, %v2563, 0
        %v2655 = vsel %vm1050, %v2565, 0
        %2657 = vmatprep.subr.mxu0 0.0
        %2658 = vmatpush1.msra.mxu0 %v2574
        %2659 = vmatprep.subr.mxu0 0.0
        %2660 = vmatpush1.msra.mxu0 %v2575
        %2661 = vmatprep.subr.mxu0 0.0
        %2662 = vmatpush1.msra.mxu0 %v2576
        %2663 = vmatprep.subr.mxu0 0.0
        %2664 = vmatpush1.msra.mxu0 %v2577
        %2665 = vmatprep.subr.mxu0 0.0
        %2666 = vmatpush1.msra.mxu0 %v2578
        %2667 = vmatprep.subr.mxu0 0.0
        %2668 = vmatpush1.msra.mxu0 %v2579
        %2669 = vmatprep.subr.mxu0 0.0
        %2670 = vmatpush1.msra.mxu0 %v2580
        %2671 = vmatprep.subr.mxu0 0.0
        %2672 = vmatpush1.msra.mxu0 %v2581
        %2673 = vmatprep.subr.mxu0 0.0
        %2674 = vmatpush1.msra.mxu0 %v2582
        %2675 = vmatprep.subr.mxu0 0.0
        %2676 = vmatpush1.msra.mxu0 %v2583
        %2677 = vmatprep.subr.mxu0 0.0
        %2678 = vmatpush1.msra.mxu0 %v2584
        %2679 = vmatprep.subr.mxu0 0.0
        %2680 = vmatpush1.msra.mxu0 %v2585
        %2681 = vmatprep.subr.mxu0 0.0
        %2682 = vmatpush1.msra.mxu0 %v2586
        %2683 = vmatprep.subr.mxu0 0.0
        %2684 = vmatpush1.msra.mxu0 %v2587
        %2685 = vmatprep.subr.mxu0 0.0
        %2686 = vmatpush1.msra.mxu0 %v2588
        %2687 = vmatprep.subr.mxu0 0.0
        %2688 = vmatpush1.msra.mxu0 %v2589
        %2689 = vmatprep.subr.mxu0 0.0
        %2690 = vmatpush1.msra.mxu0 %v2590
        %2691 = vmatprep.subr.mxu0 0.0
        %2692 = vmatpush1.msra.mxu0 %v2591
        %2693 = vmatprep.subr.mxu0 0.0
        %2694 = vmatpush1.msra.mxu0 %v2592
        %2695 = vmatprep.subr.mxu0 0.0
        %2696 = vmatpush1.msra.mxu0 %v2593
        %2697 = vmatprep.subr.mxu0 0.0
        %2698 = vmatpush1.msra.mxu0 %v2594
        %2699 = vmatprep.subr.mxu0 0.0
        %2700 = vmatpush1.msra.mxu0 %v2595
        %2701 = vmatprep.subr.mxu0 0.0
        %2702 = vmatpush1.msra.mxu0 %v2596
        %2703 = vmatprep.subr.mxu0 0.0
        %2704 = vmatpush1.msra.mxu0 %v2597
        %2705 = vmatprep.subr.mxu0 0.0
        %2706 = vmatpush1.msra.mxu0 %v2598
        %2707 = vmatprep.subr.mxu0 0.0
        %2708 = vmatpush1.msra.mxu0 %v2599
        %2709 = vmatprep.subr.mxu0 0.0
        %2710 = vmatpush1.msra.mxu0 %v2600
        %2711 = vmatprep.subr.mxu0 0.0
        %2712 = vmatpush1.msra.mxu0 %v2601
        %2713 = vmatprep.subr.mxu0 0.0
        %2714 = vmatpush1.msra.mxu0 %v2602
        %2715 = vmatprep.subr.mxu0 0.0
        %2716 = vmatpush1.msra.mxu0 %v2603
        %2717 = vmatprep.subr.mxu0 0.0
        %2718 = vmatpush1.msra.mxu0 %v2604
        %2719 = vmatprep.subr.mxu0 0.0
        %2720 = vmatpush1.msra.mxu0 %v2605
        %2721 = vmatprep.mubr.f32.mxu0 %v2568
        %2722 = vmatmul.mubr.f32.gmra.mrb[0].mxu0 %v2566
        %v2723 = vpop.f32.mrb[0].mxu0
        %v2724 = vadd.f32 %v2651, %v2723
        %v2725 = vpop.f32.mrb[0].mxu0
        %2726 = vmatprep.mubr.f32.mxu0 %v2569
        %2727 = vmatmul.mubr.f32.gmra.mrb[0].mxu0 %v2567
        %v2728 = vpop.f32.mrb[0].mxu0
        %v2729 = vadd.f32 %v2651, %v2728
        %v2730 = vpop.f32.mrb[0].mxu0
        %2731 = vdwg.mxu0
        %2732 = vmatprep.subr.mxu0 0.0
        %2733 = vmatpush1.msra.mxu0 %v2606
        %2734 = vmatprep.subr.mxu0 0.0
        %2735 = vmatpush1.msra.mxu0 %v2607
        %2736 = vmatprep.subr.mxu0 0.0
        %2737 = vmatpush1.msra.mxu0 %v2608
        %2738 = vmatprep.subr.mxu0 0.0
        %2739 = vmatpush1.msra.mxu0 %v2609
        %2740 = vmatprep.subr.mxu0 0.0
        %2741 = vmatpush1.msra.mxu0 %v2610
        %2742 = vmatprep.subr.mxu0 0.0
        %2743 = vmatpush1.msra.mxu0 %v2611
        %2744 = vmatprep.subr.mxu0 0.0
        %2745 = vmatpush1.msra.mxu0 %v2612
        %2746 = vmatprep.subr.mxu0 0.0
        %2747 = vmatpush1.msra.mxu0 %v2613
        %2748 = vmatprep.subr.mxu0 0.0
        %2749 = vmatpush1.msra.mxu0 %v2614
        %2750 = vmatprep.subr.mxu0 0.0
        %2751 = vmatpush1.msra.mxu0 %v2615
        %2752 = vmatprep.subr.mxu0 0.0
        %2753 = vmatpush1.msra.mxu0 %v2616
        %2754 = vmatprep.subr.mxu0 0.0
        %2755 = vmatpush1.msra.mxu0 %v2617
        %2756 = vmatprep.subr.mxu0 0.0
        %2757 = vmatpush1.msra.mxu0 %v2618
        %2758 = vmatprep.subr.mxu0 0.0
        %2759 = vmatpush1.msra.mxu0 %v2619
        %2760 = vmatprep.subr.mxu0 0.0
        %2761 = vmatpush1.msra.mxu0 %v2620
        %2762 = vmatprep.subr.mxu0 0.0
        %2763 = vmatpush1.msra.mxu0 %v2621
        %2764 = vmatprep.subr.mxu0 0.0
        %2765 = vmatpush1.msra.mxu0 %v2622
        %2766 = vmatprep.subr.mxu0 0.0
        %2767 = vmatpush1.msra.mxu0 %v2623
        %2768 = vmatprep.subr.mxu0 0.0
        %2769 = vmatpush1.msra.mxu0 %v2624
        %2770 = vmatprep.subr.mxu0 0.0
        %2771 = vmatpush1.msra.mxu0 %v2625
        %2772 = vmatprep.subr.mxu0 0.0
        %2773 = vmatpush1.msra.mxu0 %v2626
        %2774 = vmatprep.subr.mxu0 0.0
        %2775 = vmatpush1.msra.mxu0 %v2627
        %2776 = vmatprep.subr.mxu0 0.0
        %2777 = vmatpush1.msra.mxu0 %v2628
        %2778 = vmatprep.subr.mxu0 0.0
        %2779 = vmatpush1.msra.mxu0 %v2629
        %2780 = vmatprep.subr.mxu0 0.0
        %2781 = vmatpush1.msra.mxu0 %v2630
        %2782 = vmatprep.subr.mxu0 0.0
        %2783 = vmatpush1.msra.mxu0 %v2631
        %2784 = vmatprep.subr.mxu0 0.0
        %2785 = vmatpush1.msra.mxu0 %v2632
        %2786 = vmatprep.subr.mxu0 0.0
        %2787 = vmatpush1.msra.mxu0 %v2633
        %2788 = vmatprep.subr.mxu0 0.0
        %2789 = vmatpush1.msra.mxu0 %v2634
        %2790 = vmatprep.subr.mxu0 0.0
        %2791 = vmatpush1.msra.mxu0 %v2635
        %2792 = vmatprep.subr.mxu0 0.0
        %2793 = vmatpush1.msra.mxu0 %v2636
        %2794 = vmatprep.subr.mxu0 0.0
        %2795 = vmatpush1.msra.mxu0 %v2637
        %2796 = vmatprep.mubr.f32.mxu0 %v2572
        %2797 = vmatmul.mubr.f32.gmra.mrb[0].mxu0 %v2570
        %v2798 = vpop.f32.mrb[0].mxu0
        %v2799 = vadd.f32 %v2724, %v2798
        %v2800 = vpop.f32.mrb[0].mxu0
        %2801 = vmatprep.mubr.f32.mxu0 %v2573
        %2802 = vmatmul.mubr.f32.gmra.mrb[0].mxu0 %v2571
        %v2803 = vpop.f32.mrb[0].mxu0
        %v2804 = vadd.f32 %v2729, %v2803
        %v2805 = vpop.f32.mrb[0].mxu0
        %2806 = vdwg.mxu0
        %2807 = vmatprep.subr.mxu0 0.0
        %2808 = vmatpush1.msra.mxu0 %v2638
        %2809 = vmatprep.subr.mxu0 0.0
        %2810 = vmatpush1.msra.mxu0 %v2639
        %2811 = vmatprep.subr.mxu0 0.0
        %2812 = vmatpush1.msra.mxu0 %v2640
        %2813 = vmatprep.subr.mxu0 0.0
        %2814 = vmatpush1.msra.mxu0 %v2641
        %2815 = vmatprep.subr.mxu0 0.0
        %2816 = vmatpush1.msra.mxu0 %v2642
        %2817 = vmatprep.subr.mxu0 0.0
        %2818 = vmatpush1.msra.mxu0 %v2643
        %2819 = vmatprep.subr.mxu0 0.0
        %2820 = vmatpush1.msra.mxu0 %v2644
        %2821 = vmatprep.subr.mxu0 0.0
        %2822 = vmatpush1.msra.mxu0 %v2645
        %2823 = vmatprep.subr.mxu0 0.0
        %2824 = vmatpush1.msra.mxu0 0.0
        %2825 = vmatprep.subr.mxu0 0.0
        %2826 = vmatpush1.msra.mxu0 0.0
        %2827 = vmatprep.subr.mxu0 0.0
        %2828 = vmatpush1.msra.mxu0 0.0
        %2829 = vmatprep.subr.mxu0 0.0
        %2830 = vmatpush1.msra.mxu0 0.0
        %2831 = vmatprep.subr.mxu0 0.0
        %2832 = vmatpush1.msra.mxu0 0.0
        %2833 = vmatprep.subr.mxu0 0.0
        %2834 = vmatpush1.msra.mxu0 0.0
        %2835 = vmatprep.subr.mxu0 0.0
        %2836 = vmatpush1.msra.mxu0 0.0
        %2837 = vmatprep.subr.mxu0 0.0
        %2838 = vmatpush1.msra.mxu0 0.0
        %2839 = vmatprep.subr.mxu0 0.0
        %2840 = vmatpush1.msra.mxu0 0.0
        %2841 = vmatprep.subr.mxu0 0.0
        %2842 = vmatpush1.msra.mxu0 0.0
        %2843 = vmatprep.subr.mxu0 0.0
        %2844 = vmatpush1.msra.mxu0 0.0
        %2845 = vmatprep.subr.mxu0 0.0
        %2846 = vmatpush1.msra.mxu0 0.0
        %2847 = vmatprep.subr.mxu0 0.0
        %2848 = vmatpush1.msra.mxu0 0.0
        %2849 = vmatprep.subr.mxu0 0.0
        %2850 = vmatpush1.msra.mxu0 0.0
        %2851 = vmatprep.subr.mxu0 0.0
        %2852 = vmatpush1.msra.mxu0 0.0
        %2853 = vmatprep.subr.mxu0 0.0
        %2854 = vmatpush1.msra.mxu0 0.0
        %2855 = vmatprep.subr.mxu0 0.0
        %2856 = vmatpush1.msra.mxu0 0.0
        %2857 = vmatprep.subr.mxu0 0.0
        %2858 = vmatpush1.msra.mxu0 0.0
        %2859 = vmatprep.subr.mxu0 0.0
        %2860 = vmatpush1.msra.mxu0 0.0
        %2861 = vmatprep.subr.mxu0 0.0
        %2862 = vmatpush1.msra.mxu0 0.0
        %2863 = vmatprep.subr.mxu0 0.0
        %2864 = vmatpush1.msra.mxu0 0.0
        %2865 = vmatprep.subr.mxu0 0.0
        %2866 = vmatpush1.msra.mxu0 0.0
        %2867 = vmatprep.subr.mxu0 0.0
        %2868 = vmatpush1.msra.mxu0 0.0
        %2869 = vmatprep.subr.mxu0 0.0
        %2870 = vmatpush1.msra.mxu0 0.0
        %2871 = vmatprep.mubr.f32.mxu0 0.0
        %2872 = vmatmul.mubr.f32.gmra.mrb[0].mxu0 %v2653
        %v2873 = vpop.f32.mrb[0].mxu0
        %v2874 = vadd.f32 %v2799, %v2873
        %v2875 = vpop.f32.mrb[0].mxu0
        %2876 = vmatprep.mubr.f32.mxu0 0.0
        %2877 = vmatmul.mubr.f32.gmra.mrb[0].mxu0 %v2655
        %v2878 = vpop.f32.mrb[0].mxu0
        %v2879 = vadd.f32 %v2804, %v2878
        %v2880 = vpop.f32.mrb[0].mxu0
        %2881 = vdwg.mxu0
        %v2882 = vmax.f32 %v2874, 0.0
        %v2883 = vmax.f32 %v2879, 0.0
        %v2884 = vadd.f32 %v1367, %v1872
        %v2885 = vadd.f32 %v1368, %v1873
        %v2886 = vadd.f32 %v2884, %v2377
        %v2887 = vadd.f32 %v2885, %v2378
        %v2888 = vadd.f32 %v2886, %v2882
        %v2889 = vadd.f32 %v2887, %v2883
        %2890 = vrot.lane.b32.xlu0 %v2888, 64
        %v2891 = vpop.permute.xlu0 %2890
        %2892 = vrot.lane.b32.xlu0 %v2889, 64
        %v2893 = vpop.permute.xlu0 %2892
        %v2894 = vmax.f32 %v2888, %v2891
        %v2895 = vmax.f32 %v2889, %v2893
        %2896 = vrot.lane.b32.xlu0 %v2894, 32
        %v2897 = vpop.permute.xlu0 %2896
        %2898 = vrot.lane.b32.xlu0 %v2895, 32
        %v2899 = vpop.permute.xlu0 %2898
        %v2900 = vmax.f32 %v2894, %v2897
        %v2901 = vmax.f32 %v2895, %v2899
        %2902 = vrot.lane.b32.xlu0 %v2900, 16
        %v2903 = vpop.permute.xlu0 %2902
        %2904 = vrot.lane.b32.xlu0 %v2901, 16
        %v2905 = vpop.permute.xlu0 %2904
        %v2906 = vmax.f32 %v2900, %v2903
        %v2907 = vmax.f32 %v2901, %v2905
        %2908 = vrot.lane.b32.xlu0 %v2906, 8
        %v2909 = vpop.permute.xlu0 %2908
        %2910 = vrot.lane.b32.xlu0 %v2907, 8
        %v2911 = vpop.permute.xlu0 %2910
        %v2912 = vmax.f32 %v2906, %v2909
        %v2913 = vmax.f32 %v2907, %v2911
        %v2914 = vadd.f32 %v2912, %v2913
        %v2915 = vrot.slane %v2914, 4
        %v2916 = vadd.f32 %v2914, %v2915
        %v2917 = vrot.slane %v2916, 2
        %v2918 = vadd.f32 %v2916, %v2917
        %v2919 = vrot.slane %v2918, 1
        %v2920 = vadd.f32 %v2918, %v2919
        %v2921 = vmax.f32 %v2888, %v2889
        %v2922 = vrot.slane %v2921, 4
        %v2923 = vmax.f32 %v2921, %v2922
        %v2924 = vrot.slane %v2923, 2
        %v2925 = vmax.f32 %v2923, %v2924
        %v2926 = vrot.slane %v2925, 1
        %v2927 = vmax.f32 %v2925, %v2926
        %2928 = vrot.lane.b32.xlu0 %v2927, 64
        %v2929 = vpop.permute.xlu0 %2928
        %v2930 = vadd.f32 %v2927, %v2929
        %2931 = vrot.lane.b32.xlu0 %v2930, 32
        %v2932 = vpop.permute.xlu0 %2931
        %v2933 = vadd.f32 %v2930, %v2932
        %2934 = vrot.lane.b32.xlu0 %v2933, 16
        %v2935 = vpop.permute.xlu0 %2934
        %v2936 = vadd.f32 %v2933, %v2935
        %2937 = vrot.lane.b32.xlu0 %v2936, 8
        %v2938 = vpop.permute.xlu0 %2937
        %v2939 = vadd.f32 %v2936, %v2938
        %v2940 = vadd.f32 %v2920, %v2939
        %v2941 = vmul.f32 %v2940, 0.03125
        %v2942 = vlaneseq
        %v2943 = vshrl.u32 %v2942, 7
        %v2944 = vsub.s32 0, %v2943
        %v2945 = vrot.slane %v2941, %v2944
        %v2946 = vld [vmem:[#allocation10] sm:$0xff]
        %v2947 = vld [vmem:[#allocation10 + $0x8] sm:$0xff]
        %v2948 = vld [vmem:[#allocation10 + $0x10] sm:$0xff]
        %v2949 = vld [vmem:[#allocation10 + $0x18] sm:$0xff]
        %v2950 = vld [vmem:[#allocation10 + $0x20] sm:$0xff]
        %v2951 = vld [vmem:[#allocation10 + $0x28] sm:$0xff]
        %v2952 = vld [vmem:[#allocation10 + $0x30] sm:$0xff]
        %v2953 = vld [vmem:[#allocation10 + $0x38] sm:$0xff]
        %v2954 = vld [vmem:[#allocation10 + $0x40] sm:$0xff]
        %v2955 = vld [vmem:[#allocation10 + $0x48] sm:$0xff]
        %v2956 = vld [vmem:[#allocation10 + $0x50] sm:$0xff]
        %v2957 = vld [vmem:[#allocation10 + $0x58] sm:$0xff]
        %v2958 = vld [vmem:[#allocation10 + $0x60] sm:$0xff]
        %v2959 = vld [vmem:[#allocation10 + $0x68] sm:$0xff]
        %v2960 = vld [vmem:[#allocation10 + $0x70] sm:$0xff]
        %v2961 = vld [vmem:[#allocation10 + $0x78] sm:$0xff]
        %v2962 = vld [vmem:[%s18] sm:$0x1]
        %v2964 = vlaneseq
        %v2965 = vshrl.u32 %v2964, 7
        %v2966 = vsub.s32 0, %v2965
        %v2967 = vrot.slane %v2962, %v2966
        %2969 = vmatprep.subr.mxu0 0.0
        %2970 = vmatpush1.msra.mxu0 %v2946
        %2971 = vmatprep.subr.mxu0 0.0
        %2972 = vmatpush1.msra.mxu0 %v2947
        %2973 = vmatprep.subr.mxu0 0.0
        %2974 = vmatpush1.msra.mxu0 %v2948
        %2975 = vmatprep.subr.mxu0 0.0
        %2976 = vmatpush1.msra.mxu0 %v2949
        %2977 = vmatprep.subr.mxu0 0.0
        %2978 = vmatpush1.msra.mxu0 %v2950
        %2979 = vmatprep.subr.mxu0 0.0
        %2980 = vmatpush1.msra.mxu0 %v2951
        %2981 = vmatprep.subr.mxu0 0.0
        %2982 = vmatpush1.msra.mxu0 %v2952
        %2983 = vmatprep.subr.mxu0 0.0
        %2984 = vmatpush1.msra.mxu0 %v2953
        %2985 = vmatprep.subr.mxu0 0.0
        %2986 = vmatpush1.msra.mxu0 %v2954
        %2987 = vmatprep.subr.mxu0 0.0
        %2988 = vmatpush1.msra.mxu0 %v2955
        %2989 = vmatprep.subr.mxu0 0.0
        %2990 = vmatpush1.msra.mxu0 %v2956
        %2991 = vmatprep.subr.mxu0 0.0
        %2992 = vmatpush1.msra.mxu0 %v2957
        %2993 = vmatprep.subr.mxu0 0.0
        %2994 = vmatpush1.msra.mxu0 %v2958
        %2995 = vmatprep.subr.mxu0 0.0
        %2996 = vmatpush1.msra.mxu0 %v2959
        %2997 = vmatprep.subr.mxu0 0.0
        %2998 = vmatpush1.msra.mxu0 %v2960
        %2999 = vmatprep.subr.mxu0 0.0
        %3000 = vmatpush1.msra.mxu0 %v2961
        %3001 = vmatprep.subr.mxu0 0.0
        %3002 = vmatpush1.msra.mxu0 0.0
        %3003 = vmatprep.subr.mxu0 0.0
        %3004 = vmatpush1.msra.mxu0 0.0
        %3005 = vmatprep.subr.mxu0 0.0
        %3006 = vmatpush1.msra.mxu0 0.0
        %3007 = vmatprep.subr.mxu0 0.0
        %3008 = vmatpush1.msra.mxu0 0.0
        %3009 = vmatprep.subr.mxu0 0.0
        %3010 = vmatpush1.msra.mxu0 0.0
        %3011 = vmatprep.subr.mxu0 0.0
        %3012 = vmatpush1.msra.mxu0 0.0
        %3013 = vmatprep.subr.mxu0 0.0
        %3014 = vmatpush1.msra.mxu0 0.0
        %3015 = vmatprep.subr.mxu0 0.0
        %3016 = vmatpush1.msra.mxu0 0.0
        %3017 = vmatprep.subr.mxu0 0.0
        %3018 = vmatpush1.msra.mxu0 0.0
        %3019 = vmatprep.subr.mxu0 0.0
        %3020 = vmatpush1.msra.mxu0 0.0
        %3021 = vmatprep.subr.mxu0 0.0
        %3022 = vmatpush1.msra.mxu0 0.0
        %3023 = vmatprep.subr.mxu0 0.0
        %3024 = vmatpush1.msra.mxu0 0.0
        %3025 = vmatprep.subr.mxu0 0.0
        %3026 = vmatpush1.msra.mxu0 0.0
        %3027 = vmatprep.subr.mxu0 0.0
        %3028 = vmatpush1.msra.mxu0 0.0
        %3029 = vmatprep.subr.mxu0 0.0
        %3030 = vmatpush1.msra.mxu0 0.0
        %3031 = vmatprep.subr.mxu0 0.0
        %3032 = vmatpush1.msra.mxu0 0.0
        %3033 = vmatprep.mubr.f32.mxu0 0.0
        %3034 = vmatmul.mubr.f32.gmra.mrb[0].mxu0 %v2945
        %v3035 = vpop.f32.mrb[0].mxu0
        %v3036 = vadd.f32 %v2967, %v3035
        %v3037 = vpop.f32.mrb[0].mxu0
        %3038 = vdwg.mxu0
        %v3039 = vsub.f32 0.0, %v3036
        %v3040 = vmul.f32 %v3039, 1.442695
        %v3041 = vpow.pop %v3040
        %v3042 = vadd.f32 %v3041, 1.0
        %v3043 = vrcp.pop %v3042
        %v3044 = vmul.f32 1.0, %v3043
        %v3045 = vlaneseq
        %v3046 = vshrl.u32 %v3045, 7
        %v3047 = vsub.s32 0, %v3046
        %v3048 = vrot.slane %v3044, %v3047
        %v3049 = vmul.f32 %v2888, %v3048
        %v3050 = vmul.f32 %v2889, %v3048
        %3051 = vst [vmem:[#allocation2] sm:$0xff] 0.0
        %3052 = vst.msk [vmem:[#allocation2 + $0x8] sm:$0xff] %vm956, 0.0
        %3053 = vst [vmem:[#allocation2 + $0x10] sm:$0xff] 0.0
        %3054 = vst.msk [vmem:[#allocation2 + $0x18] sm:$0xff] %vm956, 0.0
        %3055 = vst [vmem:[#allocation2 + $0x20] sm:$0x3] 0.0
        %3056 = vst.msk [vmem:[#allocation2 + $0x28] sm:$0x3] %vm961, 0.0
        %v3059 = vrot.slane %v3049, 7
        %v3060 = vrot.slane %v3050, 7
        %v3061 = vsel %vm965, %v3059, %v3060
        %3062 = vrot.lane.b32.xlu0 %v3059, 8
        %v3063 = vpop.permute.xlu0 %3062
        %3064 = vrot.lane.b32.xlu0 %v3061, 8
        %v3065 = vpop.permute.xlu0 %3064
        %3066 = vrot.lane.b32.xlu0 %v3060, 8
        %v3067 = vpop.permute.xlu0 %3066
        %vm3071 = vcmask 1047617
        %3072 = vst.msk [vmem:[#allocation2] sm:$0xfe] %vm3071, %v3063
        %vm3073 = vcmask 64513
        %3074 = vst.msk [vmem:[#allocation2 + $0x8] sm:$0xfe] %vm3073, %v3063
        %vm3075 = vcmask 1047616
        %3076 = vst.msk [vmem:[#allocation2 + $0x10] sm:$0xff] %vm3075, %v3065
        %vm3077 = vcmask 64512
        %3078 = vst.msk [vmem:[#allocation2 + $0x18] sm:$0xff] %vm3077, %v3065
        %vm3079 = vcmask 1040448
        %3080 = vst.msk [vmem:[#allocation2 + $0x20] sm:$0x1] %vm3079, %v3067
        %vm3081 = vcmask 57344
        %3082 = vst.msk [vmem:[#allocation2 + $0x28] sm:$0x1] %vm3081, %v3067
        %v3083 = vld [vmem:[#allocation2] sm:$0xff]
        %v3084 = vld [vmem:[#allocation2 + $0x10] sm:$0xff]
        %v3085 = vld [vmem:[#allocation2 + $0x8] sm:$0xff]
        %v3086 = vld [vmem:[#allocation2 + $0x18] sm:$0xff]
        %v3087 = vld [vmem:[#allocation2] sm:$0xfe]
        %v3088 = vld [vmem:[#allocation2 + $0x20] sm:$0x1]
        %v3089 = vld [vmem:[#allocation2 + $0x8] sm:$0xfe]
        %v3090 = vld [vmem:[#allocation2 + $0x28] sm:$0x1]
        %v3091 = vld [vmem:[#allocation2] sm:$0xfc]
        %v3092 = vld [vmem:[#allocation2 + $0x20] sm:$0x3]
        %v3093 = vld [vmem:[#allocation2 + $0x8] sm:$0xfc]
        %v3094 = vld [vmem:[#allocation2 + $0x28] sm:$0x3]
        %3099 = vrot.lane.b32.xlu0 %v3083, 120
        %v3100 = vpop.permute.xlu0 %3099
        %3101 = vrot.lane.b32.xlu0 %v3085, 120
        %v3102 = vpop.permute.xlu0 %3101
        %3103 = vrot.lane.b32.xlu0 %v3084, 120
        %v3104 = vpop.permute.xlu0 %3103
        %3105 = vrot.lane.b32.xlu0 %v3086, 120
        %v3106 = vpop.permute.xlu0 %3105
        %vm3107 = vcmask 982016
        %v3108 = vsel %vm3107, %v3100, %v3102
        %v3109 = vsel %vm3107, %v3104, %v3106
        %3112 = vrot.lane.b32.xlu0 %v3083, 112
        %v3113 = vpop.permute.xlu0 %3112
        %3114 = vrot.lane.b32.xlu0 %v3085, 112
        %v3115 = vpop.permute.xlu0 %3114
        %3116 = vrot.lane.b32.xlu0 %v3084, 112
        %v3117 = vpop.permute.xlu0 %3116
        %3118 = vrot.lane.b32.xlu0 %v3086, 112
        %v3119 = vpop.permute.xlu0 %3118
        %vm3120 = vcmask 916480
        %v3121 = vsel %vm3120, %v3113, %v3115
        %v3122 = vsel %vm3120, %v3117, %v3119
        %v3127 = vrot.slane %v3087, 1
        %v3128 = vrot.slane %v3084, 1
        %v3129 = vsel %vm1006, %v3127, %v3128
        %v3130 = vrot.slane %v3088, 1
        %v3131 = vsel %vm1006, %v3128, %v3130
        %v3136 = vrot.slane %v3089, 1
        %v3137 = vrot.slane %v3086, 1
        %v3138 = vsel %vm1006, %v3136, %v3137
        %v3139 = vrot.slane %v3090, 1
        %v3140 = vsel %vm1006, %v3137, %v3139
        %3141 = vrot.lane.b32.xlu0 %v3129, 120
        %v3142 = vpop.permute.xlu0 %3141
        %3143 = vrot.lane.b32.xlu0 %v3138, 120
        %v3144 = vpop.permute.xlu0 %3143
        %3145 = vrot.lane.b32.xlu0 %v3131, 120
        %v3146 = vpop.permute.xlu0 %3145
        %3147 = vrot.lane.b32.xlu0 %v3140, 120
        %v3148 = vpop.permute.xlu0 %3147
        %v3149 = vsel %vm3107, %v3142, %v3144
        %v3150 = vsel %vm3107, %v3146, %v3148
        %3153 = vrot.lane.b32.xlu0 %v3129, 112
        %v3154 = vpop.permute.xlu0 %3153
        %3155 = vrot.lane.b32.xlu0 %v3138, 112
        %v3156 = vpop.permute.xlu0 %3155
        %3157 = vrot.lane.b32.xlu0 %v3131, 112
        %v3158 = vpop.permute.xlu0 %3157
        %3159 = vrot.lane.b32.xlu0 %v3140, 112
        %v3160 = vpop.permute.xlu0 %3159
        %v3161 = vsel %vm3120, %v3154, %v3156
        %v3162 = vsel %vm3120, %v3158, %v3160
        %v3167 = vrot.slane %v3091, 2
        %v3168 = vrot.slane %v3084, 2
        %v3169 = vsel %vm1032, %v3167, %v3168
        %v3170 = vrot.slane %v3092, 2
        %v3171 = vsel %vm1032, %v3168, %v3170
        %v3176 = vrot.slane %v3093, 2
        %v3177 = vrot.slane %v3086, 2
        %v3178 = vsel %vm1032, %v3176, %v3177
        %v3179 = vrot.slane %v3094, 2
        %v3180 = vsel %vm1032, %v3177, %v3179
        %3181 = vrot.lane.b32.xlu0 %v3169, 120
        %v3182 = vpop.permute.xlu0 %3181
        %3183 = vrot.lane.b32.xlu0 %v3178, 120
        %v3184 = vpop.permute.xlu0 %3183
        %3185 = vrot.lane.b32.xlu0 %v3171, 120
        %v3186 = vpop.permute.xlu0 %3185
        %3187 = vrot.lane.b32.xlu0 %v3180, 120
        %v3188 = vpop.permute.xlu0 %3187
        %v3189 = vsel %vm3107, %v3182, %v3184
        %v3190 = vsel %vm3107, %v3186, %v3188
        %3193 = vrot.lane.b32.xlu0 %v3169, 112
        %v3194 = vpop.permute.xlu0 %3193
        %3195 = vrot.lane.b32.xlu0 %v3178, 112
        %v3196 = vpop.permute.xlu0 %3195
        %3197 = vrot.lane.b32.xlu0 %v3171, 112
        %v3198 = vpop.permute.xlu0 %3197
        %3199 = vrot.lane.b32.xlu0 %v3180, 112
        %v3200 = vpop.permute.xlu0 %3199
        %v3201 = vsel %vm3120, %v3194, %v3196
        %v3202 = vsel %vm3120, %v3198, %v3200
        %v3205 = vld [vmem:[%s19] sm:$0xff]
        %v3206 = vld [vmem:[%s19 + $0x8] sm:$0xff]
        %v3207 = vld [vmem:[%s19 + $0x10] sm:$0xff]
        %v3208 = vld [vmem:[%s19 + $0x18] sm:$0xff]
        %v3209 = vld [vmem:[%s19 + $0x20] sm:$0xff]
        %v3210 = vld [vmem:[%s19 + $0x28] sm:$0xff]
        %v3211 = vld [vmem:[%s19 + $0x30] sm:$0xff]
        %v3212 = vld [vmem:[%s19 + $0x38] sm:$0xff]
        %v3213 = vld [vmem:[%s19 + $0x40] sm:$0xff]
        %v3214 = vld [vmem:[%s19 + $0x48] sm:$0xff]
        %v3215 = vld [vmem:[%s19 + $0x50] sm:$0xff]
        %v3216 = vld [vmem:[%s19 + $0x58] sm:$0xff]
        %v3217 = vld [vmem:[%s19 + $0x60] sm:$0xff]
        %v3218 = vld [vmem:[%s19 + $0x68] sm:$0xff]
        %v3219 = vld [vmem:[%s19 + $0x70] sm:$0xff]
        %v3220 = vld [vmem:[%s19 + $0x78] sm:$0xff]
        %v3221 = vld [vmem:[%s19 + $0x80] sm:$0xff]
        %v3222 = vld [vmem:[%s19 + $0x88] sm:$0xff]
        %v3223 = vld [vmem:[%s19 + $0x90] sm:$0xff]
        %v3224 = vld [vmem:[%s19 + $0x98] sm:$0xff]
        %v3225 = vld [vmem:[%s19 + $0xa0] sm:$0xff]
        %v3226 = vld [vmem:[%s19 + $0xa8] sm:$0xff]
        %v3227 = vld [vmem:[%s19 + $0xb0] sm:$0xff]
        %v3228 = vld [vmem:[%s19 + $0xb8] sm:$0xff]
        %v3229 = vld [vmem:[%s19 + $0xc0] sm:$0xff]
        %v3230 = vld [vmem:[%s19 + $0xc8] sm:$0xff]
        %v3231 = vld [vmem:[%s19 + $0xd0] sm:$0xff]
        %v3232 = vld [vmem:[%s19 + $0xd8] sm:$0xff]
        %v3233 = vld [vmem:[%s19 + $0xe0] sm:$0xff]
        %v3234 = vld [vmem:[%s19 + $0xe8] sm:$0xff]
        %v3235 = vld [vmem:[%s19 + $0xf0] sm:$0xff]
        %v3236 = vld [vmem:[%s19 + $0xf8] sm:$0xff]
        %v3237 = vld [vmem:[%s19 + $0x100] sm:$0xff]
        %v3238 = vld [vmem:[%s19 + $0x108] sm:$0xff]
        %v3239 = vld [vmem:[%s19 + $0x110] sm:$0xff]
        %v3240 = vld [vmem:[%s19 + $0x118] sm:$0xff]
        %v3241 = vld [vmem:[%s19 + $0x120] sm:$0xff]
        %v3242 = vld [vmem:[%s19 + $0x128] sm:$0xff]
        %v3243 = vld [vmem:[%s19 + $0x130] sm:$0xff]
        %v3244 = vld [vmem:[%s19 + $0x138] sm:$0xff]
        %v3245 = vld [vmem:[%s19 + $0x140] sm:$0xff]
        %v3246 = vld [vmem:[%s19 + $0x148] sm:$0xff]
        %v3247 = vld [vmem:[%s19 + $0x150] sm:$0xff]
        %v3248 = vld [vmem:[%s19 + $0x158] sm:$0xff]
        %v3249 = vld [vmem:[%s19 + $0x160] sm:$0xff]
        %v3250 = vld [vmem:[%s19 + $0x168] sm:$0xff]
        %v3251 = vld [vmem:[%s19 + $0x170] sm:$0xff]
        %v3252 = vld [vmem:[%s19 + $0x178] sm:$0xff]
        %v3253 = vld [vmem:[%s19 + $0x180] sm:$0xff]
        %v3254 = vld [vmem:[%s19 + $0x188] sm:$0xff]
        %v3255 = vld [vmem:[%s19 + $0x190] sm:$0xff]
        %v3256 = vld [vmem:[%s19 + $0x198] sm:$0xff]
        %v3257 = vld [vmem:[%s19 + $0x1a0] sm:$0xff]
        %v3258 = vld [vmem:[%s19 + $0x1a8] sm:$0xff]
        %v3259 = vld [vmem:[%s19 + $0x1b0] sm:$0xff]
        %v3260 = vld [vmem:[%s19 + $0x1b8] sm:$0xff]
        %v3261 = vld [vmem:[%s19 + $0x1c0] sm:$0xff]
        %v3262 = vld [vmem:[%s19 + $0x1c8] sm:$0xff]
        %v3263 = vld [vmem:[%s19 + $0x1d0] sm:$0xff]
        %v3264 = vld [vmem:[%s19 + $0x1d8] sm:$0xff]
        %v3265 = vld [vmem:[%s19 + $0x1e0] sm:$0xff]
        %v3266 = vld [vmem:[%s19 + $0x1e8] sm:$0xff]
        %v3267 = vld [vmem:[%s19 + $0x1f0] sm:$0xff]
        %v3268 = vld [vmem:[%s19 + $0x1f8] sm:$0xff]
        %v3269 = vld [vmem:[%s19 + $0x200] sm:$0xff]
        %v3270 = vld [vmem:[%s19 + $0x208] sm:$0xff]
        %v3271 = vld [vmem:[%s19 + $0x210] sm:$0xff]
        %v3272 = vld [vmem:[%s19 + $0x218] sm:$0xff]
        %v3273 = vld [vmem:[%s19 + $0x220] sm:$0xff]
        %v3274 = vld [vmem:[%s19 + $0x228] sm:$0xff]
        %v3275 = vld [vmem:[%s19 + $0x230] sm:$0xff]
        %v3276 = vld [vmem:[%s19 + $0x238] sm:$0xff]
        %v3277 = vld [vmem:[%s19 + $0x240] sm:$0xff]
        %v3278 = vld [vmem:[%s19 + $0x248] sm:$0xff]
        %v3279 = vld [vmem:[%s19 + $0x250] sm:$0xff]
        %v3280 = vld [vmem:[%s19 + $0x258] sm:$0xff]
        %v3281 = vld [vmem:[%s19 + $0x260] sm:$0xff]
        %v3282 = vld [vmem:[%s19 + $0x268] sm:$0xff]
        %v3283 = vld [vmem:[%s19 + $0x270] sm:$0xff]
        %v3284 = vld [vmem:[%s19 + $0x278] sm:$0xff]
        %v3285 = vld [vmem:[%s19 + $0x280] sm:$0xff]
        %v3286 = vld [vmem:[%s19 + $0x288] sm:$0xff]
        %v3287 = vld [vmem:[%s19 + $0x290] sm:$0xff]
        %v3288 = vld [vmem:[%s19 + $0x298] sm:$0xff]
        %v3289 = vld [vmem:[%s19 + $0x2a0] sm:$0xff]
        %v3290 = vld [vmem:[%s19 + $0x2a8] sm:$0xff]
        %v3291 = vld [vmem:[%s19 + $0x2b0] sm:$0xff]
        %v3292 = vld [vmem:[%s19 + $0x2b8] sm:$0xff]
        %v3293 = vld [vmem:[%s19 + $0x2c0] sm:$0xff]
        %v3294 = vld [vmem:[%s19 + $0x2c8] sm:$0xff]
        %v3295 = vld [vmem:[%s19 + $0x2d0] sm:$0xff]
        %v3296 = vld [vmem:[%s19 + $0x2d8] sm:$0xff]
        %v3297 = vld [vmem:[%s19 + $0x2e0] sm:$0xff]
        %v3298 = vld [vmem:[%s19 + $0x2e8] sm:$0xff]
        %v3299 = vld [vmem:[%s19 + $0x2f0] sm:$0xff]
        %v3300 = vld [vmem:[%s19 + $0x2f8] sm:$0xff]
        %v3301 = vld [vmem:[%s19 + $0x300] sm:$0xff]
        %v3302 = vld [vmem:[%s19 + $0x308] sm:$0xff]
        %v3303 = vld [vmem:[%s19 + $0x310] sm:$0xff]
        %v3304 = vld [vmem:[%s19 + $0x318] sm:$0xff]
        %v3305 = vld [vmem:[%s19 + $0x320] sm:$0xff]
        %v3306 = vld [vmem:[%s19 + $0x328] sm:$0xff]
        %v3307 = vld [vmem:[%s19 + $0x330] sm:$0xff]
        %v3308 = vld [vmem:[%s19 + $0x338] sm:$0xff]
        %v3309 = vld [vmem:[%s19 + $0x340] sm:$0xff]
        %v3310 = vld [vmem:[%s19 + $0x348] sm:$0xff]
        %v3311 = vld [vmem:[%s19 + $0x350] sm:$0xff]
        %v3312 = vld [vmem:[%s19 + $0x358] sm:$0xff]
        %v3313 = vld [vmem:[%s19 + $0x360] sm:$0xff]
        %v3314 = vld [vmem:[%s19 + $0x368] sm:$0xff]
        %v3315 = vld [vmem:[%s19 + $0x370] sm:$0xff]
        %v3316 = vld [vmem:[%s19 + $0x378] sm:$0xff]
        %v3317 = vld [vmem:[%s19 + $0x380] sm:$0xff]
        %v3318 = vld [vmem:[%s19 + $0x388] sm:$0xff]
        %v3319 = vld [vmem:[%s19 + $0x390] sm:$0xff]
        %v3320 = vld [vmem:[%s19 + $0x398] sm:$0xff]
        %v3321 = vld [vmem:[%s19 + $0x3a0] sm:$0xff]
        %v3322 = vld [vmem:[%s19 + $0x3a8] sm:$0xff]
        %v3323 = vld [vmem:[%s19 + $0x3b0] sm:$0xff]
        %v3324 = vld [vmem:[%s19 + $0x3b8] sm:$0xff]
        %v3325 = vld [vmem:[%s19 + $0x3c0] sm:$0xff]
        %v3326 = vld [vmem:[%s19 + $0x3c8] sm:$0xff]
        %v3327 = vld [vmem:[%s19 + $0x3d0] sm:$0xff]
        %v3328 = vld [vmem:[%s19 + $0x3d8] sm:$0xff]
        %v3329 = vld [vmem:[%s19 + $0x3e0] sm:$0xff]
        %v3330 = vld [vmem:[%s19 + $0x3e8] sm:$0xff]
        %v3331 = vld [vmem:[%s19 + $0x3f0] sm:$0xff]
        %v3332 = vld [vmem:[%s19 + $0x3f8] sm:$0xff]
        %v3333 = vld [vmem:[%s19 + $0x400] sm:$0xff]
        %v3334 = vld [vmem:[%s19 + $0x408] sm:$0xff]
        %v3335 = vld [vmem:[%s19 + $0x410] sm:$0xff]
        %v3336 = vld [vmem:[%s19 + $0x418] sm:$0xff]
        %v3337 = vld [vmem:[%s19 + $0x420] sm:$0xff]
        %v3338 = vld [vmem:[%s19 + $0x428] sm:$0xff]
        %v3339 = vld [vmem:[%s19 + $0x430] sm:$0xff]
        %v3340 = vld [vmem:[%s19 + $0x438] sm:$0xff]
        %v3341 = vld [vmem:[%s19 + $0x440] sm:$0xff]
        %v3342 = vld [vmem:[%s19 + $0x448] sm:$0xff]
        %v3343 = vld [vmem:[%s19 + $0x450] sm:$0xff]
        %v3344 = vld [vmem:[%s19 + $0x458] sm:$0xff]
        %v3345 = vld [vmem:[%s19 + $0x460] sm:$0xff]
        %v3346 = vld [vmem:[%s19 + $0x468] sm:$0xff]
        %v3347 = vld [vmem:[%s19 + $0x470] sm:$0xff]
        %v3348 = vld [vmem:[%s19 + $0x478] sm:$0xff]
        %v3349 = vld [vmem:[%s20] sm:$0x1]
        %v3351 = vlaneseq
        %v3352 = vshrl.u32 %v3351, 7
        %v3353 = vsub.s32 0, %v3352
        %v3354 = vrot.slane %v3349, %v3353
        %3356 = vmatprep.subr.mxu0 0.0
        %3357 = vmatpush1.msra.mxu0 %v3205
        %3358 = vmatprep.subr.mxu0 0.0
        %3359 = vmatpush1.msra.mxu0 %v3206
        %3360 = vmatprep.subr.mxu0 0.0
        %3361 = vmatpush1.msra.mxu0 %v3207
        %3362 = vmatprep.subr.mxu0 0.0
        %3363 = vmatpush1.msra.mxu0 %v3208
        %3364 = vmatprep.subr.mxu0 0.0
        %3365 = vmatpush1.msra.mxu0 %v3209
        %3366 = vmatprep.subr.mxu0 0.0
        %3367 = vmatpush1.msra.mxu0 %v3210
        %3368 = vmatprep.subr.mxu0 0.0
        %3369 = vmatpush1.msra.mxu0 %v3211
        %3370 = vmatprep.subr.mxu0 0.0
        %3371 = vmatpush1.msra.mxu0 %v3212
        %3372 = vmatprep.subr.mxu0 0.0
        %3373 = vmatpush1.msra.mxu0 %v3213
        %3374 = vmatprep.subr.mxu0 0.0
        %3375 = vmatpush1.msra.mxu0 %v3214
        %3376 = vmatprep.subr.mxu0 0.0
        %3377 = vmatpush1.msra.mxu0 %v3215
        %3378 = vmatprep.subr.mxu0 0.0
        %3379 = vmatpush1.msra.mxu0 %v3216
        %3380 = vmatprep.subr.mxu0 0.0
        %3381 = vmatpush1.msra.mxu0 %v3217
        %3382 = vmatprep.subr.mxu0 0.0
        %3383 = vmatpush1.msra.mxu0 %v3218
        %3384 = vmatprep.subr.mxu0 0.0
        %3385 = vmatpush1.msra.mxu0 %v3219
        %3386 = vmatprep.subr.mxu0 0.0
        %3387 = vmatpush1.msra.mxu0 %v3220
        %3388 = vmatprep.subr.mxu0 0.0
        %3389 = vmatpush1.msra.mxu0 %v3221
        %3390 = vmatprep.subr.mxu0 0.0
        %3391 = vmatpush1.msra.mxu0 %v3222
        %3392 = vmatprep.subr.mxu0 0.0
        %3393 = vmatpush1.msra.mxu0 %v3223
        %3394 = vmatprep.subr.mxu0 0.0
        %3395 = vmatpush1.msra.mxu0 %v3224
        %3396 = vmatprep.subr.mxu0 0.0
        %3397 = vmatpush1.msra.mxu0 %v3225
        %3398 = vmatprep.subr.mxu0 0.0
        %3399 = vmatpush1.msra.mxu0 %v3226
        %3400 = vmatprep.subr.mxu0 0.0
        %3401 = vmatpush1.msra.mxu0 %v3227
        %3402 = vmatprep.subr.mxu0 0.0
        %3403 = vmatpush1.msra.mxu0 %v3228
        %3404 = vmatprep.subr.mxu0 0.0
        %3405 = vmatpush1.msra.mxu0 %v3229
        %3406 = vmatprep.subr.mxu0 0.0
        %3407 = vmatpush1.msra.mxu0 %v3230
        %3408 = vmatprep.subr.mxu0 0.0
        %3409 = vmatpush1.msra.mxu0 %v3231
        %3410 = vmatprep.subr.mxu0 0.0
        %3411 = vmatpush1.msra.mxu0 %v3232
        %3412 = vmatprep.subr.mxu0 0.0
        %3413 = vmatpush1.msra.mxu0 %v3233
        %3414 = vmatprep.subr.mxu0 0.0
        %3415 = vmatpush1.msra.mxu0 %v3234
        %3416 = vmatprep.subr.mxu0 0.0
        %3417 = vmatpush1.msra.mxu0 %v3235
        %3418 = vmatprep.subr.mxu0 0.0
        %3419 = vmatpush1.msra.mxu0 %v3236
        %3420 = vmatprep.mubr.f32.mxu0 %v3108
        %3421 = vmatmul.mubr.f32.gmra.mrb[0].mxu0 %v3083
        %v3422 = vpop.f32.mrb[0].mxu0
        %v3423 = vadd.f32 %v3354, %v3422
        %v3424 = vpop.f32.mrb[0].mxu0
        %3425 = vmatprep.mubr.f32.mxu0 %v3109
        %3426 = vmatmul.mubr.f32.gmra.mrb[0].mxu0 %v3084
        %v3427 = vpop.f32.mrb[0].mxu0
        %v3428 = vadd.f32 %v3354, %v3427
        %v3429 = vpop.f32.mrb[0].mxu0
        %3430 = vdwg.mxu0
        %3431 = vmatprep.subr.mxu0 0.0
        %3432 = vmatpush1.msra.mxu0 %v3237
        %3433 = vmatprep.subr.mxu0 0.0
        %3434 = vmatpush1.msra.mxu0 %v3238
        %3435 = vmatprep.subr.mxu0 0.0
        %3436 = vmatpush1.msra.mxu0 %v3239
        %3437 = vmatprep.subr.mxu0 0.0
        %3438 = vmatpush1.msra.mxu0 %v3240
        %3439 = vmatprep.subr.mxu0 0.0
        %3440 = vmatpush1.msra.mxu0 %v3241
        %3441 = vmatprep.subr.mxu0 0.0
        %3442 = vmatpush1.msra.mxu0 %v3242
        %3443 = vmatprep.subr.mxu0 0.0
        %3444 = vmatpush1.msra.mxu0 %v3243
        %3445 = vmatprep.subr.mxu0 0.0
        %3446 = vmatpush1.msra.mxu0 %v3244
        %3447 = vmatprep.subr.mxu0 0.0
        %3448 = vmatpush1.msra.mxu0 %v3245
        %3449 = vmatprep.subr.mxu0 0.0
        %3450 = vmatpush1.msra.mxu0 %v3246
        %3451 = vmatprep.subr.mxu0 0.0
        %3452 = vmatpush1.msra.mxu0 %v3247
        %3453 = vmatprep.subr.mxu0 0.0
        %3454 = vmatpush1.msra.mxu0 %v3248
        %3455 = vmatprep.subr.mxu0 0.0
        %3456 = vmatpush1.msra.mxu0 %v3249
        %3457 = vmatprep.subr.mxu0 0.0
        %3458 = vmatpush1.msra.mxu0 %v3250
        %3459 = vmatprep.subr.mxu0 0.0
        %3460 = vmatpush1.msra.mxu0 %v3251
        %3461 = vmatprep.subr.mxu0 0.0
        %3462 = vmatpush1.msra.mxu0 %v3252
        %3463 = vmatprep.subr.mxu0 0.0
        %3464 = vmatpush1.msra.mxu0 %v3253
        %3465 = vmatprep.subr.mxu0 0.0
        %3466 = vmatpush1.msra.mxu0 %v3254
        %3467 = vmatprep.subr.mxu0 0.0
        %3468 = vmatpush1.msra.mxu0 %v3255
        %3469 = vmatprep.subr.mxu0 0.0
        %3470 = vmatpush1.msra.mxu0 %v3256
        %3471 = vmatprep.subr.mxu0 0.0
        %3472 = vmatpush1.msra.mxu0 %v3257
        %3473 = vmatprep.subr.mxu0 0.0
        %3474 = vmatpush1.msra.mxu0 %v3258
        %3475 = vmatprep.subr.mxu0 0.0
        %3476 = vmatpush1.msra.mxu0 %v3259
        %3477 = vmatprep.subr.mxu0 0.0
        %3478 = vmatpush1.msra.mxu0 %v3260
        %3479 = vmatprep.subr.mxu0 0.0
        %3480 = vmatpush1.msra.mxu0 %v3261
        %3481 = vmatprep.subr.mxu0 0.0
        %3482 = vmatpush1.msra.mxu0 %v3262
        %3483 = vmatprep.subr.mxu0 0.0
        %3484 = vmatpush1.msra.mxu0 %v3263
        %3485 = vmatprep.subr.mxu0 0.0
        %3486 = vmatpush1.msra.mxu0 %v3264
        %3487 = vmatprep.subr.mxu0 0.0
        %3488 = vmatpush1.msra.mxu0 %v3265
        %3489 = vmatprep.subr.mxu0 0.0
        %3490 = vmatpush1.msra.mxu0 %v3266
        %3491 = vmatprep.subr.mxu0 0.0
        %3492 = vmatpush1.msra.mxu0 %v3267
        %3493 = vmatprep.subr.mxu0 0.0
        %3494 = vmatpush1.msra.mxu0 %v3268
        %3495 = vmatprep.mubr.f32.mxu0 %v3129
        %3496 = vmatmul.mubr.f32.gmra.mrb[0].mxu0 %v3121
        %v3497 = vpop.f32.mrb[0].mxu0
        %v3498 = vadd.f32 %v3423, %v3497
        %v3499 = vpop.f32.mrb[0].mxu0
        %3500 = vmatprep.mubr.f32.mxu0 %v3131
        %3501 = vmatmul.mubr.f32.gmra.mrb[0].mxu0 %v3122
        %v3502 = vpop.f32.mrb[0].mxu0
        %v3503 = vadd.f32 %v3428, %v3502
        %v3504 = vpop.f32.mrb[0].mxu0
        %3505 = vdwg.mxu0
        %3506 = vmatprep.subr.mxu0 0.0
        %3507 = vmatpush1.msra.mxu0 %v3269
        %3508 = vmatprep.subr.mxu0 0.0
        %3509 = vmatpush1.msra.mxu0 %v3270
        %3510 = vmatprep.subr.mxu0 0.0
        %3511 = vmatpush1.msra.mxu0 %v3271
        %3512 = vmatprep.subr.mxu0 0.0
        %3513 = vmatpush1.msra.mxu0 %v3272
        %3514 = vmatprep.subr.mxu0 0.0
        %3515 = vmatpush1.msra.mxu0 %v3273
        %3516 = vmatprep.subr.mxu0 0.0
        %3517 = vmatpush1.msra.mxu0 %v3274
        %3518 = vmatprep.subr.mxu0 0.0
        %3519 = vmatpush1.msra.mxu0 %v3275
        %3520 = vmatprep.subr.mxu0 0.0
        %3521 = vmatpush1.msra.mxu0 %v3276
        %3522 = vmatprep.subr.mxu0 0.0
        %3523 = vmatpush1.msra.mxu0 %v3277
        %3524 = vmatprep.subr.mxu0 0.0
        %3525 = vmatpush1.msra.mxu0 %v3278
        %3526 = vmatprep.subr.mxu0 0.0
        %3527 = vmatpush1.msra.mxu0 %v3279
        %3528 = vmatprep.subr.mxu0 0.0
        %3529 = vmatpush1.msra.mxu0 %v3280
        %3530 = vmatprep.subr.mxu0 0.0
        %3531 = vmatpush1.msra.mxu0 %v3281
        %3532 = vmatprep.subr.mxu0 0.0
        %3533 = vmatpush1.msra.mxu0 %v3282
        %3534 = vmatprep.subr.mxu0 0.0
        %3535 = vmatpush1.msra.mxu0 %v3283
        %3536 = vmatprep.subr.mxu0 0.0
        %3537 = vmatpush1.msra.mxu0 %v3284
        %3538 = vmatprep.subr.mxu0 0.0
        %3539 = vmatpush1.msra.mxu0 %v3285
        %3540 = vmatprep.subr.mxu0 0.0
        %3541 = vmatpush1.msra.mxu0 %v3286
        %3542 = vmatprep.subr.mxu0 0.0
        %3543 = vmatpush1.msra.mxu0 %v3287
        %3544 = vmatprep.subr.mxu0 0.0
        %3545 = vmatpush1.msra.mxu0 %v3288
        %3546 = vmatprep.subr.mxu0 0.0
        %3547 = vmatpush1.msra.mxu0 %v3289
        %3548 = vmatprep.subr.mxu0 0.0
        %3549 = vmatpush1.msra.mxu0 %v3290
        %3550 = vmatprep.subr.mxu0 0.0
        %3551 = vmatpush1.msra.mxu0 %v3291
        %3552 = vmatprep.subr.mxu0 0.0
        %3553 = vmatpush1.msra.mxu0 %v3292
        %3554 = vmatprep.subr.mxu0 0.0
        %3555 = vmatpush1.msra.mxu0 %v3293
        %3556 = vmatprep.subr.mxu0 0.0
        %3557 = vmatpush1.msra.mxu0 %v3294
        %3558 = vmatprep.subr.mxu0 0.0
        %3559 = vmatpush1.msra.mxu0 %v3295
        %3560 = vmatprep.subr.mxu0 0.0
        %3561 = vmatpush1.msra.mxu0 %v3296
        %3562 = vmatprep.subr.mxu0 0.0
        %3563 = vmatpush1.msra.mxu0 %v3297
        %3564 = vmatprep.subr.mxu0 0.0
        %3565 = vmatpush1.msra.mxu0 %v3298
        %3566 = vmatprep.subr.mxu0 0.0
        %3567 = vmatpush1.msra.mxu0 %v3299
        %3568 = vmatprep.subr.mxu0 0.0
        %3569 = vmatpush1.msra.mxu0 %v3300
        %3570 = vmatprep.mubr.f32.mxu0 %v3161
        %3571 = vmatmul.mubr.f32.gmra.mrb[0].mxu0 %v3149
        %v3572 = vpop.f32.mrb[0].mxu0
        %v3573 = vadd.f32 %v3498, %v3572
        %v3574 = vpop.f32.mrb[0].mxu0
        %3575 = vmatprep.mubr.f32.mxu0 %v3162
        %3576 = vmatmul.mubr.f32.gmra.mrb[0].mxu0 %v3150
        %v3577 = vpop.f32.mrb[0].mxu0
        %v3578 = vadd.f32 %v3503, %v3577
        %v3579 = vpop.f32.mrb[0].mxu0
        %3580 = vdwg.mxu0
        %3581 = vmatprep.subr.mxu0 0.0
        %3582 = vmatpush1.msra.mxu0 %v3301
        %3583 = vmatprep.subr.mxu0 0.0
        %3584 = vmatpush1.msra.mxu0 %v3302
        %3585 = vmatprep.subr.mxu0 0.0
        %3586 = vmatpush1.msra.mxu0 %v3303
        %3587 = vmatprep.subr.mxu0 0.0
        %3588 = vmatpush1.msra.mxu0 %v3304
        %3589 = vmatprep.subr.mxu0 0.0
        %3590 = vmatpush1.msra.mxu0 %v3305
        %3591 = vmatprep.subr.mxu0 0.0
        %3592 = vmatpush1.msra.mxu0 %v3306
        %3593 = vmatprep.subr.mxu0 0.0
        %3594 = vmatpush1.msra.mxu0 %v3307
        %3595 = vmatprep.subr.mxu0 0.0
        %3596 = vmatpush1.msra.mxu0 %v3308
        %3597 = vmatprep.subr.mxu0 0.0
        %3598 = vmatpush1.msra.mxu0 %v3309
        %3599 = vmatprep.subr.mxu0 0.0
        %3600 = vmatpush1.msra.mxu0 %v3310
        %3601 = vmatprep.subr.mxu0 0.0
        %3602 = vmatpush1.msra.mxu0 %v3311
        %3603 = vmatprep.subr.mxu0 0.0
        %3604 = vmatpush1.msra.mxu0 %v3312
        %3605 = vmatprep.subr.mxu0 0.0
        %3606 = vmatpush1.msra.mxu0 %v3313
        %3607 = vmatprep.subr.mxu0 0.0
        %3608 = vmatpush1.msra.mxu0 %v3314
        %3609 = vmatprep.subr.mxu0 0.0
        %3610 = vmatpush1.msra.mxu0 %v3315
        %3611 = vmatprep.subr.mxu0 0.0
        %3612 = vmatpush1.msra.mxu0 %v3316
        %3613 = vmatprep.subr.mxu0 0.0
        %3614 = vmatpush1.msra.mxu0 %v3317
        %3615 = vmatprep.subr.mxu0 0.0
        %3616 = vmatpush1.msra.mxu0 %v3318
        %3617 = vmatprep.subr.mxu0 0.0
        %3618 = vmatpush1.msra.mxu0 %v3319
        %3619 = vmatprep.subr.mxu0 0.0
        %3620 = vmatpush1.msra.mxu0 %v3320
        %3621 = vmatprep.subr.mxu0 0.0
        %3622 = vmatpush1.msra.mxu0 %v3321
        %3623 = vmatprep.subr.mxu0 0.0
        %3624 = vmatpush1.msra.mxu0 %v3322
        %3625 = vmatprep.subr.mxu0 0.0
        %3626 = vmatpush1.msra.mxu0 %v3323
        %3627 = vmatprep.subr.mxu0 0.0
        %3628 = vmatpush1.msra.mxu0 %v3324
        %3629 = vmatprep.subr.mxu0 0.0
        %3630 = vmatpush1.msra.mxu0 %v3325
        %3631 = vmatprep.subr.mxu0 0.0
        %3632 = vmatpush1.msra.mxu0 %v3326
        %3633 = vmatprep.subr.mxu0 0.0
        %3634 = vmatpush1.msra.mxu0 %v3327
        %3635 = vmatprep.subr.mxu0 0.0
        %3636 = vmatpush1.msra.mxu0 %v3328
        %3637 = vmatprep.subr.mxu0 0.0
        %3638 = vmatpush1.msra.mxu0 %v3329
        %3639 = vmatprep.subr.mxu0 0.0
        %3640 = vmatpush1.msra.mxu0 %v3330
        %3641 = vmatprep.subr.mxu0 0.0
        %3642 = vmatpush1.msra.mxu0 %v3331
        %3643 = vmatprep.subr.mxu0 0.0
        %3644 = vmatpush1.msra.mxu0 %v3332
        %3645 = vmatprep.mubr.f32.mxu0 %v3189
        %3646 = vmatmul.mubr.f32.gmra.mrb[0].mxu0 %v3169
        %v3647 = vpop.f32.mrb[0].mxu0
        %v3648 = vadd.f32 %v3573, %v3647
        %v3649 = vpop.f32.mrb[0].mxu0
        %3650 = vmatprep.mubr.f32.mxu0 %v3190
        %3651 = vmatmul.mubr.f32.gmra.mrb[0].mxu0 %v3171
        %v3652 = vpop.f32.mrb[0].mxu0
        %v3653 = vadd.f32 %v3578, %v3652
        %v3654 = vpop.f32.mrb[0].mxu0
        %3655 = vdwg.mxu0
        %3656 = vmatprep.subr.mxu0 0.0
        %3657 = vmatpush1.msra.mxu0 %v3333
        %3658 = vmatprep.subr.mxu0 0.0
        %3659 = vmatpush1.msra.mxu0 %v3334
        %3660 = vmatprep.subr.mxu0 0.0
        %3661 = vmatpush1.msra.mxu0 %v3335
        %3662 = vmatprep.subr.mxu0 0.0
        %3663 = vmatpush1.msra.mxu0 %v3336
        %3664 = vmatprep.subr.mxu0 0.0
        %3665 = vmatpush1.msra.mxu0 %v3337
        %3666 = vmatprep.subr.mxu0 0.0
        %3667 = vmatpush1.msra.mxu0 %v3338
        %3668 = vmatprep.subr.mxu0 0.0
        %3669 = vmatpush1.msra.mxu0 %v3339
        %3670 = vmatprep.subr.mxu0 0.0
        %3671 = vmatpush1.msra.mxu0 %v3340
        %3672 = vmatprep.subr.mxu0 0.0
        %3673 = vmatpush1.msra.mxu0 %v3341
        %3674 = vmatprep.subr.mxu0 0.0
        %3675 = vmatpush1.msra.mxu0 %v3342
        %3676 = vmatprep.subr.mxu0 0.0
        %3677 = vmatpush1.msra.mxu0 %v3343
        %3678 = vmatprep.subr.mxu0 0.0
        %3679 = vmatpush1.msra.mxu0 %v3344
        %3680 = vmatprep.subr.mxu0 0.0
        %3681 = vmatpush1.msra.mxu0 %v3345
        %3682 = vmatprep.subr.mxu0 0.0
        %3683 = vmatpush1.msra.mxu0 %v3346
        %3684 = vmatprep.subr.mxu0 0.0
        %3685 = vmatpush1.msra.mxu0 %v3347
        %3686 = vmatprep.subr.mxu0 0.0
        %3687 = vmatpush1.msra.mxu0 %v3348
        %3688 = vmatprep.subr.mxu0 0.0
        %3689 = vmatpush1.msra.mxu0 0.0
        %3690 = vmatprep.subr.mxu0 0.0
        %3691 = vmatpush1.msra.mxu0 0.0
        %3692 = vmatprep.subr.mxu0 0.0
        %3693 = vmatpush1.msra.mxu0 0.0
        %3694 = vmatprep.subr.mxu0 0.0
        %3695 = vmatpush1.msra.mxu0 0.0
        %3696 = vmatprep.subr.mxu0 0.0
        %3697 = vmatpush1.msra.mxu0 0.0
        %3698 = vmatprep.subr.mxu0 0.0
        %3699 = vmatpush1.msra.mxu0 0.0
        %3700 = vmatprep.subr.mxu0 0.0
        %3701 = vmatpush1.msra.mxu0 0.0
        %3702 = vmatprep.subr.mxu0 0.0
        %3703 = vmatpush1.msra.mxu0 0.0
        %3704 = vmatprep.subr.mxu0 0.0
        %3705 = vmatpush1.msra.mxu0 0.0
        %3706 = vmatprep.subr.mxu0 0.0
        %3707 = vmatpush1.msra.mxu0 0.0
        %3708 = vmatprep.subr.mxu0 0.0
        %3709 = vmatpush1.msra.mxu0 0.0
        %3710 = vmatprep.subr.mxu0 0.0
        %3711 = vmatpush1.msra.mxu0 0.0
        %3712 = vmatprep.subr.mxu0 0.0
        %3713 = vmatpush1.msra.mxu0 0.0
        %3714 = vmatprep.subr.mxu0 0.0
        %3715 = vmatpush1.msra.mxu0 0.0
        %3716 = vmatprep.subr.mxu0 0.0
        %3717 = vmatpush1.msra.mxu0 0.0
        %3718 = vmatprep.subr.mxu0 0.0
        %3719 = vmatpush1.msra.mxu0 0.0
        %3720 = vmatprep.mubr.f32.mxu0 0.0
        %3721 = vmatmul.mubr.f32.gmra.mrb[0].mxu0 %v3201
        %v3722 = vpop.f32.mrb[0].mxu0
        %v3723 = vadd.f32 %v3648, %v3722
        %v3724 = vpop.f32.mrb[0].mxu0
        %3725 = vmatprep.mubr.f32.mxu0 0.0
        %3726 = vmatmul.mubr.f32.gmra.mrb[0].mxu0 %v3202
        %v3727 = vpop.f32.mrb[0].mxu0
        %v3728 = vadd.f32 %v3653, %v3727
        %v3729 = vpop.f32.mrb[0].mxu0
        %3730 = vdwg.mxu0
        %v3731 = vmax.f32 %v3723, 0.0
        %v3732 = vmax.f32 %v3728, 0.0
        %v3733 = vadd.f32 %v853, %v3731
        %v3734 = vadd.f32 %v854, %v3732
        %3735 = vst [vmem:[#allocation2] sm:$0xff] 0.0
        %3736 = vst.msk [vmem:[#allocation2 + $0x8] sm:$0xff] %vm956, 0.0
        %3737 = vst [vmem:[#allocation2 + $0x10] sm:$0xff] 0.0
        %3738 = vst.msk [vmem:[#allocation2 + $0x18] sm:$0xff] %vm956, 0.0
        %3739 = vst [vmem:[#allocation2 + $0x20] sm:$0x3] 0.0
        %3740 = vst.msk [vmem:[#allocation2 + $0x28] sm:$0x3] %vm961, 0.0
        %3743 = vrot.lane.b32.xlu0 %v3733, 8
        %v3744 = vpop.permute.xlu0 %3743
        %3745 = vrot.lane.b32.xlu0 %v3734, 8
        %v3746 = vpop.permute.xlu0 %3745
        %3749 = vst.msk [vmem:[#allocation2] sm:$0xff] %vm3075, %v3744
        %3750 = vst.msk [vmem:[#allocation2 + $0x8] sm:$0xff] %vm3077, %v3744
        %3751 = vst.msk [vmem:[#allocation2 + $0x10] sm:$0xff] %vm3075, %v3746
        %3752 = vst.msk [vmem:[#allocation2 + $0x18] sm:$0xff] %vm3077, %v3746
        %v3753 = vld [vmem:[#allocation2] sm:$0xff]
        %v3754 = vld [vmem:[#allocation2 + $0x10] sm:$0xff]
        %v3755 = vld [vmem:[#allocation2 + $0x8] sm:$0xff]
        %v3756 = vld [vmem:[#allocation2 + $0x18] sm:$0xff]
        %3761 = vrot.lane.b32.xlu0 %v3753, 120
        %v3762 = vpop.permute.xlu0 %3761
        %3763 = vrot.lane.b32.xlu0 %v3755, 120
        %v3764 = vpop.permute.xlu0 %3763
        %3765 = vrot.lane.b32.xlu0 %v3754, 120
        %v3766 = vpop.permute.xlu0 %3765
        %3767 = vrot.lane.b32.xlu0 %v3756, 120
        %v3768 = vpop.permute.xlu0 %3767
        %v3769 = vsel %vm3107, %v3762, %v3764
        %v3770 = vsel %vm3107, %v3766, %v3768
        %3773 = vrot.lane.b32.xlu0 %v3753, 112
        %v3774 = vpop.permute.xlu0 %3773
        %3775 = vrot.lane.b32.xlu0 %v3755, 112
        %v3776 = vpop.permute.xlu0 %3775
        %3777 = vrot.lane.b32.xlu0 %v3754, 112
        %v3778 = vpop.permute.xlu0 %3777
        %3779 = vrot.lane.b32.xlu0 %v3756, 112
        %v3780 = vpop.permute.xlu0 %3779
        %v3781 = vsel %vm3120, %v3774, %v3776
        %v3782 = vsel %vm3120, %v3778, %v3780
        %v3785 = vld [vmem:[%s21] sm:$0xff]
        %v3786 = vld [vmem:[%s21 + $0x8] sm:$0xff]
        %v3787 = vld [vmem:[%s21 + $0x10] sm:$0xff]
        %v3788 = vld [vmem:[%s21 + $0x18] sm:$0xff]
        %v3789 = vld [vmem:[%s21 + $0x20] sm:$0xff]
        %v3790 = vld [vmem:[%s21 + $0x28] sm:$0xff]
        %v3791 = vld [vmem:[%s21 + $0x30] sm:$0xff]
        %v3792 = vld [vmem:[%s21 + $0x38] sm:$0xff]
        %v3793 = vld [vmem:[%s21 + $0x40] sm:$0xff]
        %v3794 = vld [vmem:[%s21 + $0x48] sm:$0xff]
        %v3795 = vld [vmem:[%s21 + $0x50] sm:$0xff]
        %v3796 = vld [vmem:[%s21 + $0x58] sm:$0xff]
        %v3797 = vld [vmem:[%s21 + $0x60] sm:$0xff]
        %v3798 = vld [vmem:[%s21 + $0x68] sm:$0xff]
        %v3799 = vld [vmem:[%s21 + $0x70] sm:$0xff]
        %v3800 = vld [vmem:[%s21 + $0x78] sm:$0xff]
        %v3801 = vld [vmem:[%s21 + $0x80] sm:$0xff]
        %v3802 = vld [vmem:[%s21 + $0x88] sm:$0xff]
        %v3803 = vld [vmem:[%s21 + $0x90] sm:$0xff]
        %v3804 = vld [vmem:[%s21 + $0x98] sm:$0xff]
        %v3805 = vld [vmem:[%s21 + $0xa0] sm:$0xff]
        %v3806 = vld [vmem:[%s21 + $0xa8] sm:$0xff]
        %v3807 = vld [vmem:[%s21 + $0xb0] sm:$0xff]
        %v3808 = vld [vmem:[%s21 + $0xb8] sm:$0xff]
        %v3809 = vld [vmem:[%s21 + $0xc0] sm:$0xff]
        %v3810 = vld [vmem:[%s21 + $0xc8] sm:$0xff]
        %v3811 = vld [vmem:[%s21 + $0xd0] sm:$0xff]
        %v3812 = vld [vmem:[%s21 + $0xd8] sm:$0xff]
        %v3813 = vld [vmem:[%s21 + $0xe0] sm:$0xff]
        %v3814 = vld [vmem:[%s21 + $0xe8] sm:$0xff]
        %v3815 = vld [vmem:[%s21 + $0xf0] sm:$0xff]
        %v3816 = vld [vmem:[%s21 + $0xf8] sm:$0xff]
        %v3817 = vld [vmem:[%s21 + $0x100] sm:$0xff]
        %v3818 = vld [vmem:[%s21 + $0x108] sm:$0xff]
        %v3819 = vld [vmem:[%s21 + $0x110] sm:$0xff]
        %v3820 = vld [vmem:[%s21 + $0x118] sm:$0xff]
        %v3821 = vld [vmem:[%s21 + $0x120] sm:$0xff]
        %v3822 = vld [vmem:[%s21 + $0x128] sm:$0xff]
        %v3823 = vld [vmem:[%s21 + $0x130] sm:$0xff]
        %v3824 = vld [vmem:[%s21 + $0x138] sm:$0xff]
        %v3825 = vld [vmem:[%s21 + $0x140] sm:$0xff]
        %v3826 = vld [vmem:[%s21 + $0x148] sm:$0xff]
        %v3827 = vld [vmem:[%s21 + $0x150] sm:$0xff]
        %v3828 = vld [vmem:[%s21 + $0x158] sm:$0xff]
        %v3829 = vld [vmem:[%s21 + $0x160] sm:$0xff]
        %v3830 = vld [vmem:[%s21 + $0x168] sm:$0xff]
        %v3831 = vld [vmem:[%s21 + $0x170] sm:$0xff]
        %v3832 = vld [vmem:[%s21 + $0x178] sm:$0xff]
        %v3833 = vld [vmem:[%s22] sm:$0x1]
        %v3835 = vlaneseq
        %v3836 = vshrl.u32 %v3835, 7
        %v3837 = vsub.s32 0, %v3836
        %v3838 = vrot.slane %v3833, %v3837
        %3840 = vmatprep.subr.mxu0 0.0
        %3841 = vmatpush1.msra.mxu0 %v3785
        %3842 = vmatprep.subr.mxu0 0.0
        %3843 = vmatpush1.msra.mxu0 %v3786
        %3844 = vmatprep.subr.mxu0 0.0
        %3845 = vmatpush1.msra.mxu0 %v3787
        %3846 = vmatprep.subr.mxu0 0.0
        %3847 = vmatpush1.msra.mxu0 %v3788
        %3848 = vmatprep.subr.mxu0 0.0
        %3849 = vmatpush1.msra.mxu0 %v3789
        %3850 = vmatprep.subr.mxu0 0.0
        %3851 = vmatpush1.msra.mxu0 %v3790
        %3852 = vmatprep.subr.mxu0 0.0
        %3853 = vmatpush1.msra.mxu0 %v3791
        %3854 = vmatprep.subr.mxu0 0.0
        %3855 = vmatpush1.msra.mxu0 %v3792
        %3856 = vmatprep.subr.mxu0 0.0
        %3857 = vmatpush1.msra.mxu0 %v3793
        %3858 = vmatprep.subr.mxu0 0.0
        %3859 = vmatpush1.msra.mxu0 %v3794
        %3860 = vmatprep.subr.mxu0 0.0
        %3861 = vmatpush1.msra.mxu0 %v3795
        %3862 = vmatprep.subr.mxu0 0.0
        %3863 = vmatpush1.msra.mxu0 %v3796
        %3864 = vmatprep.subr.mxu0 0.0
        %3865 = vmatpush1.msra.mxu0 %v3797
        %3866 = vmatprep.subr.mxu0 0.0
        %3867 = vmatpush1.msra.mxu0 %v3798
        %3868 = vmatprep.subr.mxu0 0.0
        %3869 = vmatpush1.msra.mxu0 %v3799
        %3870 = vmatprep.subr.mxu0 0.0
        %3871 = vmatpush1.msra.mxu0 %v3800
        %3872 = vmatprep.subr.mxu0 0.0
        %3873 = vmatpush1.msra.mxu0 %v3801
        %3874 = vmatprep.subr.mxu0 0.0
        %3875 = vmatpush1.msra.mxu0 %v3802
        %3876 = vmatprep.subr.mxu0 0.0
        %3877 = vmatpush1.msra.mxu0 %v3803
        %3878 = vmatprep.subr.mxu0 0.0
        %3879 = vmatpush1.msra.mxu0 %v3804
        %3880 = vmatprep.subr.mxu0 0.0
        %3881 = vmatpush1.msra.mxu0 %v3805
        %3882 = vmatprep.subr.mxu0 0.0
        %3883 = vmatpush1.msra.mxu0 %v3806
        %3884 = vmatprep.subr.mxu0 0.0
        %3885 = vmatpush1.msra.mxu0 %v3807
        %3886 = vmatprep.subr.mxu0 0.0
        %3887 = vmatpush1.msra.mxu0 %v3808
        %3888 = vmatprep.subr.mxu0 0.0
        %3889 = vmatpush1.msra.mxu0 %v3809
        %3890 = vmatprep.subr.mxu0 0.0
        %3891 = vmatpush1.msra.mxu0 %v3810
        %3892 = vmatprep.subr.mxu0 0.0
        %3893 = vmatpush1.msra.mxu0 %v3811
        %3894 = vmatprep.subr.mxu0 0.0
        %3895 = vmatpush1.msra.mxu0 %v3812
        %3896 = vmatprep.subr.mxu0 0.0
        %3897 = vmatpush1.msra.mxu0 %v3813
        %3898 = vmatprep.subr.mxu0 0.0
        %3899 = vmatpush1.msra.mxu0 %v3814
        %3900 = vmatprep.subr.mxu0 0.0
        %3901 = vmatpush1.msra.mxu0 %v3815
        %3902 = vmatprep.subr.mxu0 0.0
        %3903 = vmatpush1.msra.mxu0 %v3816
        %3904 = vmatprep.mubr.f32.mxu0 %v3769
        %3905 = vmatmul.mubr.f32.gmra.mrb[0].mxu0 %v3753
        %v3906 = vpop.f32.mrb[0].mxu0
        %v3907 = vadd.f32 %v3838, %v3906
        %v3908 = vpop.f32.mrb[0].mxu0
        %3909 = vmatprep.mubr.f32.mxu0 %v3770
        %3910 = vmatmul.mubr.f32.gmra.mrb[0].mxu0 %v3754
        %v3911 = vpop.f32.mrb[0].mxu0
        %v3912 = vadd.f32 %v3838, %v3911
        %v3913 = vpop.f32.mrb[0].mxu0
        %3914 = vdwg.mxu0
        %3915 = vmatprep.subr.mxu0 0.0
        %3916 = vmatpush1.msra.mxu0 %v3817
        %3917 = vmatprep.subr.mxu0 0.0
        %3918 = vmatpush1.msra.mxu0 %v3818
        %3919 = vmatprep.subr.mxu0 0.0
        %3920 = vmatpush1.msra.mxu0 %v3819
        %3921 = vmatprep.subr.mxu0 0.0
        %3922 = vmatpush1.msra.mxu0 %v3820
        %3923 = vmatprep.subr.mxu0 0.0
        %3924 = vmatpush1.msra.mxu0 %v3821
        %3925 = vmatprep.subr.mxu0 0.0
        %3926 = vmatpush1.msra.mxu0 %v3822
        %3927 = vmatprep.subr.mxu0 0.0
        %3928 = vmatpush1.msra.mxu0 %v3823
        %3929 = vmatprep.subr.mxu0 0.0
        %3930 = vmatpush1.msra.mxu0 %v3824
        %3931 = vmatprep.subr.mxu0 0.0
        %3932 = vmatpush1.msra.mxu0 %v3825
        %3933 = vmatprep.subr.mxu0 0.0
        %3934 = vmatpush1.msra.mxu0 %v3826
        %3935 = vmatprep.subr.mxu0 0.0
        %3936 = vmatpush1.msra.mxu0 %v3827
        %3937 = vmatprep.subr.mxu0 0.0
        %3938 = vmatpush1.msra.mxu0 %v3828
        %3939 = vmatprep.subr.mxu0 0.0
        %3940 = vmatpush1.msra.mxu0 %v3829
        %3941 = vmatprep.subr.mxu0 0.0
        %3942 = vmatpush1.msra.mxu0 %v3830
        %3943 = vmatprep.subr.mxu0 0.0
        %3944 = vmatpush1.msra.mxu0 %v3831
        %3945 = vmatprep.subr.mxu0 0.0
        %3946 = vmatpush1.msra.mxu0 %v3832
        %3947 = vmatprep.subr.mxu0 0.0
        %3948 = vmatpush1.msra.mxu0 0.0
        %3949 = vmatprep.subr.mxu0 0.0
        %3950 = vmatpush1.msra.mxu0 0.0
        %3951 = vmatprep.subr.mxu0 0.0
        %3952 = vmatpush1.msra.mxu0 0.0
        %3953 = vmatprep.subr.mxu0 0.0
        %3954 = vmatpush1.msra.mxu0 0.0
        %3955 = vmatprep.subr.mxu0 0.0
        %3956 = vmatpush1.msra.mxu0 0.0
        %3957 = vmatprep.subr.mxu0 0.0
        %3958 = vmatpush1.msra.mxu0 0.0
        %3959 = vmatprep.subr.mxu0 0.0
        %3960 = vmatpush1.msra.mxu0 0.0
        %3961 = vmatprep.subr.mxu0 0.0
        %3962 = vmatpush1.msra.mxu0 0.0
        %3963 = vmatprep.subr.mxu0 0.0
        %3964 = vmatpush1.msra.mxu0 0.0
        %3965 = vmatprep.subr.mxu0 0.0
        %3966 = vmatpush1.msra.mxu0 0.0
        %3967 = vmatprep.subr.mxu0 0.0
        %3968 = vmatpush1.msra.mxu0 0.0
        %3969 = vmatprep.subr.mxu0 0.0
        %3970 = vmatpush1.msra.mxu0 0.0
        %3971 = vmatprep.subr.mxu0 0.0
        %3972 = vmatpush1.msra.mxu0 0.0
        %3973 = vmatprep.subr.mxu0 0.0
        %3974 = vmatpush1.msra.mxu0 0.0
        %3975 = vmatprep.subr.mxu0 0.0
        %3976 = vmatpush1.msra.mxu0 0.0
        %3977 = vmatprep.subr.mxu0 0.0
        %3978 = vmatpush1.msra.mxu0 0.0
        %3979 = vmatprep.mubr.f32.mxu0 0.0
        %3980 = vmatmul.mubr.f32.gmra.mrb[0].mxu0 %v3781
        %v3981 = vpop.f32.mrb[0].mxu0
        %v3982 = vadd.f32 %v3907, %v3981
        %v3983 = vpop.f32.mrb[0].mxu0
        %3984 = vmatprep.mubr.f32.mxu0 0.0
        %3985 = vmatmul.mubr.f32.gmra.mrb[0].mxu0 %v3782
        %v3986 = vpop.f32.mrb[0].mxu0
        %v3987 = vadd.f32 %v3912, %v3986
        %v3988 = vpop.f32.mrb[0].mxu0
        %3989 = vdwg.mxu0
        %v3990 = vmax.f32 %v3982, 0.0
        %v3991 = vmax.f32 %v3987, 0.0
        %3992 = vst [vmem:[#allocation2] sm:$0xff] 0.0
        %3993 = vst.msk [vmem:[#allocation2 + $0x8] sm:$0xff] %vm956, 0.0
        %3994 = vst [vmem:[#allocation2 + $0x10] sm:$0xff] 0.0
        %3995 = vst.msk [vmem:[#allocation2 + $0x18] sm:$0xff] %vm956, 0.0
        %3996 = vst [vmem:[#allocation2 + $0x20] sm:$0x3] 0.0
        %3997 = vst.msk [vmem:[#allocation2 + $0x28] sm:$0x3] %vm961, 0.0
        %v4000 = vrot.slane %v3990, 7
        %v4001 = vrot.slane %v3991, 7
        %v4002 = vsel %vm965, %v4000, %v4001
        %4006 = vst [vmem:[#allocation2] sm:$0xfe] %v4000
        %4007 = vst [vmem:[#allocation2 + $0x10] sm:$0xff] %v4002
        %4008 = vst [vmem:[#allocation2 + $0x20] sm:$0x1] %v4001
        %v4009 = vld [vmem:[#allocation2] sm:$0xff]
        %v4010 = vld [vmem:[#allocation2 + $0x10] sm:$0xff]
        %v4011 = vld [vmem:[#allocation2] sm:$0xfe]
        %v4012 = vld [vmem:[#allocation2 + $0x20] sm:$0x1]
        %v4013 = vld [vmem:[#allocation2] sm:$0xfc]
        %v4014 = vld [vmem:[#allocation2 + $0x20] sm:$0x3]
        %v4018 = vrot.slane %v4011, 1
        %v4019 = vrot.slane %v4010, 1
        %v4020 = vsel %vm1006, %v4018, %v4019
        %v4021 = vrot.slane %v4012, 1
        %v4022 = vsel %vm1006, %v4019, %v4021
        %v4027 = vrot.slane %v4013, 2
        %v4028 = vrot.slane %v4010, 2
        %v4029 = vsel %vm1032, %v4027, %v4028
        %v4030 = vrot.slane %v4014, 2
        %v4031 = vsel %vm1032, %v4028, %v4030
        %v4034 = vld [vmem:[#allocation11] sm:$0xff]
        %v4035 = vld [vmem:[#allocation11 + $0x8] sm:$0xff]
        %v4036 = vld [vmem:[#allocation11 + $0x10] sm:$0xff]
        %v4037 = vld [vmem:[#allocation11 + $0x18] sm:$0xff]
        %v4038 = vld [vmem:[#allocation11 + $0x20] sm:$0xff]
        %v4039 = vld [vmem:[#allocation11 + $0x28] sm:$0xff]
        %v4040 = vld [vmem:[#allocation11 + $0x30] sm:$0xff]
        %v4041 = vld [vmem:[#allocation11 + $0x38] sm:$0xff]
        %v4042 = vld [vmem:[#allocation11 + $0x40] sm:$0xff]
        %v4043 = vld [vmem:[#allocation11 + $0x48] sm:$0xff]
        %v4044 = vld [vmem:[#allocation11 + $0x50] sm:$0xff]
        %v4045 = vld [vmem:[#allocation11 + $0x58] sm:$0xff]
        %v4046 = vld [vmem:[#allocation11 + $0x60] sm:$0xff]
        %v4047 = vld [vmem:[#allocation11 + $0x68] sm:$0xff]
        %v4048 = vld [vmem:[#allocation11 + $0x70] sm:$0xff]
        %v4049 = vld [vmem:[#allocation11 + $0x78] sm:$0xff]
        %v4050 = vld [vmem:[#allocation11 + $0x80] sm:$0xff]
        %v4051 = vld [vmem:[#allocation11 + $0x88] sm:$0xff]
        %v4052 = vld [vmem:[#allocation11 + $0x90] sm:$0xff]
        %v4053 = vld [vmem:[#allocation11 + $0x98] sm:$0xff]
        %v4054 = vld [vmem:[#allocation11 + $0xa0] sm:$0xff]
        %v4055 = vld [vmem:[#allocation11 + $0xa8] sm:$0xff]
        %v4056 = vld [vmem:[#allocation11 + $0xb0] sm:$0xff]
        %v4057 = vld [vmem:[#allocation11 + $0xb8] sm:$0xff]
        %v4058 = vld [vmem:[#allocation11 + $0xc0] sm:$0xff]
        %v4059 = vld [vmem:[#allocation11 + $0xc8] sm:$0xff]
        %v4060 = vld [vmem:[#allocation11 + $0xd0] sm:$0xff]
        %v4061 = vld [vmem:[#allocation11 + $0xd8] sm:$0xff]
        %v4062 = vld [vmem:[#allocation11 + $0xe0] sm:$0xff]
        %v4063 = vld [vmem:[#allocation11 + $0xe8] sm:$0xff]
        %v4064 = vld [vmem:[#allocation11 + $0xf0] sm:$0xff]
        %v4065 = vld [vmem:[#allocation11 + $0xf8] sm:$0xff]
        %v4066 = vld [vmem:[#allocation11 + $0x100] sm:$0xff]
        %v4067 = vld [vmem:[#allocation11 + $0x108] sm:$0xff]
        %v4068 = vld [vmem:[#allocation11 + $0x110] sm:$0xff]
        %v4069 = vld [vmem:[#allocation11 + $0x118] sm:$0xff]
        %v4070 = vld [vmem:[#allocation11 + $0x120] sm:$0xff]
        %v4071 = vld [vmem:[#allocation11 + $0x128] sm:$0xff]
        %v4072 = vld [vmem:[#allocation11 + $0x130] sm:$0xff]
        %v4073 = vld [vmem:[#allocation11 + $0x138] sm:$0xff]
        %v4074 = vld [vmem:[#allocation11 + $0x140] sm:$0xff]
        %v4075 = vld [vmem:[#allocation11 + $0x148] sm:$0xff]
        %v4076 = vld [vmem:[#allocation11 + $0x150] sm:$0xff]
        %v4077 = vld [vmem:[#allocation11 + $0x158] sm:$0xff]
        %v4078 = vld [vmem:[#allocation11 + $0x160] sm:$0xff]
        %v4079 = vld [vmem:[#allocation11 + $0x168] sm:$0xff]
        %v4080 = vld [vmem:[#allocation11 + $0x170] sm:$0xff]
        %v4081 = vld [vmem:[#allocation11 + $0x178] sm:$0xff]
        %v4082 = vld [vmem:[%s24] sm:$0x1]
        %v4084 = vlaneseq
        %v4085 = vshrl.u32 %v4084, 7
        %v4086 = vsub.s32 0, %v4085
        %v4087 = vrot.slane %v4082, %v4086
        %4089 = vmatprep.subr.mxu0 0.0
        %4090 = vmatpush1.msra.mxu0 %v4034
        %4091 = vmatprep.subr.mxu0 0.0
        %4092 = vmatpush1.msra.mxu0 %v4035
        %4093 = vmatprep.subr.mxu0 0.0
        %4094 = vmatpush1.msra.mxu0 %v4036
        %4095 = vmatprep.subr.mxu0 0.0
        %4096 = vmatpush1.msra.mxu0 %v4037
        %4097 = vmatprep.subr.mxu0 0.0
        %4098 = vmatpush1.msra.mxu0 %v4038
        %4099 = vmatprep.subr.mxu0 0.0
        %4100 = vmatpush1.msra.mxu0 %v4039
        %4101 = vmatprep.subr.mxu0 0.0
        %4102 = vmatpush1.msra.mxu0 %v4040
        %4103 = vmatprep.subr.mxu0 0.0
        %4104 = vmatpush1.msra.mxu0 %v4041
        %4105 = vmatprep.subr.mxu0 0.0
        %4106 = vmatpush1.msra.mxu0 %v4042
        %4107 = vmatprep.subr.mxu0 0.0
        %4108 = vmatpush1.msra.mxu0 %v4043
        %4109 = vmatprep.subr.mxu0 0.0
        %4110 = vmatpush1.msra.mxu0 %v4044
        %4111 = vmatprep.subr.mxu0 0.0
        %4112 = vmatpush1.msra.mxu0 %v4045
        %4113 = vmatprep.subr.mxu0 0.0
        %4114 = vmatpush1.msra.mxu0 %v4046
        %4115 = vmatprep.subr.mxu0 0.0
        %4116 = vmatpush1.msra.mxu0 %v4047
        %4117 = vmatprep.subr.mxu0 0.0
        %4118 = vmatpush1.msra.mxu0 %v4048
        %4119 = vmatprep.subr.mxu0 0.0
        %4120 = vmatpush1.msra.mxu0 %v4049
        %4121 = vmatprep.subr.mxu0 0.0
        %4122 = vmatpush1.msra.mxu0 %v4050
        %4123 = vmatprep.subr.mxu0 0.0
        %4124 = vmatpush1.msra.mxu0 %v4051
        %4125 = vmatprep.subr.mxu0 0.0
        %4126 = vmatpush1.msra.mxu0 %v4052
        %4127 = vmatprep.subr.mxu0 0.0
        %4128 = vmatpush1.msra.mxu0 %v4053
        %4129 = vmatprep.subr.mxu0 0.0
        %4130 = vmatpush1.msra.mxu0 %v4054
        %4131 = vmatprep.subr.mxu0 0.0
        %4132 = vmatpush1.msra.mxu0 %v4055
        %4133 = vmatprep.subr.mxu0 0.0
        %4134 = vmatpush1.msra.mxu0 %v4056
        %4135 = vmatprep.subr.mxu0 0.0
        %4136 = vmatpush1.msra.mxu0 %v4057
        %4137 = vmatprep.subr.mxu0 0.0
        %4138 = vmatpush1.msra.mxu0 %v4058
        %4139 = vmatprep.subr.mxu0 0.0
        %4140 = vmatpush1.msra.mxu0 %v4059
        %4141 = vmatprep.subr.mxu0 0.0
        %4142 = vmatpush1.msra.mxu0 %v4060
        %4143 = vmatprep.subr.mxu0 0.0
        %4144 = vmatpush1.msra.mxu0 %v4061
        %4145 = vmatprep.subr.mxu0 0.0
        %4146 = vmatpush1.msra.mxu0 %v4062
        %4147 = vmatprep.subr.mxu0 0.0
        %4148 = vmatpush1.msra.mxu0 %v4063
        %4149 = vmatprep.subr.mxu0 0.0
        %4150 = vmatpush1.msra.mxu0 %v4064
        %4151 = vmatprep.subr.mxu0 0.0
        %4152 = vmatpush1.msra.mxu0 %v4065
        %4153 = vmatprep.mubr.f32.mxu0 %v4020
        %4154 = vmatmul.mubr.f32.gmra.mrb[0].mxu0 %v4009
        %v4155 = vpop.f32.mrb[0].mxu0
        %v4156 = vadd.f32 %v4087, %v4155
        %v4157 = vpop.f32.mrb[0].mxu0
        %4158 = vmatprep.mubr.f32.mxu0 %v4022
        %4159 = vmatmul.mubr.f32.gmra.mrb[0].mxu0 %v4010
        %v4160 = vpop.f32.mrb[0].mxu0
        %v4161 = vadd.f32 %v4087, %v4160
        %v4162 = vpop.f32.mrb[0].mxu0
        %4163 = vdwg.mxu0
        %4164 = vmatprep.subr.mxu0 0.0
        %4165 = vmatpush1.msra.mxu0 %v4066
        %4166 = vmatprep.subr.mxu0 0.0
        %4167 = vmatpush1.msra.mxu0 %v4067
        %4168 = vmatprep.subr.mxu0 0.0
        %4169 = vmatpush1.msra.mxu0 %v4068
        %4170 = vmatprep.subr.mxu0 0.0
        %4171 = vmatpush1.msra.mxu0 %v4069
        %4172 = vmatprep.subr.mxu0 0.0
        %4173 = vmatpush1.msra.mxu0 %v4070
        %4174 = vmatprep.subr.mxu0 0.0
        %4175 = vmatpush1.msra.mxu0 %v4071
        %4176 = vmatprep.subr.mxu0 0.0
        %4177 = vmatpush1.msra.mxu0 %v4072
        %4178 = vmatprep.subr.mxu0 0.0
        %4179 = vmatpush1.msra.mxu0 %v4073
        %4180 = vmatprep.subr.mxu0 0.0
        %4181 = vmatpush1.msra.mxu0 %v4074
        %4182 = vmatprep.subr.mxu0 0.0
        %4183 = vmatpush1.msra.mxu0 %v4075
        %4184 = vmatprep.subr.mxu0 0.0
        %4185 = vmatpush1.msra.mxu0 %v4076
        %4186 = vmatprep.subr.mxu0 0.0
        %4187 = vmatpush1.msra.mxu0 %v4077
        %4188 = vmatprep.subr.mxu0 0.0
        %4189 = vmatpush1.msra.mxu0 %v4078
        %4190 = vmatprep.subr.mxu0 0.0
        %4191 = vmatpush1.msra.mxu0 %v4079
        %4192 = vmatprep.subr.mxu0 0.0
        %4193 = vmatpush1.msra.mxu0 %v4080
        %4194 = vmatprep.subr.mxu0 0.0
        %4195 = vmatpush1.msra.mxu0 %v4081
        %4196 = vmatprep.subr.mxu0 0.0
        %4197 = vmatpush1.msra.mxu0 0.0
        %4198 = vmatprep.subr.mxu0 0.0
        %4199 = vmatpush1.msra.mxu0 0.0
        %4200 = vmatprep.subr.mxu0 0.0
        %4201 = vmatpush1.msra.mxu0 0.0
        %4202 = vmatprep.subr.mxu0 0.0
        %4203 = vmatpush1.msra.mxu0 0.0
        %4204 = vmatprep.subr.mxu0 0.0
        %4205 = vmatpush1.msra.mxu0 0.0
        %4206 = vmatprep.subr.mxu0 0.0
        %4207 = vmatpush1.msra.mxu0 0.0
        %4208 = vmatprep.subr.mxu0 0.0
        %4209 = vmatpush1.msra.mxu0 0.0
        %4210 = vmatprep.subr.mxu0 0.0
        %4211 = vmatpush1.msra.mxu0 0.0
        %4212 = vmatprep.subr.mxu0 0.0
        %4213 = vmatpush1.msra.mxu0 0.0
        %4214 = vmatprep.subr.mxu0 0.0
        %4215 = vmatpush1.msra.mxu0 0.0
        %4216 = vmatprep.subr.mxu0 0.0
        %4217 = vmatpush1.msra.mxu0 0.0
        %4218 = vmatprep.subr.mxu0 0.0
        %4219 = vmatpush1.msra.mxu0 0.0
        %4220 = vmatprep.subr.mxu0 0.0
        %4221 = vmatpush1.msra.mxu0 0.0
        %4222 = vmatprep.subr.mxu0 0.0
        %4223 = vmatpush1.msra.mxu0 0.0
        %4224 = vmatprep.subr.mxu0 0.0
        %4225 = vmatpush1.msra.mxu0 0.0
        %4226 = vmatprep.subr.mxu0 0.0
        %4227 = vmatpush1.msra.mxu0 0.0
        %4228 = vmatprep.mubr.f32.mxu0 0.0
        %4229 = vmatmul.mubr.f32.gmra.mrb[0].mxu0 %v4029
        %v4230 = vpop.f32.mrb[0].mxu0
        %v4231 = vadd.f32 %v4156, %v4230
        %v4232 = vpop.f32.mrb[0].mxu0
        %4233 = vmatprep.mubr.f32.mxu0 0.0
        %4234 = vmatmul.mubr.f32.gmra.mrb[0].mxu0 %v4031
        %v4235 = vpop.f32.mrb[0].mxu0
        %v4236 = vadd.f32 %v4161, %v4235
        %v4237 = vpop.f32.mrb[0].mxu0
        %4238 = vdwg.mxu0
        %v4239 = vmax.f32 %v4231, 0.0
        %v4240 = vmax.f32 %v4236, 0.0
        %4241 = vst [vmem:[%s852] sm:$0xff] %v4239
        %4242 = vst [vmem:[%s852 + $0x8] sm:$0xff] %v4240
        %p4243 = scmp.lt.s32.totalorder %s40, 1
        %s4244 = scalar_select %p4243, %s40, 1
        %s4245 = smul.addr %s4244, 2
        %s4246 = smul.addr %s4245, 8
        %s4247 = scalar_lea.vmem %s25, %s4246
        // Predicated region
        $region145: #{forward.1} parent=119 // pred_check
          %p4248 = pneg %p588
        $region146: #{forward.1} parent=119 // pred_check_branch
          %4250 = sbr.rel (%p4248) target = $region148
        $region147: #{forward.1} parent=119 // pred_region
          _
        $region148: #{forward.1} parent=119 // pred_fallthru
          _
      $region120: #{forward.1} parent=5 // pred_fallthru
        _
      %p4251 = scmp.le.s32.totalorder 2, %s35
      // Predicated region
      $region149: #{forward.1} parent=5 // pred_check
        %p4252 = pneg %p4251
      $region150: #{forward.1} parent=5 // pred_check_branch
        %4254 = sbr.rel (%p4252) target = $region152
      $region151: #{forward.1} parent=5 // pred_region
        %s4255 = ssub.s32 %s35, 2
        // Predicated region
        $region153: #{forward.1} parent=151 // pred_check
          %p4256 = pneg %p594
        $region154: #{forward.1} parent=151 // pred_check_branch
          %4258 = sbr.rel (%p4256) target = $region156
        $region155: #{forward.1} parent=151 // pred_region
          %p4259 = scmp.lt.s32.totalorder %s41, 1
          %s4260 = scalar_select %p4259, %s41, 1
          %s4261 = smul.addr %s4260, 2
          %s4262 = smul.addr %s4261, 8
          %s4263 = scalar_lea.vmem %s25, %s4262
        $region156: #{forward.1} parent=151 // pred_fallthru
          _
      $region152: #{forward.1} parent=5 // pred_fallthru
        _
    $region6: #{forward.1} parent=1 // loop_footer
      %s39 = sadd.s32 1, %s35
    $region7: #{forward.1} parent=1 // loop_footer_branch
      %34 = sbr.rel target = $region3
    $region8: #{forward.1} parent=1 // loop_exit
      _
    %4264 = vsyncpa [#allocation4], 1
    %s4265 = scalar_lea.sflag [#allocation4], 1
    %4266 = vsyncpa %s4265, 1
    %4267 = vsyncpa [#allocation6], 1
    %4268 = vsyncpa [#allocation9], 1
    %4269 = vsyncpa [#allocation12], 1

</llo_original>
